<compile_context>
chip_gen: v7x
topology: tpu7x:2x2x1
jax: 0.10.0
libtpu: 0.0.40
codegen_flags: <defaults>
</compile_context>

<pallas_src>
import functools

import jax
import jax.numpy as jnp
from jax import lax
from jax.experimental import pallas as pl
from jax.experimental.pallas import tpu as pltpu


def msrb_kernel(main_ref, halo_ref, wbig_ref, w1ab_ref, b35_ref, b1_ref,
                out_ref, patch_ref, *, cin, c2p, th, w):
    """One (batch, row-band) grid step.

    main_ref : (Cin, TH, Wp) bf16   padded rows [i*TH, i*TH+TH) of this image
    halo_ref : (Cin, 8,  Wp) bf16   padded rows [i*TH+TH, i*TH+TH+8) (only first 4 used)
    wbig_ref : (c2p+Cout, K) bf16   fused [conv3 ; conv5 ; pad ; 1x1-on-x] weight, K = 25*Cin
    w1ab_ref : (Cout, c2p)   f32    1x1 weight acting on concat([o3, o5])
    b35_ref  : (c2p, 1) f32,  b1_ref : (Cout, 1) f32
    out_ref  : (Cout, T) f32, T = TH*W (multiple of 128 -> unmasked lane-dense stores)
    patch_ref: (K, T) f32 VMEM scratch (f32 so the small tap stores never hit packed-bf16
               sub-tile read-modify-writes; cast to bf16 once as the MXU operand).
    """
    # ---- in-kernel im2col: patch[(kh*5+kw)*Cin+ci, orow*W+c] = x_pad[ci, top+orow+kh, c+kw] ----
    for r in range(th + 4):                        # the TH+4 source rows of the haloed window
        src = main_ref[:, r, :] if r < th else halo_ref[:, r - th, :]
        row = src.astype(jnp.float32)              # (Cin, Wp)
        for kh in range(5):
            orow = r - kh                          # output row (within the band) fed by this row
            if 0 <= orow < th:
                for kw in range(5):
                    t0 = (kh * 5 + kw) * cin
                    patch_ref[t0:t0 + cin, orow * w:(orow + 1) * w] = row[:, kw:kw + w]

    # ---- one fused MXU pass: conv3 | conv5 | (1x1 on raw x); bf16 in, f32 accumulate ----
    pre = jnp.dot(wbig_ref[...], patch_ref[...].astype(jnp.bfloat16),
                  preferred_element_type=jnp.float32)            # (c2p + Cout, T)
    branch = jnp.maximum(pre[:c2p, :] + b35_ref[...], 0.0)       # relu(conv3+b3 ; conv5+b5)
    xterm = pre[c2p:, :]                                         # w1c @ x   (x is NOT ReLU'd)
    fused = jnp.dot(w1ab_ref[...], branch,                       # tiny K=c2p GEMM, kept f32
                    preferred_element_type=jnp.float32) + xterm + b1_ref[...]
    out_ref[...] = jnp.maximum(fused, 0.0)


def _round_up(a, m):
    return (a + m - 1) // m * m


def _pick_band(h, w_img, n_batch):
    # TH must divide H, be a multiple of 8, and make TH*W a multiple of 128 (lane-dense out).
    cands = [th for th in range(8, h + 1, 8)
             if h % th == 0 and (th * w_img) % 128 == 0]
    assert cands, ("need H a multiple of 8 and some TH with TH*W % 128 == 0; "
                   "pad H/W in the wrapper otherwise")
    # prefer the largest band that still yields >= 4 grid steps (2 per v7x TensorCore)
    # while capping the lane tile (keeps patch scratch + live intermediates small).
    good = [th for th in cands if n_batch * (h // th) >= 4 and th * w_img <= 2048]
    if good:
        return max(good)
    capped = [th for th in cands if th * w_img <= 2048]
    return min(capped) if capped else min(cands)


def msrb_block(x, w3, b3, w5, b5, w1, b1):
    """MSRB_Block forward.  x: (N, Cin, H, W) NCHW; returns (N, Cout, H, W) f32."""
    N, Cin, H, W = x.shape
    Co2 = w3.shape[0]
    Cout = w1.shape[0]
    c2 = 2 * Co2
    assert w1.shape[1] == c2 + Cin, "confusion conv expects 3*in_channels"
    assert Cout == 2 * Cin and Co2 == Cout // 2, "MSRB_Block requires out_channels == 2*in_channels"

    K = 25 * Cin
    c2p = _round_up(c2, 8)               # sublane-aligned split of the fused pre-activation
    Cbig = c2p + Cout
    Wp = W + 4
    TH = _pick_band(H, W, N)
    nb = H // TH
    T = TH * W

    # ---- wrapper: only a cheap pad + bf16 cast on x (no im2col here) ----
    # top/left pad 2 (conv halo); bottom pad 6 so the 8-row halo block of the last band exists.
    x_pad = jnp.pad(x, ((0, 0), (0, 0), (2, 6), (2, 2))).astype(jnp.bfloat16)

    # ---- fused first-stage weight: [3x3 zero-embedded in 5x5 ; 5x5 ; zero pad ; 1x1-on-x at center]
    w3e = jnp.zeros((Co2, Cin, 5, 5), jnp.float32).at[:, :, 1:4, 1:4].set(w3.astype(jnp.float32))
    block3 = w3e.transpose(0, 2, 3, 1).reshape(Co2, K)           # rows match patch (kh, kw, ci) order
    block5 = w5.astype(jnp.float32).transpose(0, 2, 3, 1).reshape(Co2, K)
    pad_rows = jnp.zeros((c2p - c2, K), jnp.float32)
    w1c = w1[:, c2:].astype(jnp.float32)                         # 1x1 weight acting on raw x
    blockx = jnp.zeros((Cout, 5, 5, Cin), jnp.float32).at[:, 2, 2, :].set(w1c).reshape(Cout, K)
    w_big = jnp.concatenate([block3, block5, pad_rows, blockx], axis=0).astype(jnp.bfloat16)

    w1ab = jnp.concatenate(
        [w1[:, :c2].astype(jnp.float32), jnp.zeros((Cout, c2p - c2), jnp.float32)], axis=1)
    b35 = jnp.concatenate(
        [b3.astype(jnp.float32), b5.astype(jnp.float32), jnp.zeros((c2p - c2,), jnp.float32)]
    ).reshape(c2p, 1)
    b1c = b1.astype(jnp.float32).reshape(Cout, 1)

    # ---- explicit VMEM budget (don't rely on the 32 MiB default; stay well under v7x's 64 MiB)
    band_bytes = Cin * (TH + 8) * Wp * 2
    patch_bytes = K * T * 4
    out_bytes = Cout * T * 4
    wt_bytes = Cbig * K * 2 + Cout * c2p * 4 + (c2p + Cout) * 4
    inter_bytes = (Cbig + c2p + 2 * Cout) * T * 4
    need = 2 * (band_bytes + out_bytes) + patch_bytes + wt_bytes + inter_bytes
    vmem_limit = int(min(max(2 * need, 32 * 1024 * 1024), 48 * 1024 * 1024))

    kernel = functools.partial(msrb_kernel, cin=Cin, c2p=c2p, th=TH, w=W)
    th_blk = TH // 8

    out = pl.pallas_call(
        kernel,
        out_shape=jax.ShapeDtypeStruct((N, Cout, H * W), jnp.float32),
        grid=(N, nb),
        in_specs=[
            pl.BlockSpec((None, Cin, TH, Wp), lambda n, i: (n, 0, i, 0)),                # row band
            pl.BlockSpec((None, Cin, 8, Wp), lambda n, i: (n, 0, (i + 1) * th_blk, 0)),  # 8-row halo
            pl.BlockSpec((Cbig, K), lambda n, i: (0, 0)),                                # fused weight
            pl.BlockSpec((Cout, c2p), lambda n, i: (0, 0)),                              # 1x1 on [o3;o5]
            pl.BlockSpec((c2p, 1), lambda n, i: (0, 0)),                                 # b3|b5
            pl.BlockSpec((Cout, 1), lambda n, i: (0, 0)),                                # b1
        ],
        out_specs=pl.BlockSpec((None, Cout, T), lambda n, i: (n, 0, i)),
        scratch_shapes=[pltpu.VMEM((K, T), jnp.float32)],
        compiler_params=pltpu.CompilerParams(
            dimension_semantics=("parallel", "parallel"),
            vmem_limit_bytes=vmem_limit),
    )(x_pad, x_pad, w_big, w1ab, b35, b1c)

    # free metadata reshape -> NCHW, matching PyTorch (no transpose pass)
    return out.reshape(N, Cout, H, W)


def msrb_reference(x, w3, b3, w5, b5, w1, b1):
    dn = ("NCHW", "OIHW", "NCHW")
    hp = lax.Precision.HIGHEST
    o3 = jax.nn.relu(lax.conv_general_dilated(x, w3, (1, 1), "SAME", dimension_numbers=dn,
                                              precision=hp) + b3[None, :, None, None])
    o5 = jax.nn.relu(lax.conv_general_dilated(x, w5, (1, 1), "SAME", dimension_numbers=dn,
                                              precision=hp) + b5[None, :, None, None])
    cat = jnp.concatenate([o3, o5, x], axis=1)
    o = lax.conv_general_dilated(cat, w1[:, :, None, None], (1, 1), "SAME",
                                 dimension_numbers=dn, precision=hp)
    return jax.nn.relu(o + b1[None, :, None, None])


if __name__ == "__main__":
    # MSRB_Block(in_channels=4, out_channels=8): confusion conv requires out == 2*in.
    N, Cin, H, W = 2, 4, 16, 16
    Cout = 2 * Cin
    Co2 = Cout // 2

    key = jax.random.PRNGKey(0)
    ks = jax.random.split(key, 7)
    x = jax.random.normal(ks[0], (N, Cin, H, W), jnp.float32)            # NCHW like PyTorch

    # deterministic synthetic parameters (PyTorch OIHW conv weights)
    w3 = 0.1 * jax.random.normal(ks[1], (Co2, Cin, 3, 3), jnp.float32)
    b3 = 0.1 * jax.random.normal(ks[2], (Co2,), jnp.float32)
    w5 = 0.1 * jax.random.normal(ks[3], (Co2, Cin, 5, 5), jnp.float32)
    b5 = 0.1 * jax.random.normal(ks[4], (Co2,), jnp.float32)
    w1 = 0.1 * jax.random.normal(ks[5], (Cout, 3 * Cin), jnp.float32)    # 1x1 conv (out, in)
    b1 = 0.1 * jax.random.normal(ks[6], (Cout,), jnp.float32)

    out = jax.block_until_ready(jax.jit(msrb_block)(x, w3, b3, w5, b5, w1, b1))
    assert out.shape == (N, Cout, H, W)

    def _bf(a):
        return a.astype(jnp.bfloat16).astype(jnp.float32)

    c2 = 2 * Co2
    # strict check: reference evaluated at the kernel's operand precision (bf16 x/w3/w5/w1c,
    # f32 w1ab and biases, f32 accumulation) -> only summation-order differences remain.
    w1_m = w1.at[:, c2:].set(_bf(w1[:, c2:]))
    ref_m = msrb_reference(_bf(x), _bf(w3), b3, _bf(w5), b5, w1_m, b1)
    assert jnp.allclose(out, ref_m, atol=1e-4, rtol=1e-4), "mismatch vs matched-precision reference"

    # loose sanity check vs the pure-f32 reference (kernel uses bf16 MXU operands)
    ref = msrb_reference(x, w3, b3, w5, b5, w1, b1)
    assert jnp.allclose(out, ref, atol=1e-1, rtol=1e-1), "mismatch vs f32 reference"

    print("KERNEL_OK")
</pallas_src>

<mosaic_0001>
module attributes {stable_mosaic.version = 11 : i64} {
  func.func @msrb_kernel(%arg0: i32, %arg1: i32, %arg2: memref<1x4x8x20xbf16, #tpu.memory_space<vmem>>, %arg3: memref<1x4x8x20xbf16, #tpu.memory_space<vmem>>, %arg4: memref<16x100xbf16, #tpu.memory_space<vmem>>, %arg5: memref<8x8xf32, #tpu.memory_space<vmem>>, %arg6: memref<8x1xf32, #tpu.memory_space<vmem>>, %arg7: memref<8x1xf32, #tpu.memory_space<vmem>>, %arg8: memref<1x8x128xf32, #tpu.memory_space<vmem>>, %arg9: memref<100x128xf32, #tpu.memory_space<vmem>>) attributes {dimension_semantics = [#tpu.dimension_semantics<parallel>, #tpu.dimension_semantics<parallel>], iteration_bounds = array<i64: 2, 2>, scalar_prefetch = 0 : i64, scratch_operands = 1 : i64, tpu.core_type = #tpu.core_type<tc>, window_params = [{transform_indices = @transform_0, window_bounds = array<i64: 1, 4, 8, 20>}, {transform_indices = @transform_1, window_bounds = array<i64: 1, 4, 8, 20>}, {pipeline_mode = #tpu.pipeline_mode<synchronous>, transform_indices = @transform_2, window_bounds = array<i64: 16, 100>}, {pipeline_mode = #tpu.pipeline_mode<synchronous>, transform_indices = @transform_3, window_bounds = array<i64: 8, 8>}, {pipeline_mode = #tpu.pipeline_mode<synchronous>, transform_indices = @transform_4, window_bounds = array<i64: 8, 1>}, {pipeline_mode = #tpu.pipeline_mode<synchronous>, transform_indices = @transform_5, window_bounds = array<i64: 8, 1>}, {transform_indices = @transform_6, window_bounds = array<i64: 1, 8, 128>}]} {
    %c0 = arith.constant 0 : index
    %c0_0 = arith.constant 0 : index
    %c0_1 = arith.constant 0 : index
    %c0_2 = arith.constant 0 : index
    %0 = vector.load %arg2[%c0, %c0_0, %c0_1, %c0_2] : memref<1x4x8x20xbf16, #tpu.memory_space<vmem>>, vector<1x4x1x20xbf16>
    %1 = vector.shape_cast %0 : vector<1x4x1x20xbf16> to vector<4x20xbf16>
    %2 = arith.extf %1 : vector<4x20xbf16> to vector<4x20xf32>
    %3 = vector.extract_strided_slice %2 {offsets = [0, 0], sizes = [4, 16], strides = [1, 1]} : vector<4x20xf32> to vector<4x16xf32>
    %c0_3 = arith.constant 0 : index
    %c0_4 = arith.constant 0 : index
    %4 = vector.load %arg9[%c0_3, %c0_4] : memref<100x128xf32, #tpu.memory_space<vmem>>, vector<4x16xf32>
    tpu.vector_store %arg9[%c0_3, %c0_4], %3 {strides = array<i32>} : memref<100x128xf32, #tpu.memory_space<vmem>>, vector<4x16xf32>,
    %5 = vector.extract_strided_slice %2 {offsets = [0, 1], sizes = [4, 16], strides = [1, 1]} : vector<4x20xf32> to vector<4x16xf32>
    %c4 = arith.constant 4 : index
    %c0_5 = arith.constant 0 : index
    %6 = vector.load %arg9[%c4, %c0_5] : memref<100x128xf32, #tpu.memory_space<vmem>>, vector<4x16xf32>
    tpu.vector_store %arg9[%c4, %c0_5], %5 {strides = array<i32>} : memref<100x128xf32, #tpu.memory_space<vmem>>, vector<4x16xf32>,
    %7 = vector.extract_strided_slice %2 {offsets = [0, 2], sizes = [4, 16], strides = [1, 1]} : vector<4x20xf32> to vector<4x16xf32>
    %c8 = arith.constant 8 : index
    %c0_6 = arith.constant 0 : index
    %8 = vector.load %arg9[%c8, %c0_6] : memref<100x128xf32, #tpu.memory_space<vmem>>, vector<4x16xf32>
    tpu.vector_store %arg9[%c8, %c0_6], %7 {strides = array<i32>} : memref<100x128xf32, #tpu.memory_space<vmem>>, vector<4x16xf32>,
    %9 = vector.extract_strided_slice %2 {offsets = [0, 3], sizes = [4, 16], strides = [1, 1]} : vector<4x20xf32> to vector<4x16xf32>
    %c12 = arith.constant 12 : index
    %c0_7 = arith.constant 0 : index
    %10 = vector.load %arg9[%c12, %c0_7] : memref<100x128xf32, #tpu.memory_space<vmem>>, vector<4x16xf32>
    tpu.vector_store %arg9[%c12, %c0_7], %9 {strides = array<i32>} : memref<100x128xf32, #tpu.memory_space<vmem>>, vector<4x16xf32>,
    %11 = vector.extract_strided_slice %2 {offsets = [0, 4], sizes = [4, 16], strides = [1, 1]} : vector<4x20xf32> to vector<4x16xf32>
    %c16 = arith.constant 16 : index
    %c0_8 = arith.constant 0 : index
    %12 = vector.load %arg9[%c16, %c0_8] : memref<100x128xf32, #tpu.memory_space<vmem>>, vector<4x16xf32>
    tpu.vector_store %arg9[%c16, %c0_8], %11 {strides = array<i32>} : memref<100x128xf32, #tpu.memory_space<vmem>>, vector<4x16xf32>,
    %c0_9 = arith.constant 0 : index
    %c0_10 = arith.constant 0 : index
    %c1 = arith.constant 1 : index
    %c0_11 = arith.constant 0 : index
    %13 = vector.load %arg2[%c0_9, %c0_10, %c1, %c0_11] : memref<1x4x8x20xbf16, #tpu.memory_space<vmem>>, vector<1x4x1x20xbf16>
    %14 = vector.shape_cast %13 : vector<1x4x1x20xbf16> to vector<4x20xbf16>
    %15 = arith.extf %14 : vector<4x20xbf16> to vector<4x20xf32>
    %16 = vector.extract_strided_slice %15 {offsets = [0, 0], sizes = [4, 16], strides = [1, 1]} : vector<4x20xf32> to vector<4x16xf32>
    %c0_12 = arith.constant 0 : index
    %c16_13 = arith.constant 16 : index
    %17 = vector.load %arg9[%c0_12, %c16_13] : memref<100x128xf32, #tpu.memory_space<vmem>>, vector<4x16xf32>
    tpu.vector_store %arg9[%c0_12, %c16_13], %16 {strides = array<i32>} : memref<100x128xf32, #tpu.memory_space<vmem>>, vector<4x16xf32>,
    %18 = vector.extract_strided_slice %15 {offsets = [0, 1], sizes = [4, 16], strides = [1, 1]} : vector<4x20xf32> to vector<4x16xf32>
    %c4_14 = arith.constant 4 : index
    %c16_15 = arith.constant 16 : index
    %19 = vector.load %arg9[%c4_14, %c16_15] : memref<100x128xf32, #tpu.memory_space<vmem>>, vector<4x16xf32>
    tpu.vector_store %arg9[%c4_14, %c16_15], %18 {strides = array<i32>} : memref<100x128xf32, #tpu.memory_space<vmem>>, vector<4x16xf32>,
    %20 = vector.extract_strided_slice %15 {offsets = [0, 2], sizes = [4, 16], strides = [1, 1]} : vector<4x20xf32> to vector<4x16xf32>
    %c8_16 = arith.constant 8 : index
    %c16_17 = arith.constant 16 : index
    %21 = vector.load %arg9[%c8_16, %c16_17] : memref<100x128xf32, #tpu.memory_space<vmem>>, vector<4x16xf32>
    tpu.vector_store %arg9[%c8_16, %c16_17], %20 {strides = array<i32>} : memref<100x128xf32, #tpu.memory_space<vmem>>, vector<4x16xf32>,
    %22 = vector.extract_strided_slice %15 {offsets = [0, 3], sizes = [4, 16], strides = [1, 1]} : vector<4x20xf32> to vector<4x16xf32>
    %c12_18 = arith.constant 12 : index
    %c16_19 = arith.constant 16 : index
    %23 = vector.load %arg9[%c12_18, %c16_19] : memref<100x128xf32, #tpu.memory_space<vmem>>, vector<4x16xf32>
    tpu.vector_store %arg9[%c12_18, %c16_19], %22 {strides = array<i32>} : memref<100x128xf32, #tpu.memory_space<vmem>>, vector<4x16xf32>,
    %24 = vector.extract_strided_slice %15 {offsets = [0, 4], sizes = [4, 16], strides = [1, 1]} : vector<4x20xf32> to vector<4x16xf32>
    %c16_20 = arith.constant 16 : index
    %c16_21 = arith.constant 16 : index
    %25 = vector.load %arg9[%c16_20, %c16_21] : memref<100x128xf32, #tpu.memory_space<vmem>>, vector<4x16xf32>
    tpu.vector_store %arg9[%c16_20, %c16_21], %24 {strides = array<i32>} : memref<100x128xf32, #tpu.memory_space<vmem>>, vector<4x16xf32>,
    %26 = vector.extract_strided_slice %15 {offsets = [0, 0], sizes = [4, 16], strides = [1, 1]} : vector<4x20xf32> to vector<4x16xf32>
    %c20 = arith.constant 20 : index
    %c0_22 = arith.constant 0 : index
    %27 = vector.load %arg9[%c20, %c0_22] : memref<100x128xf32, #tpu.memory_space<vmem>>, vector<4x16xf32>
    tpu.vector_store %arg9[%c20, %c0_22], %26 {strides = array<i32>} : memref<100x128xf32, #tpu.memory_space<vmem>>, vector<4x16xf32>,
    %28 = vector.extract_strided_slice %15 {offsets = [0, 1], sizes = [4, 16], strides = [1, 1]} : vector<4x20xf32> to vector<4x16xf32>
    %c24 = arith.constant 24 : index
    %c0_23 = arith.constant 0 : index
    %29 = vector.load %arg9[%c24, %c0_23] : memref<100x128xf32, #tpu.memory_space<vmem>>, vector<4x16xf32>
    tpu.vector_store %arg9[%c24, %c0_23], %28 {strides = array<i32>} : memref<100x128xf32, #tpu.memory_space<vmem>>, vector<4x16xf32>,
    %30 = vector.extract_strided_slice %15 {offsets = [0, 2], sizes = [4, 16], strides = [1, 1]} : vector<4x20xf32> to vector<4x16xf32>
    %c28 = arith.constant 28 : index
    %c0_24 = arith.constant 0 : index
    %31 = vector.load %arg9[%c28, %c0_24] : memref<100x128xf32, #tpu.memory_space<vmem>>, vector<4x16xf32>
    tpu.vector_store %arg9[%c28, %c0_24], %30 {strides = array<i32>} : memref<100x128xf32, #tpu.memory_space<vmem>>, vector<4x16xf32>,
    %32 = vector.extract_strided_slice %15 {offsets = [0, 3], sizes = [4, 16], strides = [1, 1]} : vector<4x20xf32> to vector<4x16xf32>
    %c32 = arith.constant 32 : index
    %c0_25 = arith.constant 0 : index
    %33 = vector.load %arg9[%c32, %c0_25] : memref<100x128xf32, #tpu.memory_space<vmem>>, vector<4x16xf32>
    tpu.vector_store %arg9[%c32, %c0_25], %32 {strides = array<i32>} : memref<100x128xf32, #tpu.memory_space<vmem>>, vector<4x16xf32>,
    %34 = vector.extract_strided_slice %15 {offsets = [0, 4], sizes = [4, 16], strides = [1, 1]} : vector<4x20xf32> to vector<4x16xf32>
    %c36 = arith.constant 36 : index
    %c0_26 = arith.constant 0 : index
    %35 = vector.load %arg9[%c36, %c0_26] : memref<100x128xf32, #tpu.memory_space<vmem>>, vector<4x16xf32>
    tpu.vector_store %arg9[%c36, %c0_26], %34 {strides = array<i32>} : memref<100x128xf32, #tpu.memory_space<vmem>>, vector<4x16xf32>,
    %c0_27 = arith.constant 0 : index
    %c0_28 = arith.constant 0 : index
    %c2 = arith.constant 2 : index
    %c0_29 = arith.constant 0 : index
    %36 = vector.load %arg2[%c0_27, %c0_28, %c2, %c0_29] : memref<1x4x8x20xbf16, #tpu.memory_space<vmem>>, vector<1x4x1x20xbf16>
    %37 = vector.shape_cast %36 : vector<1x4x1x20xbf16> to vector<4x20xbf16>
    %38 = arith.extf %37 : vector<4x20xbf16> to vector<4x20xf32>
    %39 = vector.extract_strided_slice %38 {offsets = [0, 0], sizes = [4, 16], strides = [1, 1]} : vector<4x20xf32> to vector<4x16xf32>
    %c0_30 = arith.constant 0 : index
    %c32_31 = arith.constant 32 : index
    %40 = vector.load %arg9[%c0_30, %c32_31] : memref<100x128xf32, #tpu.memory_space<vmem>>, vector<4x16xf32>
    tpu.vector_store %arg9[%c0_30, %c32_31], %39 {strides = array<i32>} : memref<100x128xf32, #tpu.memory_space<vmem>>, vector<4x16xf32>,
    %41 = vector.extract_strided_slice %38 {offsets = [0, 1], sizes = [4, 16], strides = [1, 1]} : vector<4x20xf32> to vector<4x16xf32>
    %c4_32 = arith.constant 4 : index
    %c32_33 = arith.constant 32 : index
    %42 = vector.load %arg9[%c4_32, %c32_33] : memref<100x128xf32, #tpu.memory_space<vmem>>, vector<4x16xf32>
    tpu.vector_store %arg9[%c4_32, %c32_33], %41 {strides = array<i32>} : memref<100x128xf32, #tpu.memory_space<vmem>>, vector<4x16xf32>,
    %43 = vector.extract_strided_slice %38 {offsets = [0, 2], sizes = [4, 16], strides = [1, 1]} : vector<4x20xf32> to vector<4x16xf32>
    %c8_34 = arith.constant 8 : index
    %c32_35 = arith.constant 32 : index
    %44 = vector.load %arg9[%c8_34, %c32_35] : memref<100x128xf32, #tpu.memory_space<vmem>>, vector<4x16xf32>
    tpu.vector_store %arg9[%c8_34, %c32_35], %43 {strides = array<i32>} : memref<100x128xf32, #tpu.memory_space<vmem>>, vector<4x16xf32>,
    %45 = vector.extract_strided_slice %38 {offsets = [0, 3], sizes = [4, 16], strides = [1, 1]} : vector<4x20xf32> to vector<4x16xf32>
    %c12_36 = arith.constant 12 : index
    %c32_37 = arith.constant 32 : index
    %46 = vector.load %arg9[%c12_36, %c32_37] : memref<100x128xf32, #tpu.memory_space<vmem>>, vector<4x16xf32>
    tpu.vector_store %arg9[%c12_36, %c32_37], %45 {strides = array<i32>} : memref<100x128xf32, #tpu.memory_space<vmem>>, vector<4x16xf32>,
    %47 = vector.extract_strided_slice %38 {offsets = [0, 4], sizes = [4, 16], strides = [1, 1]} : vector<4x20xf32> to vector<4x16xf32>
    %c16_38 = arith.constant 16 : index
    %c32_39 = arith.constant 32 : index
    %48 = vector.load %arg9[%c16_38, %c32_39] : memref<100x128xf32, #tpu.memory_space<vmem>>, vector<4x16xf32>
    tpu.vector_store %arg9[%c16_38, %c32_39], %47 {strides = array<i32>} : memref<100x128xf32, #tpu.memory_space<vmem>>, vector<4x16xf32>,
    %49 = vector.extract_strided_slice %38 {offsets = [0, 0], sizes = [4, 16], strides = [1, 1]} : vector<4x20xf32> to vector<4x16xf32>
    %c20_40 = arith.constant 20 : index
    %c16_41 = arith.constant 16 : index
    %50 = vector.load %arg9[%c20_40, %c16_41] : memref<100x128xf32, #tpu.memory_space<vmem>>, vector<4x16xf32>
    tpu.vector_store %arg9[%c20_40, %c16_41], %49 {strides = array<i32>} : memref<100x128xf32, #tpu.memory_space<vmem>>, vector<4x16xf32>,
    %51 = vector.extract_strided_slice %38 {offsets = [0, 1], sizes = [4, 16], strides = [1, 1]} : vector<4x20xf32> to vector<4x16xf32>
    %c24_42 = arith.constant 24 : index
    %c16_43 = arith.constant 16 : index
    %52 = vector.load %arg9[%c24_42, %c16_43] : memref<100x128xf32, #tpu.memory_space<vmem>>, vector<4x16xf32>
    tpu.vector_store %arg9[%c24_42, %c16_43], %51 {strides = array<i32>} : memref<100x128xf32, #tpu.memory_space<vmem>>, vector<4x16xf32>,
    %53 = vector.extract_strided_slice %38 {offsets = [0, 2], sizes = [4, 16], strides = [1, 1]} : vector<4x20xf32> to vector<4x16xf32>
    %c28_44 = arith.constant 28 : index
    %c16_45 = arith.constant 16 : index
    %54 = vector.load %arg9[%c28_44, %c16_45] : memref<100x128xf32, #tpu.memory_space<vmem>>, vector<4x16xf32>
    tpu.vector_store %arg9[%c28_44, %c16_45], %53 {strides = array<i32>} : memref<100x128xf32, #tpu.memory_space<vmem>>, vector<4x16xf32>,
    %55 = vector.extract_strided_slice %38 {offsets = [0, 3], sizes = [4, 16], strides = [1, 1]} : vector<4x20xf32> to vector<4x16xf32>
    %c32_46 = arith.constant 32 : index
    %c16_47 = arith.constant 16 : index
    %56 = vector.load %arg9[%c32_46, %c16_47] : memref<100x128xf32, #tpu.memory_space<vmem>>, vector<4x16xf32>
    tpu.vector_store %arg9[%c32_46, %c16_47], %55 {strides = array<i32>} : memref<100x128xf32, #tpu.memory_space<vmem>>, vector<4x16xf32>,
    %57 = vector.extract_strided_slice %38 {offsets = [0, 4], sizes = [4, 16], strides = [1, 1]} : vector<4x20xf32> to vector<4x16xf32>
    %c36_48 = arith.constant 36 : index
    %c16_49 = arith.constant 16 : index
    %58 = vector.load %arg9[%c36_48, %c16_49] : memref<100x128xf32, #tpu.memory_space<vmem>>, vector<4x16xf32>
    tpu.vector_store %arg9[%c36_48, %c16_49], %57 {strides = array<i32>} : memref<100x128xf32, #tpu.memory_space<vmem>>, vector<4x16xf32>,
    %59 = vector.extract_strided_slice %38 {offsets = [0, 0], sizes = [4, 16], strides = [1, 1]} : vector<4x20xf32> to vector<4x16xf32>
    %c40 = arith.constant 40 : index
    %c0_50 = arith.constant 0 : index
    %60 = vector.load %arg9[%c40, %c0_50] : memref<100x128xf32, #tpu.memory_space<vmem>>, vector<4x16xf32>
    tpu.vector_store %arg9[%c40, %c0_50], %59 {strides = array<i32>} : memref<100x128xf32, #tpu.memory_space<vmem>>, vector<4x16xf32>,
    %61 = vector.extract_strided_slice %38 {offsets = [0, 1], sizes = [4, 16], strides = [1, 1]} : vector<4x20xf32> to vector<4x16xf32>
    %c44 = arith.constant 44 : index
    %c0_51 = arith.constant 0 : index
    %62 = vector.load %arg9[%c44, %c0_51] : memref<100x128xf32, #tpu.memory_space<vmem>>, vector<4x16xf32>
    tpu.vector_store %arg9[%c44, %c0_51], %61 {strides = array<i32>} : memref<100x128xf32, #tpu.memory_space<vmem>>, vector<4x16xf32>,
    %63 = vector.extract_strided_slice %38 {offsets = [0, 2], sizes = [4, 16], strides = [1, 1]} : vector<4x20xf32> to vector<4x16xf32>
    %c48 = arith.constant 48 : index
    %c0_52 = arith.constant 0 : index
    %64 = vector.load %arg9[%c48, %c0_52] : memref<100x128xf32, #tpu.memory_space<vmem>>, vector<4x16xf32>
    tpu.vector_store %arg9[%c48, %c0_52], %63 {strides = array<i32>} : memref<100x128xf32, #tpu.memory_space<vmem>>, vector<4x16xf32>,
    %65 = vector.extract_strided_slice %38 {offsets = [0, 3], sizes = [4, 16], strides = [1, 1]} : vector<4x20xf32> to vector<4x16xf32>
    %c52 = arith.constant 52 : index
    %c0_53 = arith.constant 0 : index
    %66 = vector.load %arg9[%c52, %c0_53] : memref<100x128xf32, #tpu.memory_space<vmem>>, vector<4x16xf32>
    tpu.vector_store %arg9[%c52, %c0_53], %65 {strides = array<i32>} : memref<100x128xf32, #tpu.memory_space<vmem>>, vector<4x16xf32>,
    %67 = vector.extract_strided_slice %38 {offsets = [0, 4], sizes = [4, 16], strides = [1, 1]} : vector<4x20xf32> to vector<4x16xf32>
    %c56 = arith.constant 56 : index
    %c0_54 = arith.constant 0 : index
    %68 = vector.load %arg9[%c56, %c0_54] : memref<100x128xf32, #tpu.memory_space<vmem>>, vector<4x16xf32>
    tpu.vector_store %arg9[%c56, %c0_54], %67 {strides = array<i32>} : memref<100x128xf32, #tpu.memory_space<vmem>>, vector<4x16xf32>,
    %c0_55 = arith.constant 0 : index
    %c0_56 = arith.constant 0 : index
    %c3 = arith.constant 3 : index
    %c0_57 = arith.constant 0 : index
    %69 = vector.load %arg2[%c0_55, %c0_56, %c3, %c0_57] : memref<1x4x8x20xbf16, #tpu.memory_space<vmem>>, vector<1x4x1x20xbf16>
    %70 = vector.shape_cast %69 : vector<1x4x1x20xbf16> to vector<4x20xbf16>
    %71 = arith.extf %70 : vector<4x20xbf16> to vector<4x20xf32>
    %72 = vector.extract_strided_slice %71 {offsets = [0, 0], sizes = [4, 16], strides = [1, 1]} : vector<4x20xf32> to vector<4x16xf32>
    %c0_58 = arith.constant 0 : index
    %c48_59 = arith.constant 48 : index
    %73 = vector.load %arg9[%c0_58, %c48_59] : memref<100x128xf32, #tpu.memory_space<vmem>>, vector<4x16xf32>
    tpu.vector_store %arg9[%c0_58, %c48_59], %72 {strides = array<i32>} : memref<100x128xf32, #tpu.memory_space<vmem>>, vector<4x16xf32>,
    %74 = vector.extract_strided_slice %71 {offsets = [0, 1], sizes = [4, 16], strides = [1, 1]} : vector<4x20xf32> to vector<4x16xf32>
    %c4_60 = arith.constant 4 : index
    %c48_61 = arith.constant 48 : index
    %75 = vector.load %arg9[%c4_60, %c48_61] : memref<100x128xf32, #tpu.memory_space<vmem>>, vector<4x16xf32>
    tpu.vector_store %arg9[%c4_60, %c48_61], %74 {strides = array<i32>} : memref<100x128xf32, #tpu.memory_space<vmem>>, vector<4x16xf32>,
    %76 = vector.extract_strided_slice %71 {offsets = [0, 2], sizes = [4, 16], strides = [1, 1]} : vector<4x20xf32> to vector<4x16xf32>
    %c8_62 = arith.constant 8 : index
    %c48_63 = arith.constant 48 : index
    %77 = vector.load %arg9[%c8_62, %c48_63] : memref<100x128xf32, #tpu.memory_space<vmem>>, vector<4x16xf32>
    tpu.vector_store %arg9[%c8_62, %c48_63], %76 {strides = array<i32>} : memref<100x128xf32, #tpu.memory_space<vmem>>, vector<4x16xf32>,
    %78 = vector.extract_strided_slice %71 {offsets = [0, 3], sizes = [4, 16], strides = [1, 1]} : vector<4x20xf32> to vector<4x16xf32>
    %c12_64 = arith.constant 12 : index
    %c48_65 = arith.constant 48 : index
    %79 = vector.load %arg9[%c12_64, %c48_65] : memref<100x128xf32, #tpu.memory_space<vmem>>, vector<4x16xf32>
    tpu.vector_store %arg9[%c12_64, %c48_65], %78 {strides = array<i32>} : memref<100x128xf32, #tpu.memory_space<vmem>>, vector<4x16xf32>,
    %80 = vector.extract_strided_slice %71 {offsets = [0, 4], sizes = [4, 16], strides = [1, 1]} : vector<4x20xf32> to vector<4x16xf32>
    %c16_66 = arith.constant 16 : index
    %c48_67 = arith.constant 48 : index
    %81 = vector.load %arg9[%c16_66, %c48_67] : memref<100x128xf32, #tpu.memory_space<vmem>>, vector<4x16xf32>
    tpu.vector_store %arg9[%c16_66, %c48_67], %80 {strides = array<i32>} : memref<100x128xf32, #tpu.memory_space<vmem>>, vector<4x16xf32>,
    %82 = vector.extract_strided_slice %71 {offsets = [0, 0], sizes = [4, 16], strides = [1, 1]} : vector<4x20xf32> to vector<4x16xf32>
    %c20_68 = arith.constant 20 : index
    %c32_69 = arith.constant 32 : index
    %83 = vector.load %arg9[%c20_68, %c32_69] : memref<100x128xf32, #tpu.memory_space<vmem>>, vector<4x16xf32>
    tpu.vector_store %arg9[%c20_68, %c32_69], %82 {strides = array<i32>} : memref<100x128xf32, #tpu.memory_space<vmem>>, vector<4x16xf32>,
    %84 = vector.extract_strided_slice %71 {offsets = [0, 1], sizes = [4, 16], strides = [1, 1]} : vector<4x20xf32> to vector<4x16xf32>
    %c24_70 = arith.constant 24 : index
    %c32_71 = arith.constant 32 : index
    %85 = vector.load %arg9[%c24_70, %c32_71] : memref<100x128xf32, #tpu.memory_space<vmem>>, vector<4x16xf32>
    tpu.vector_store %arg9[%c24_70, %c32_71], %84 {strides = array<i32>} : memref<100x128xf32, #tpu.memory_space<vmem>>, vector<4x16xf32>,
    %86 = vector.extract_strided_slice %71 {offsets = [0, 2], sizes = [4, 16], strides = [1, 1]} : vector<4x20xf32> to vector<4x16xf32>
    %c28_72 = arith.constant 28 : index
    %c32_73 = arith.constant 32 : index
    %87 = vector.load %arg9[%c28_72, %c32_73] : memref<100x128xf32, #tpu.memory_space<vmem>>, vector<4x16xf32>
    tpu.vector_store %arg9[%c28_72, %c32_73], %86 {strides = array<i32>} : memref<100x128xf32, #tpu.memory_space<vmem>>, vector<4x16xf32>,
    %88 = vector.extract_strided_slice %71 {offsets = [0, 3], sizes = [4, 16], strides = [1, 1]} : vector<4x20xf32> to vector<4x16xf32>
    %c32_74 = arith.constant 32 : index
    %c32_75 = arith.constant 32 : index
    %89 = vector.load %arg9[%c32_74, %c32_75] : memref<100x128xf32, #tpu.memory_space<vmem>>, vector<4x16xf32>
    tpu.vector_store %arg9[%c32_74, %c32_75], %88 {strides = array<i32>} : memref<100x128xf32, #tpu.memory_space<vmem>>, vector<4x16xf32>,
    %90 = vector.extract_strided_slice %71 {offsets = [0, 4], sizes = [4, 16], strides = [1, 1]} : vector<4x20xf32> to vector<4x16xf32>
    %c36_76 = arith.constant 36 : index
    %c32_77 = arith.constant 32 : index
    %91 = vector.load %arg9[%c36_76, %c32_77] : memref<100x128xf32, #tpu.memory_space<vmem>>, vector<4x16xf32>
    tpu.vector_store %arg9[%c36_76, %c32_77], %90 {strides = array<i32>} : memref<100x128xf32, #tpu.memory_space<vmem>>, vector<4x16xf32>,
    %92 = vector.extract_strided_slice %71 {offsets = [0, 0], sizes = [4, 16], strides = [1, 1]} : vector<4x20xf32> to vector<4x16xf32>
    %c40_78 = arith.constant 40 : index
    %c16_79 = arith.constant 16 : index
    %93 = vector.load %arg9[%c40_78, %c16_79] : memref<100x128xf32, #tpu.memory_space<vmem>>, vector<4x16xf32>
    tpu.vector_store %arg9[%c40_78, %c16_79], %92 {strides = array<i32>} : memref<100x128xf32, #tpu.memory_space<vmem>>, vector<4x16xf32>,
    %94 = vector.extract_strided_slice %71 {offsets = [0, 1], sizes = [4, 16], strides = [1, 1]} : vector<4x20xf32> to vector<4x16xf32>
    %c44_80 = arith.constant 44 : index
    %c16_81 = arith.constant 16 : index
    %95 = vector.load %arg9[%c44_80, %c16_81] : memref<100x128xf32, #tpu.memory_space<vmem>>, vector<4x16xf32>
    tpu.vector_store %arg9[%c44_80, %c16_81], %94 {strides = array<i32>} : memref<100x128xf32, #tpu.memory_space<vmem>>, vector<4x16xf32>,
    %96 = vector.extract_strided_slice %71 {offsets = [0, 2], sizes = [4, 16], strides = [1, 1]} : vector<4x20xf32> to vector<4x16xf32>
    %c48_82 = arith.constant 48 : index
    %c16_83 = arith.constant 16 : index
    %97 = vector.load %arg9[%c48_82, %c16_83] : memref<100x128xf32, #tpu.memory_space<vmem>>, vector<4x16xf32>
    tpu.vector_store %arg9[%c48_82, %c16_83], %96 {strides = array<i32>} : memref<100x128xf32, #tpu.memory_space<vmem>>, vector<4x16xf32>,
    %98 = vector.extract_strided_slice %71 {offsets = [0, 3], sizes = [4, 16], strides = [1, 1]} : vector<4x20xf32> to vector<4x16xf32>
    %c52_84 = arith.constant 52 : index
    %c16_85 = arith.constant 16 : index
    %99 = vector.load %arg9[%c52_84, %c16_85] : memref<100x128xf32, #tpu.memory_space<vmem>>, vector<4x16xf32>
    tpu.vector_store %arg9[%c52_84, %c16_85], %98 {strides = array<i32>} : memref<100x128xf32, #tpu.memory_space<vmem>>, vector<4x16xf32>,
    %100 = vector.extract_strided_slice %71 {offsets = [0, 4], sizes = [4, 16], strides = [1, 1]} : vector<4x20xf32> to vector<4x16xf32>
    %c56_86 = arith.constant 56 : index
    %c16_87 = arith.constant 16 : index
    %101 = vector.load %arg9[%c56_86, %c16_87] : memref<100x128xf32, #tpu.memory_space<vmem>>, vector<4x16xf32>
    tpu.vector_store %arg9[%c56_86, %c16_87], %100 {strides = array<i32>} : memref<100x128xf32, #tpu.memory_space<vmem>>, vector<4x16xf32>,
    %102 = vector.extract_strided_slice %71 {offsets = [0, 0], sizes = [4, 16], strides = [1, 1]} : vector<4x20xf32> to vector<4x16xf32>
    %c60 = arith.constant 60 : index
    %c0_88 = arith.constant 0 : index
    %103 = vector.load %arg9[%c60, %c0_88] : memref<100x128xf32, #tpu.memory_space<vmem>>, vector<4x16xf32>
    tpu.vector_store %arg9[%c60, %c0_88], %102 {strides = array<i32>} : memref<100x128xf32, #tpu.memory_space<vmem>>, vector<4x16xf32>,
    %104 = vector.extract_strided_slice %71 {offsets = [0, 1], sizes = [4, 16], strides = [1, 1]} : vector<4x20xf32> to vector<4x16xf32>
    %c64 = arith.constant 64 : index
    %c0_89 = arith.constant 0 : index
    %105 = vector.load %arg9[%c64, %c0_89] : memref<100x128xf32, #tpu.memory_space<vmem>>, vector<4x16xf32>
    tpu.vector_store %arg9[%c64, %c0_89], %104 {strides = array<i32>} : memref<100x128xf32, #tpu.memory_space<vmem>>, vector<4x16xf32>,
    %106 = vector.extract_strided_slice %71 {offsets = [0, 2], sizes = [4, 16], strides = [1, 1]} : vector<4x20xf32> to vector<4x16xf32>
    %c68 = arith.constant 68 : index
    %c0_90 = arith.constant 0 : index
    %107 = vector.load %arg9[%c68, %c0_90] : memref<100x128xf32, #tpu.memory_space<vmem>>, vector<4x16xf32>
    tpu.vector_store %arg9[%c68, %c0_90], %106 {strides = array<i32>} : memref<100x128xf32, #tpu.memory_space<vmem>>, vector<4x16xf32>,
    %108 = vector.extract_strided_slice %71 {offsets = [0, 3], sizes = [4, 16], strides = [1, 1]} : vector<4x20xf32> to vector<4x16xf32>
    %c72 = arith.constant 72 : index
    %c0_91 = arith.constant 0 : index
    %109 = vector.load %arg9[%c72, %c0_91] : memref<100x128xf32, #tpu.memory_space<vmem>>, vector<4x16xf32>
    tpu.vector_store %arg9[%c72, %c0_91], %108 {strides = array<i32>} : memref<100x128xf32, #tpu.memory_space<vmem>>, vector<4x16xf32>,
    %110 = vector.extract_strided_slice %71 {offsets = [0, 4], sizes = [4, 16], strides = [1, 1]} : vector<4x20xf32> to vector<4x16xf32>
    %c76 = arith.constant 76 : index
    %c0_92 = arith.constant 0 : index
    %111 = vector.load %arg9[%c76, %c0_92] : memref<100x128xf32, #tpu.memory_space<vmem>>, vector<4x16xf32>
    tpu.vector_store %arg9[%c76, %c0_92], %110 {strides = array<i32>} : memref<100x128xf32, #tpu.memory_space<vmem>>, vector<4x16xf32>,
    %c0_93 = arith.constant 0 : index
    %c0_94 = arith.constant 0 : index
    %c4_95 = arith.constant 4 : index
    %c0_96 = arith.constant 0 : index
    %112 = vector.load %arg2[%c0_93, %c0_94, %c4_95, %c0_96] : memref<1x4x8x20xbf16, #tpu.memory_space<vmem>>, vector<1x4x1x20xbf16>
    %113 = vector.shape_cast %112 : vector<1x4x1x20xbf16> to vector<4x20xbf16>
    %114 = arith.extf %113 : vector<4x20xbf16> to vector<4x20xf32>
    %115 = vector.extract_strided_slice %114 {offsets = [0, 0], sizes = [4, 16], strides = [1, 1]} : vector<4x20xf32> to vector<4x16xf32>
    %c0_97 = arith.constant 0 : index
    %c64_98 = arith.constant 64 : index
    %116 = vector.load %arg9[%c0_97, %c64_98] : memref<100x128xf32, #tpu.memory_space<vmem>>, vector<4x16xf32>
    tpu.vector_store %arg9[%c0_97, %c64_98], %115 {strides = array<i32>} : memref<100x128xf32, #tpu.memory_space<vmem>>, vector<4x16xf32>,
    %117 = vector.extract_strided_slice %114 {offsets = [0, 1], sizes = [4, 16], strides = [1, 1]} : vector<4x20xf32> to vector<4x16xf32>
    %c4_99 = arith.constant 4 : index
    %c64_100 = arith.constant 64 : index
    %118 = vector.load %arg9[%c4_99, %c64_100] : memref<100x128xf32, #tpu.memory_space<vmem>>, vector<4x16xf32>
    tpu.vector_store %arg9[%c4_99, %c64_100], %117 {strides = array<i32>} : memref<100x128xf32, #tpu.memory_space<vmem>>, vector<4x16xf32>,
    %119 = vector.extract_strided_slice %114 {offsets = [0, 2], sizes = [4, 16], strides = [1, 1]} : vector<4x20xf32> to vector<4x16xf32>
    %c8_101 = arith.constant 8 : index
    %c64_102 = arith.constant 64 : index
    %120 = vector.load %arg9[%c8_101, %c64_102] : memref<100x128xf32, #tpu.memory_space<vmem>>, vector<4x16xf32>
    tpu.vector_store %arg9[%c8_101, %c64_102], %119 {strides = array<i32>} : memref<100x128xf32, #tpu.memory_space<vmem>>, vector<4x16xf32>,
    %121 = vector.extract_strided_slice %114 {offsets = [0, 3], sizes = [4, 16], strides = [1, 1]} : vector<4x20xf32> to vector<4x16xf32>
    %c12_103 = arith.constant 12 : index
    %c64_104 = arith.constant 64 : index
    %122 = vector.load %arg9[%c12_103, %c64_104] : memref<100x128xf32, #tpu.memory_space<vmem>>, vector<4x16xf32>
    tpu.vector_store %arg9[%c12_103, %c64_104], %121 {strides = array<i32>} : memref<100x128xf32, #tpu.memory_space<vmem>>, vector<4x16xf32>,
    %123 = vector.extract_strided_slice %114 {offsets = [0, 4], sizes = [4, 16], strides = [1, 1]} : vector<4x20xf32> to vector<4x16xf32>
    %c16_105 = arith.constant 16 : index
    %c64_106 = arith.constant 64 : index
    %124 = vector.load %arg9[%c16_105, %c64_106] : memref<100x128xf32, #tpu.memory_space<vmem>>, vector<4x16xf32>
    tpu.vector_store %arg9[%c16_105, %c64_106], %123 {strides = array<i32>} : memref<100x128xf32, #tpu.memory_space<vmem>>, vector<4x16xf32>,
    %125 = vector.extract_strided_slice %114 {offsets = [0, 0], sizes = [4, 16], strides = [1, 1]} : vector<4x20xf32> to vector<4x16xf32>
    %c20_107 = arith.constant 20 : index
    %c48_108 = arith.constant 48 : index
    %126 = vector.load %arg9[%c20_107, %c48_108] : memref<100x128xf32, #tpu.memory_space<vmem>>, vector<4x16xf32>
    tpu.vector_store %arg9[%c20_107, %c48_108], %125 {strides = array<i32>} : memref<100x128xf32, #tpu.memory_space<vmem>>, vector<4x16xf32>,
    %127 = vector.extract_strided_slice %114 {offsets = [0, 1], sizes = [4, 16], strides = [1, 1]} : vector<4x20xf32> to vector<4x16xf32>
    %c24_109 = arith.constant 24 : index
    %c48_110 = arith.constant 48 : index
    %128 = vector.load %arg9[%c24_109, %c48_110] : memref<100x128xf32, #tpu.memory_space<vmem>>, vector<4x16xf32>
    tpu.vector_store %arg9[%c24_109, %c48_110], %127 {strides = array<i32>} : memref<100x128xf32, #tpu.memory_space<vmem>>, vector<4x16xf32>,
    %129 = vector.extract_strided_slice %114 {offsets = [0, 2], sizes = [4, 16], strides = [1, 1]} : vector<4x20xf32> to vector<4x16xf32>
    %c28_111 = arith.constant 28 : index
    %c48_112 = arith.constant 48 : index
    %130 = vector.load %arg9[%c28_111, %c48_112] : memref<100x128xf32, #tpu.memory_space<vmem>>, vector<4x16xf32>
    tpu.vector_store %arg9[%c28_111, %c48_112], %129 {strides = array<i32>} : memref<100x128xf32, #tpu.memory_space<vmem>>, vector<4x16xf32>,
    %131 = vector.extract_strided_slice %114 {offsets = [0, 3], sizes = [4, 16], strides = [1, 1]} : vector<4x20xf32> to vector<4x16xf32>
    %c32_113 = arith.constant 32 : index
    %c48_114 = arith.constant 48 : index
    %132 = vector.load %arg9[%c32_113, %c48_114] : memref<100x128xf32, #tpu.memory_space<vmem>>, vector<4x16xf32>
    tpu.vector_store %arg9[%c32_113, %c48_114], %131 {strides = array<i32>} : memref<100x128xf32, #tpu.memory_space<vmem>>, vector<4x16xf32>,
    %133 = vector.extract_strided_slice %114 {offsets = [0, 4], sizes = [4, 16], strides = [1, 1]} : vector<4x20xf32> to vector<4x16xf32>
    %c36_115 = arith.constant 36 : index
    %c48_116 = arith.constant 48 : index
    %134 = vector.load %arg9[%c36_115, %c48_116] : memref<100x128xf32, #tpu.memory_space<vmem>>, vector<4x16xf32>
    tpu.vector_store %arg9[%c36_115, %c48_116], %133 {strides = array<i32>} : memref<100x128xf32, #tpu.memory_space<vmem>>, vector<4x16xf32>,
    %135 = vector.extract_strided_slice %114 {offsets = [0, 0], sizes = [4, 16], strides = [1, 1]} : vector<4x20xf32> to vector<4x16xf32>
    %c40_117 = arith.constant 40 : index
    %c32_118 = arith.constant 32 : index
    %136 = vector.load %arg9[%c40_117, %c32_118] : memref<100x128xf32, #tpu.memory_space<vmem>>, vector<4x16xf32>
    tpu.vector_store %arg9[%c40_117, %c32_118], %135 {strides = array<i32>} : memref<100x128xf32, #tpu.memory_space<vmem>>, vector<4x16xf32>,
    %137 = vector.extract_strided_slice %114 {offsets = [0, 1], sizes = [4, 16], strides = [1, 1]} : vector<4x20xf32> to vector<4x16xf32>
    %c44_119 = arith.constant 44 : index
    %c32_120 = arith.constant 32 : index
    %138 = vector.load %arg9[%c44_119, %c32_120] : memref<100x128xf32, #tpu.memory_space<vmem>>, vector<4x16xf32>
    tpu.vector_store %arg9[%c44_119, %c32_120], %137 {strides = array<i32>} : memref<100x128xf32, #tpu.memory_space<vmem>>, vector<4x16xf32>,
    %139 = vector.extract_strided_slice %114 {offsets = [0, 2], sizes = [4, 16], strides = [1, 1]} : vector<4x20xf32> to vector<4x16xf32>
    %c48_121 = arith.constant 48 : index
    %c32_122 = arith.constant 32 : index
    %140 = vector.load %arg9[%c48_121, %c32_122] : memref<100x128xf32, #tpu.memory_space<vmem>>, vector<4x16xf32>
    tpu.vector_store %arg9[%c48_121, %c32_122], %139 {strides = array<i32>} : memref<100x128xf32, #tpu.memory_space<vmem>>, vector<4x16xf32>,
    %141 = vector.extract_strided_slice %114 {offsets = [0, 3], sizes = [4, 16], strides = [1, 1]} : vector<4x20xf32> to vector<4x16xf32>
    %c52_123 = arith.constant 52 : index
    %c32_124 = arith.constant 32 : index
    %142 = vector.load %arg9[%c52_123, %c32_124] : memref<100x128xf32, #tpu.memory_space<vmem>>, vector<4x16xf32>
    tpu.vector_store %arg9[%c52_123, %c32_124], %141 {strides = array<i32>} : memref<100x128xf32, #tpu.memory_space<vmem>>, vector<4x16xf32>,
    %143 = vector.extract_strided_slice %114 {offsets = [0, 4], sizes = [4, 16], strides = [1, 1]} : vector<4x20xf32> to vector<4x16xf32>
    %c56_125 = arith.constant 56 : index
    %c32_126 = arith.constant 32 : index
    %144 = vector.load %arg9[%c56_125, %c32_126] : memref<100x128xf32, #tpu.memory_space<vmem>>, vector<4x16xf32>
    tpu.vector_store %arg9[%c56_125, %c32_126], %143 {strides = array<i32>} : memref<100x128xf32, #tpu.memory_space<vmem>>, vector<4x16xf32>,
    %145 = vector.extract_strided_slice %114 {offsets = [0, 0], sizes = [4, 16], strides = [1, 1]} : vector<4x20xf32> to vector<4x16xf32>
    %c60_127 = arith.constant 60 : index
    %c16_128 = arith.constant 16 : index
    %146 = vector.load %arg9[%c60_127, %c16_128] : memref<100x128xf32, #tpu.memory_space<vmem>>, vector<4x16xf32>
    tpu.vector_store %arg9[%c60_127, %c16_128], %145 {strides = array<i32>} : memref<100x128xf32, #tpu.memory_space<vmem>>, vector<4x16xf32>,
    %147 = vector.extract_strided_slice %114 {offsets = [0, 1], sizes = [4, 16], strides = [1, 1]} : vector<4x20xf32> to vector<4x16xf32>
    %c64_129 = arith.constant 64 : index
    %c16_130 = arith.constant 16 : index
    %148 = vector.load %arg9[%c64_129, %c16_130] : memref<100x128xf32, #tpu.memory_space<vmem>>, vector<4x16xf32>
    tpu.vector_store %arg9[%c64_129, %c16_130], %147 {strides = array<i32>} : memref<100x128xf32, #tpu.memory_space<vmem>>, vector<4x16xf32>,
    %149 = vector.extract_strided_slice %114 {offsets = [0, 2], sizes = [4, 16], strides = [1, 1]} : vector<4x20xf32> to vector<4x16xf32>
    %c68_131 = arith.constant 68 : index
    %c16_132 = arith.constant 16 : index
    %150 = vector.load %arg9[%c68_131, %c16_132] : memref<100x128xf32, #tpu.memory_space<vmem>>, vector<4x16xf32>
    tpu.vector_store %arg9[%c68_131, %c16_132], %149 {strides = array<i32>} : memref<100x128xf32, #tpu.memory_space<vmem>>, vector<4x16xf32>,
    %151 = vector.extract_strided_slice %114 {offsets = [0, 3], sizes = [4, 16], strides = [1, 1]} : vector<4x20xf32> to vector<4x16xf32>
    %c72_133 = arith.constant 72 : index
    %c16_134 = arith.constant 16 : index
    %152 = vector.load %arg9[%c72_133, %c16_134] : memref<100x128xf32, #tpu.memory_space<vmem>>, vector<4x16xf32>
    tpu.vector_store %arg9[%c72_133, %c16_134], %151 {strides = array<i32>} : memref<100x128xf32, #tpu.memory_space<vmem>>, vector<4x16xf32>,
    %153 = vector.extract_strided_slice %114 {offsets = [0, 4], sizes = [4, 16], strides = [1, 1]} : vector<4x20xf32> to vector<4x16xf32>
    %c76_135 = arith.constant 76 : index
    %c16_136 = arith.constant 16 : index
    %154 = vector.load %arg9[%c76_135, %c16_136] : memref<100x128xf32, #tpu.memory_space<vmem>>, vector<4x16xf32>
    tpu.vector_store %arg9[%c76_135, %c16_136], %153 {strides = array<i32>} : memref<100x128xf32, #tpu.memory_space<vmem>>, vector<4x16xf32>,
    %155 = vector.extract_strided_slice %114 {offsets = [0, 0], sizes = [4, 16], strides = [1, 1]} : vector<4x20xf32> to vector<4x16xf32>
    %c80 = arith.constant 80 : index
    %c0_137 = arith.constant 0 : index
    %156 = vector.load %arg9[%c80, %c0_137] : memref<100x128xf32, #tpu.memory_space<vmem>>, vector<4x16xf32>
    tpu.vector_store %arg9[%c80, %c0_137], %155 {strides = array<i32>} : memref<100x128xf32, #tpu.memory_space<vmem>>, vector<4x16xf32>,
    %157 = vector.extract_strided_slice %114 {offsets = [0, 1], sizes = [4, 16], strides = [1, 1]} : vector<4x20xf32> to vector<4x16xf32>
    %c84 = arith.constant 84 : index
    %c0_138 = arith.constant 0 : index
    %158 = vector.load %arg9[%c84, %c0_138] : memref<100x128xf32, #tpu.memory_space<vmem>>, vector<4x16xf32>
    tpu.vector_store %arg9[%c84, %c0_138], %157 {strides = array<i32>} : memref<100x128xf32, #tpu.memory_space<vmem>>, vector<4x16xf32>,
    %159 = vector.extract_strided_slice %114 {offsets = [0, 2], sizes = [4, 16], strides = [1, 1]} : vector<4x20xf32> to vector<4x16xf32>
    %c88 = arith.constant 88 : index
    %c0_139 = arith.constant 0 : index
    %160 = vector.load %arg9[%c88, %c0_139] : memref<100x128xf32, #tpu.memory_space<vmem>>, vector<4x16xf32>
    tpu.vector_store %arg9[%c88, %c0_139], %159 {strides = array<i32>} : memref<100x128xf32, #tpu.memory_space<vmem>>, vector<4x16xf32>,
    %161 = vector.extract_strided_slice %114 {offsets = [0, 3], sizes = [4, 16], strides = [1, 1]} : vector<4x20xf32> to vector<4x16xf32>
    %c92 = arith.constant 92 : index
    %c0_140 = arith.constant 0 : index
    %162 = vector.load %arg9[%c92, %c0_140] : memref<100x128xf32, #tpu.memory_space<vmem>>, vector<4x16xf32>
    tpu.vector_store %arg9[%c92, %c0_140], %161 {strides = array<i32>} : memref<100x128xf32, #tpu.memory_space<vmem>>, vector<4x16xf32>,
    %163 = vector.extract_strided_slice %114 {offsets = [0, 4], sizes = [4, 16], strides = [1, 1]} : vector<4x20xf32> to vector<4x16xf32>
    %c96 = arith.constant 96 : index
    %c0_141 = arith.constant 0 : index
    %164 = vector.load %arg9[%c96, %c0_141] : memref<100x128xf32, #tpu.memory_space<vmem>>, vector<4x16xf32>
    tpu.vector_store %arg9[%c96, %c0_141], %163 {strides = array<i32>} : memref<100x128xf32, #tpu.memory_space<vmem>>, vector<4x16xf32>,
    %c0_142 = arith.constant 0 : index
    %c0_143 = arith.constant 0 : index
    %c5 = arith.constant 5 : index
    %c0_144 = arith.constant 0 : index
    %165 = vector.load %arg2[%c0_142, %c0_143, %c5, %c0_144] : memref<1x4x8x20xbf16, #tpu.memory_space<vmem>>, vector<1x4x1x20xbf16>
    %166 = vector.shape_cast %165 : vector<1x4x1x20xbf16> to vector<4x20xbf16>
    %167 = arith.extf %166 : vector<4x20xbf16> to vector<4x20xf32>
    %168 = vector.extract_strided_slice %167 {offsets = [0, 0], sizes = [4, 16], strides = [1, 1]} : vector<4x20xf32> to vector<4x16xf32>
    %c0_145 = arith.constant 0 : index
    %c80_146 = arith.constant 80 : index
    %169 = vector.load %arg9[%c0_145, %c80_146] : memref<100x128xf32, #tpu.memory_space<vmem>>, vector<4x16xf32>
    tpu.vector_store %arg9[%c0_145, %c80_146], %168 {strides = array<i32>} : memref<100x128xf32, #tpu.memory_space<vmem>>, vector<4x16xf32>,
    %170 = vector.extract_strided_slice %167 {offsets = [0, 1], sizes = [4, 16], strides = [1, 1]} : vector<4x20xf32> to vector<4x16xf32>
    %c4_147 = arith.constant 4 : index
    %c80_148 = arith.constant 80 : index
    %171 = vector.load %arg9[%c4_147, %c80_148] : memref<100x128xf32, #tpu.memory_space<vmem>>, vector<4x16xf32>
    tpu.vector_store %arg9[%c4_147, %c80_148], %170 {strides = array<i32>} : memref<100x128xf32, #tpu.memory_space<vmem>>, vector<4x16xf32>,
    %172 = vector.extract_strided_slice %167 {offsets = [0, 2], sizes = [4, 16], strides = [1, 1]} : vector<4x20xf32> to vector<4x16xf32>
    %c8_149 = arith.constant 8 : index
    %c80_150 = arith.constant 80 : index
    %173 = vector.load %arg9[%c8_149, %c80_150] : memref<100x128xf32, #tpu.memory_space<vmem>>, vector<4x16xf32>
    tpu.vector_store %arg9[%c8_149, %c80_150], %172 {strides = array<i32>} : memref<100x128xf32, #tpu.memory_space<vmem>>, vector<4x16xf32>,
    %174 = vector.extract_strided_slice %167 {offsets = [0, 3], sizes = [4, 16], strides = [1, 1]} : vector<4x20xf32> to vector<4x16xf32>
    %c12_151 = arith.constant 12 : index
    %c80_152 = arith.constant 80 : index
    %175 = vector.load %arg9[%c12_151, %c80_152] : memref<100x128xf32, #tpu.memory_space<vmem>>, vector<4x16xf32>
    tpu.vector_store %arg9[%c12_151, %c80_152], %174 {strides = array<i32>} : memref<100x128xf32, #tpu.memory_space<vmem>>, vector<4x16xf32>,
    %176 = vector.extract_strided_slice %167 {offsets = [0, 4], sizes = [4, 16], strides = [1, 1]} : vector<4x20xf32> to vector<4x16xf32>
    %c16_153 = arith.constant 16 : index
    %c80_154 = arith.constant 80 : index
    %177 = vector.load %arg9[%c16_153, %c80_154] : memref<100x128xf32, #tpu.memory_space<vmem>>, vector<4x16xf32>
    tpu.vector_store %arg9[%c16_153, %c80_154], %176 {strides = array<i32>} : memref<100x128xf32, #tpu.memory_space<vmem>>, vector<4x16xf32>,
    %178 = vector.extract_strided_slice %167 {offsets = [0, 0], sizes = [4, 16], strides = [1, 1]} : vector<4x20xf32> to vector<4x16xf32>
    %c20_155 = arith.constant 20 : index
    %c64_156 = arith.constant 64 : index
    %179 = vector.load %arg9[%c20_155, %c64_156] : memref<100x128xf32, #tpu.memory_space<vmem>>, vector<4x16xf32>
    tpu.vector_store %arg9[%c20_155, %c64_156], %178 {strides = array<i32>} : memref<100x128xf32, #tpu.memory_space<vmem>>, vector<4x16xf32>,
    %180 = vector.extract_strided_slice %167 {offsets = [0, 1], sizes = [4, 16], strides = [1, 1]} : vector<4x20xf32> to vector<4x16xf32>
    %c24_157 = arith.constant 24 : index
    %c64_158 = arith.constant 64 : index
    %181 = vector.load %arg9[%c24_157, %c64_158] : memref<100x128xf32, #tpu.memory_space<vmem>>, vector<4x16xf32>
    tpu.vector_store %arg9[%c24_157, %c64_158], %180 {strides = array<i32>} : memref<100x128xf32, #tpu.memory_space<vmem>>, vector<4x16xf32>,
    %182 = vector.extract_strided_slice %167 {offsets = [0, 2], sizes = [4, 16], strides = [1, 1]} : vector<4x20xf32> to vector<4x16xf32>
    %c28_159 = arith.constant 28 : index
    %c64_160 = arith.constant 64 : index
    %183 = vector.load %arg9[%c28_159, %c64_160] : memref<100x128xf32, #tpu.memory_space<vmem>>, vector<4x16xf32>
    tpu.vector_store %arg9[%c28_159, %c64_160], %182 {strides = array<i32>} : memref<100x128xf32, #tpu.memory_space<vmem>>, vector<4x16xf32>,
    %184 = vector.extract_strided_slice %167 {offsets = [0, 3], sizes = [4, 16], strides = [1, 1]} : vector<4x20xf32> to vector<4x16xf32>
    %c32_161 = arith.constant 32 : index
    %c64_162 = arith.constant 64 : index
    %185 = vector.load %arg9[%c32_161, %c64_162] : memref<100x128xf32, #tpu.memory_space<vmem>>, vector<4x16xf32>
    tpu.vector_store %arg9[%c32_161, %c64_162], %184 {strides = array<i32>} : memref<100x128xf32, #tpu.memory_space<vmem>>, vector<4x16xf32>,
    %186 = vector.extract_strided_slice %167 {offsets = [0, 4], sizes = [4, 16], strides = [1, 1]} : vector<4x20xf32> to vector<4x16xf32>
    %c36_163 = arith.constant 36 : index
    %c64_164 = arith.constant 64 : index
    %187 = vector.load %arg9[%c36_163, %c64_164] : memref<100x128xf32, #tpu.memory_space<vmem>>, vector<4x16xf32>
    tpu.vector_store %arg9[%c36_163, %c64_164], %186 {strides = array<i32>} : memref<100x128xf32, #tpu.memory_space<vmem>>, vector<4x16xf32>,
    %188 = vector.extract_strided_slice %167 {offsets = [0, 0], sizes = [4, 16], strides = [1, 1]} : vector<4x20xf32> to vector<4x16xf32>
    %c40_165 = arith.constant 40 : index
    %c48_166 = arith.constant 48 : index
    %189 = vector.load %arg9[%c40_165, %c48_166] : memref<100x128xf32, #tpu.memory_space<vmem>>, vector<4x16xf32>
    tpu.vector_store %arg9[%c40_165, %c48_166], %188 {strides = array<i32>} : memref<100x128xf32, #tpu.memory_space<vmem>>, vector<4x16xf32>,
    %190 = vector.extract_strided_slice %167 {offsets = [0, 1], sizes = [4, 16], strides = [1, 1]} : vector<4x20xf32> to vector<4x16xf32>
    %c44_167 = arith.constant 44 : index
    %c48_168 = arith.constant 48 : index
    %191 = vector.load %arg9[%c44_167, %c48_168] : memref<100x128xf32, #tpu.memory_space<vmem>>, vector<4x16xf32>
    tpu.vector_store %arg9[%c44_167, %c48_168], %190 {strides = array<i32>} : memref<100x128xf32, #tpu.memory_space<vmem>>, vector<4x16xf32>,
    %192 = vector.extract_strided_slice %167 {offsets = [0, 2], sizes = [4, 16], strides = [1, 1]} : vector<4x20xf32> to vector<4x16xf32>
    %c48_169 = arith.constant 48 : index
    %c48_170 = arith.constant 48 : index
    %193 = vector.load %arg9[%c48_169, %c48_170] : memref<100x128xf32, #tpu.memory_space<vmem>>, vector<4x16xf32>
    tpu.vector_store %arg9[%c48_169, %c48_170], %192 {strides = array<i32>} : memref<100x128xf32, #tpu.memory_space<vmem>>, vector<4x16xf32>,
    %194 = vector.extract_strided_slice %167 {offsets = [0, 3], sizes = [4, 16], strides = [1, 1]} : vector<4x20xf32> to vector<4x16xf32>
    %c52_171 = arith.constant 52 : index
    %c48_172 = arith.constant 48 : index
    %195 = vector.load %arg9[%c52_171, %c48_172] : memref<100x128xf32, #tpu.memory_space<vmem>>, vector<4x16xf32>
    tpu.vector_store %arg9[%c52_171, %c48_172], %194 {strides = array<i32>} : memref<100x128xf32, #tpu.memory_space<vmem>>, vector<4x16xf32>,
    %196 = vector.extract_strided_slice %167 {offsets = [0, 4], sizes = [4, 16], strides = [1, 1]} : vector<4x20xf32> to vector<4x16xf32>
    %c56_173 = arith.constant 56 : index
    %c48_174 = arith.constant 48 : index
    %197 = vector.load %arg9[%c56_173, %c48_174] : memref<100x128xf32, #tpu.memory_space<vmem>>, vector<4x16xf32>
    tpu.vector_store %arg9[%c56_173, %c48_174], %196 {strides = array<i32>} : memref<100x128xf32, #tpu.memory_space<vmem>>, vector<4x16xf32>,
    %198 = vector.extract_strided_slice %167 {offsets = [0, 0], sizes = [4, 16], strides = [1, 1]} : vector<4x20xf32> to vector<4x16xf32>
    %c60_175 = arith.constant 60 : index
    %c32_176 = arith.constant 32 : index
    %199 = vector.load %arg9[%c60_175, %c32_176] : memref<100x128xf32, #tpu.memory_space<vmem>>, vector<4x16xf32>
    tpu.vector_store %arg9[%c60_175, %c32_176], %198 {strides = array<i32>} : memref<100x128xf32, #tpu.memory_space<vmem>>, vector<4x16xf32>,
    %200 = vector.extract_strided_slice %167 {offsets = [0, 1], sizes = [4, 16], strides = [1, 1]} : vector<4x20xf32> to vector<4x16xf32>
    %c64_177 = arith.constant 64 : index
    %c32_178 = arith.constant 32 : index
    %201 = vector.load %arg9[%c64_177, %c32_178] : memref<100x128xf32, #tpu.memory_space<vmem>>, vector<4x16xf32>
    tpu.vector_store %arg9[%c64_177, %c32_178], %200 {strides = array<i32>} : memref<100x128xf32, #tpu.memory_space<vmem>>, vector<4x16xf32>,
    %202 = vector.extract_strided_slice %167 {offsets = [0, 2], sizes = [4, 16], strides = [1, 1]} : vector<4x20xf32> to vector<4x16xf32>
    %c68_179 = arith.constant 68 : index
    %c32_180 = arith.constant 32 : index
    %203 = vector.load %arg9[%c68_179, %c32_180] : memref<100x128xf32, #tpu.memory_space<vmem>>, vector<4x16xf32>
    tpu.vector_store %arg9[%c68_179, %c32_180], %202 {strides = array<i32>} : memref<100x128xf32, #tpu.memory_space<vmem>>, vector<4x16xf32>,
    %204 = vector.extract_strided_slice %167 {offsets = [0, 3], sizes = [4, 16], strides = [1, 1]} : vector<4x20xf32> to vector<4x16xf32>
    %c72_181 = arith.constant 72 : index
    %c32_182 = arith.constant 32 : index
    %205 = vector.load %arg9[%c72_181, %c32_182] : memref<100x128xf32, #tpu.memory_space<vmem>>, vector<4x16xf32>
    tpu.vector_store %arg9[%c72_181, %c32_182], %204 {strides = array<i32>} : memref<100x128xf32, #tpu.memory_space<vmem>>, vector<4x16xf32>,
    %206 = vector.extract_strided_slice %167 {offsets = [0, 4], sizes = [4, 16], strides = [1, 1]} : vector<4x20xf32> to vector<4x16xf32>
    %c76_183 = arith.constant 76 : index
    %c32_184 = arith.constant 32 : index
    %207 = vector.load %arg9[%c76_183, %c32_184] : memref<100x128xf32, #tpu.memory_space<vmem>>, vector<4x16xf32>
    tpu.vector_store %arg9[%c76_183, %c32_184], %206 {strides = array<i32>} : memref<100x128xf32, #tpu.memory_space<vmem>>, vector<4x16xf32>,
    %208 = vector.extract_strided_slice %167 {offsets = [0, 0], sizes = [4, 16], strides = [1, 1]} : vector<4x20xf32> to vector<4x16xf32>
    %c80_185 = arith.constant 80 : index
    %c16_186 = arith.constant 16 : index
    %209 = vector.load %arg9[%c80_185, %c16_186] : memref<100x128xf32, #tpu.memory_space<vmem>>, vector<4x16xf32>
    tpu.vector_store %arg9[%c80_185, %c16_186], %208 {strides = array<i32>} : memref<100x128xf32, #tpu.memory_space<vmem>>, vector<4x16xf32>,
    %210 = vector.extract_strided_slice %167 {offsets = [0, 1], sizes = [4, 16], strides = [1, 1]} : vector<4x20xf32> to vector<4x16xf32>
    %c84_187 = arith.constant 84 : index
    %c16_188 = arith.constant 16 : index
    %211 = vector.load %arg9[%c84_187, %c16_188] : memref<100x128xf32, #tpu.memory_space<vmem>>, vector<4x16xf32>
    tpu.vector_store %arg9[%c84_187, %c16_188], %210 {strides = array<i32>} : memref<100x128xf32, #tpu.memory_space<vmem>>, vector<4x16xf32>,
    %212 = vector.extract_strided_slice %167 {offsets = [0, 2], sizes = [4, 16], strides = [1, 1]} : vector<4x20xf32> to vector<4x16xf32>
    %c88_189 = arith.constant 88 : index
    %c16_190 = arith.constant 16 : index
    %213 = vector.load %arg9[%c88_189, %c16_190] : memref<100x128xf32, #tpu.memory_space<vmem>>, vector<4x16xf32>
    tpu.vector_store %arg9[%c88_189, %c16_190], %212 {strides = array<i32>} : memref<100x128xf32, #tpu.memory_space<vmem>>, vector<4x16xf32>,
    %214 = vector.extract_strided_slice %167 {offsets = [0, 3], sizes = [4, 16], strides = [1, 1]} : vector<4x20xf32> to vector<4x16xf32>
    %c92_191 = arith.constant 92 : index
    %c16_192 = arith.constant 16 : index
    %215 = vector.load %arg9[%c92_191, %c16_192] : memref<100x128xf32, #tpu.memory_space<vmem>>, vector<4x16xf32>
    tpu.vector_store %arg9[%c92_191, %c16_192], %214 {strides = array<i32>} : memref<100x128xf32, #tpu.memory_space<vmem>>, vector<4x16xf32>,
    %216 = vector.extract_strided_slice %167 {offsets = [0, 4], sizes = [4, 16], strides = [1, 1]} : vector<4x20xf32> to vector<4x16xf32>
    %c96_193 = arith.constant 96 : index
    %c16_194 = arith.constant 16 : index
    %217 = vector.load %arg9[%c96_193, %c16_194] : memref<100x128xf32, #tpu.memory_space<vmem>>, vector<4x16xf32>
    tpu.vector_store %arg9[%c96_193, %c16_194], %216 {strides = array<i32>} : memref<100x128xf32, #tpu.memory_space<vmem>>, vector<4x16xf32>,
    %c0_195 = arith.constant 0 : index
    %c0_196 = arith.constant 0 : index
    %c6 = arith.constant 6 : index
    %c0_197 = arith.constant 0 : index
    %218 = vector.load %arg2[%c0_195, %c0_196, %c6, %c0_197] : memref<1x4x8x20xbf16, #tpu.memory_space<vmem>>, vector<1x4x1x20xbf16>
    %219 = vector.shape_cast %218 : vector<1x4x1x20xbf16> to vector<4x20xbf16>
    %220 = arith.extf %219 : vector<4x20xbf16> to vector<4x20xf32>
    %221 = vector.extract_strided_slice %220 {offsets = [0, 0], sizes = [4, 16], strides = [1, 1]} : vector<4x20xf32> to vector<4x16xf32>
    %c0_198 = arith.constant 0 : index
    %c96_199 = arith.constant 96 : index
    %222 = vector.load %arg9[%c0_198, %c96_199] : memref<100x128xf32, #tpu.memory_space<vmem>>, vector<4x16xf32>
    tpu.vector_store %arg9[%c0_198, %c96_199], %221 {strides = array<i32>} : memref<100x128xf32, #tpu.memory_space<vmem>>, vector<4x16xf32>,
    %223 = vector.extract_strided_slice %220 {offsets = [0, 1], sizes = [4, 16], strides = [1, 1]} : vector<4x20xf32> to vector<4x16xf32>
    %c4_200 = arith.constant 4 : index
    %c96_201 = arith.constant 96 : index
    %224 = vector.load %arg9[%c4_200, %c96_201] : memref<100x128xf32, #tpu.memory_space<vmem>>, vector<4x16xf32>
    tpu.vector_store %arg9[%c4_200, %c96_201], %223 {strides = array<i32>} : memref<100x128xf32, #tpu.memory_space<vmem>>, vector<4x16xf32>,
    %225 = vector.extract_strided_slice %220 {offsets = [0, 2], sizes = [4, 16], strides = [1, 1]} : vector<4x20xf32> to vector<4x16xf32>
    %c8_202 = arith.constant 8 : index
    %c96_203 = arith.constant 96 : index
    %226 = vector.load %arg9[%c8_202, %c96_203] : memref<100x128xf32, #tpu.memory_space<vmem>>, vector<4x16xf32>
    tpu.vector_store %arg9[%c8_202, %c96_203], %225 {strides = array<i32>} : memref<100x128xf32, #tpu.memory_space<vmem>>, vector<4x16xf32>,
    %227 = vector.extract_strided_slice %220 {offsets = [0, 3], sizes = [4, 16], strides = [1, 1]} : vector<4x20xf32> to vector<4x16xf32>
    %c12_204 = arith.constant 12 : index
    %c96_205 = arith.constant 96 : index
    %228 = vector.load %arg9[%c12_204, %c96_205] : memref<100x128xf32, #tpu.memory_space<vmem>>, vector<4x16xf32>
    tpu.vector_store %arg9[%c12_204, %c96_205], %227 {strides = array<i32>} : memref<100x128xf32, #tpu.memory_space<vmem>>, vector<4x16xf32>,
    %229 = vector.extract_strided_slice %220 {offsets = [0, 4], sizes = [4, 16], strides = [1, 1]} : vector<4x20xf32> to vector<4x16xf32>
    %c16_206 = arith.constant 16 : index
    %c96_207 = arith.constant 96 : index
    %230 = vector.load %arg9[%c16_206, %c96_207] : memref<100x128xf32, #tpu.memory_space<vmem>>, vector<4x16xf32>
    tpu.vector_store %arg9[%c16_206, %c96_207], %229 {strides = array<i32>} : memref<100x128xf32, #tpu.memory_space<vmem>>, vector<4x16xf32>,
    %231 = vector.extract_strided_slice %220 {offsets = [0, 0], sizes = [4, 16], strides = [1, 1]} : vector<4x20xf32> to vector<4x16xf32>
    %c20_208 = arith.constant 20 : index
    %c80_209 = arith.constant 80 : index
    %232 = vector.load %arg9[%c20_208, %c80_209] : memref<100x128xf32, #tpu.memory_space<vmem>>, vector<4x16xf32>
    tpu.vector_store %arg9[%c20_208, %c80_209], %231 {strides = array<i32>} : memref<100x128xf32, #tpu.memory_space<vmem>>, vector<4x16xf32>,
    %233 = vector.extract_strided_slice %220 {offsets = [0, 1], sizes = [4, 16], strides = [1, 1]} : vector<4x20xf32> to vector<4x16xf32>
    %c24_210 = arith.constant 24 : index
    %c80_211 = arith.constant 80 : index
    %234 = vector.load %arg9[%c24_210, %c80_211] : memref<100x128xf32, #tpu.memory_space<vmem>>, vector<4x16xf32>
    tpu.vector_store %arg9[%c24_210, %c80_211], %233 {strides = array<i32>} : memref<100x128xf32, #tpu.memory_space<vmem>>, vector<4x16xf32>,
    %235 = vector.extract_strided_slice %220 {offsets = [0, 2], sizes = [4, 16], strides = [1, 1]} : vector<4x20xf32> to vector<4x16xf32>
    %c28_212 = arith.constant 28 : index
    %c80_213 = arith.constant 80 : index
    %236 = vector.load %arg9[%c28_212, %c80_213] : memref<100x128xf32, #tpu.memory_space<vmem>>, vector<4x16xf32>
    tpu.vector_store %arg9[%c28_212, %c80_213], %235 {strides = array<i32>} : memref<100x128xf32, #tpu.memory_space<vmem>>, vector<4x16xf32>,
    %237 = vector.extract_strided_slice %220 {offsets = [0, 3], sizes = [4, 16], strides = [1, 1]} : vector<4x20xf32> to vector<4x16xf32>
    %c32_214 = arith.constant 32 : index
    %c80_215 = arith.constant 80 : index
    %238 = vector.load %arg9[%c32_214, %c80_215] : memref<100x128xf32, #tpu.memory_space<vmem>>, vector<4x16xf32>
    tpu.vector_store %arg9[%c32_214, %c80_215], %237 {strides = array<i32>} : memref<100x128xf32, #tpu.memory_space<vmem>>, vector<4x16xf32>,
    %239 = vector.extract_strided_slice %220 {offsets = [0, 4], sizes = [4, 16], strides = [1, 1]} : vector<4x20xf32> to vector<4x16xf32>
    %c36_216 = arith.constant 36 : index
    %c80_217 = arith.constant 80 : index
    %240 = vector.load %arg9[%c36_216, %c80_217] : memref<100x128xf32, #tpu.memory_space<vmem>>, vector<4x16xf32>
    tpu.vector_store %arg9[%c36_216, %c80_217], %239 {strides = array<i32>} : memref<100x128xf32, #tpu.memory_space<vmem>>, vector<4x16xf32>,
    %241 = vector.extract_strided_slice %220 {offsets = [0, 0], sizes = [4, 16], strides = [1, 1]} : vector<4x20xf32> to vector<4x16xf32>
    %c40_218 = arith.constant 40 : index
    %c64_219 = arith.constant 64 : index
    %242 = vector.load %arg9[%c40_218, %c64_219] : memref<100x128xf32, #tpu.memory_space<vmem>>, vector<4x16xf32>
    tpu.vector_store %arg9[%c40_218, %c64_219], %241 {strides = array<i32>} : memref<100x128xf32, #tpu.memory_space<vmem>>, vector<4x16xf32>,
    %243 = vector.extract_strided_slice %220 {offsets = [0, 1], sizes = [4, 16], strides = [1, 1]} : vector<4x20xf32> to vector<4x16xf32>
    %c44_220 = arith.constant 44 : index
    %c64_221 = arith.constant 64 : index
    %244 = vector.load %arg9[%c44_220, %c64_221] : memref<100x128xf32, #tpu.memory_space<vmem>>, vector<4x16xf32>
    tpu.vector_store %arg9[%c44_220, %c64_221], %243 {strides = array<i32>} : memref<100x128xf32, #tpu.memory_space<vmem>>, vector<4x16xf32>,
    %245 = vector.extract_strided_slice %220 {offsets = [0, 2], sizes = [4, 16], strides = [1, 1]} : vector<4x20xf32> to vector<4x16xf32>
    %c48_222 = arith.constant 48 : index
    %c64_223 = arith.constant 64 : index
    %246 = vector.load %arg9[%c48_222, %c64_223] : memref<100x128xf32, #tpu.memory_space<vmem>>, vector<4x16xf32>
    tpu.vector_store %arg9[%c48_222, %c64_223], %245 {strides = array<i32>} : memref<100x128xf32, #tpu.memory_space<vmem>>, vector<4x16xf32>,
    %247 = vector.extract_strided_slice %220 {offsets = [0, 3], sizes = [4, 16], strides = [1, 1]} : vector<4x20xf32> to vector<4x16xf32>
    %c52_224 = arith.constant 52 : index
    %c64_225 = arith.constant 64 : index
    %248 = vector.load %arg9[%c52_224, %c64_225] : memref<100x128xf32, #tpu.memory_space<vmem>>, vector<4x16xf32>
    tpu.vector_store %arg9[%c52_224, %c64_225], %247 {strides = array<i32>} : memref<100x128xf32, #tpu.memory_space<vmem>>, vector<4x16xf32>,
    %249 = vector.extract_strided_slice %220 {offsets = [0, 4], sizes = [4, 16], strides = [1, 1]} : vector<4x20xf32> to vector<4x16xf32>
    %c56_226 = arith.constant 56 : index
    %c64_227 = arith.constant 64 : index
    %250 = vector.load %arg9[%c56_226, %c64_227] : memref<100x128xf32, #tpu.memory_space<vmem>>, vector<4x16xf32>
    tpu.vector_store %arg9[%c56_226, %c64_227], %249 {strides = array<i32>} : memref<100x128xf32, #tpu.memory_space<vmem>>, vector<4x16xf32>,
    %251 = vector.extract_strided_slice %220 {offsets = [0, 0], sizes = [4, 16], strides = [1, 1]} : vector<4x20xf32> to vector<4x16xf32>
    %c60_228 = arith.constant 60 : index
    %c48_229 = arith.constant 48 : index
    %252 = vector.load %arg9[%c60_228, %c48_229] : memref<100x128xf32, #tpu.memory_space<vmem>>, vector<4x16xf32>
    tpu.vector_store %arg9[%c60_228, %c48_229], %251 {strides = array<i32>} : memref<100x128xf32, #tpu.memory_space<vmem>>, vector<4x16xf32>,
    %253 = vector.extract_strided_slice %220 {offsets = [0, 1], sizes = [4, 16], strides = [1, 1]} : vector<4x20xf32> to vector<4x16xf32>
    %c64_230 = arith.constant 64 : index
    %c48_231 = arith.constant 48 : index
    %254 = vector.load %arg9[%c64_230, %c48_231] : memref<100x128xf32, #tpu.memory_space<vmem>>, vector<4x16xf32>
    tpu.vector_store %arg9[%c64_230, %c48_231], %253 {strides = array<i32>} : memref<100x128xf32, #tpu.memory_space<vmem>>, vector<4x16xf32>,
    %255 = vector.extract_strided_slice %220 {offsets = [0, 2], sizes = [4, 16], strides = [1, 1]} : vector<4x20xf32> to vector<4x16xf32>
    %c68_232 = arith.constant 68 : index
    %c48_233 = arith.constant 48 : index
    %256 = vector.load %arg9[%c68_232, %c48_233] : memref<100x128xf32, #tpu.memory_space<vmem>>, vector<4x16xf32>
    tpu.vector_store %arg9[%c68_232, %c48_233], %255 {strides = array<i32>} : memref<100x128xf32, #tpu.memory_space<vmem>>, vector<4x16xf32>,
    %257 = vector.extract_strided_slice %220 {offsets = [0, 3], sizes = [4, 16], strides = [1, 1]} : vector<4x20xf32> to vector<4x16xf32>
    %c72_234 = arith.constant 72 : index
    %c48_235 = arith.constant 48 : index
    %258 = vector.load %arg9[%c72_234, %c48_235] : memref<100x128xf32, #tpu.memory_space<vmem>>, vector<4x16xf32>
    tpu.vector_store %arg9[%c72_234, %c48_235], %257 {strides = array<i32>} : memref<100x128xf32, #tpu.memory_space<vmem>>, vector<4x16xf32>,
    %259 = vector.extract_strided_slice %220 {offsets = [0, 4], sizes = [4, 16], strides = [1, 1]} : vector<4x20xf32> to vector<4x16xf32>
    %c76_236 = arith.constant 76 : index
    %c48_237 = arith.constant 48 : index
    %260 = vector.load %arg9[%c76_236, %c48_237] : memref<100x128xf32, #tpu.memory_space<vmem>>, vector<4x16xf32>
    tpu.vector_store %arg9[%c76_236, %c48_237], %259 {strides = array<i32>} : memref<100x128xf32, #tpu.memory_space<vmem>>, vector<4x16xf32>,
    %261 = vector.extract_strided_slice %220 {offsets = [0, 0], sizes = [4, 16], strides = [1, 1]} : vector<4x20xf32> to vector<4x16xf32>
    %c80_238 = arith.constant 80 : index
    %c32_239 = arith.constant 32 : index
    %262 = vector.load %arg9[%c80_238, %c32_239] : memref<100x128xf32, #tpu.memory_space<vmem>>, vector<4x16xf32>
    tpu.vector_store %arg9[%c80_238, %c32_239], %261 {strides = array<i32>} : memref<100x128xf32, #tpu.memory_space<vmem>>, vector<4x16xf32>,
    %263 = vector.extract_strided_slice %220 {offsets = [0, 1], sizes = [4, 16], strides = [1, 1]} : vector<4x20xf32> to vector<4x16xf32>
    %c84_240 = arith.constant 84 : index
    %c32_241 = arith.constant 32 : index
    %264 = vector.load %arg9[%c84_240, %c32_241] : memref<100x128xf32, #tpu.memory_space<vmem>>, vector<4x16xf32>
    tpu.vector_store %arg9[%c84_240, %c32_241], %263 {strides = array<i32>} : memref<100x128xf32, #tpu.memory_space<vmem>>, vector<4x16xf32>,
    %265 = vector.extract_strided_slice %220 {offsets = [0, 2], sizes = [4, 16], strides = [1, 1]} : vector<4x20xf32> to vector<4x16xf32>
    %c88_242 = arith.constant 88 : index
    %c32_243 = arith.constant 32 : index
    %266 = vector.load %arg9[%c88_242, %c32_243] : memref<100x128xf32, #tpu.memory_space<vmem>>, vector<4x16xf32>
    tpu.vector_store %arg9[%c88_242, %c32_243], %265 {strides = array<i32>} : memref<100x128xf32, #tpu.memory_space<vmem>>, vector<4x16xf32>,
    %267 = vector.extract_strided_slice %220 {offsets = [0, 3], sizes = [4, 16], strides = [1, 1]} : vector<4x20xf32> to vector<4x16xf32>
    %c92_244 = arith.constant 92 : index
    %c32_245 = arith.constant 32 : index
    %268 = vector.load %arg9[%c92_244, %c32_245] : memref<100x128xf32, #tpu.memory_space<vmem>>, vector<4x16xf32>
    tpu.vector_store %arg9[%c92_244, %c32_245], %267 {strides = array<i32>} : memref<100x128xf32, #tpu.memory_space<vmem>>, vector<4x16xf32>,
    %269 = vector.extract_strided_slice %220 {offsets = [0, 4], sizes = [4, 16], strides = [1, 1]} : vector<4x20xf32> to vector<4x16xf32>
    %c96_246 = arith.constant 96 : index
    %c32_247 = arith.constant 32 : index
    %270 = vector.load %arg9[%c96_246, %c32_247] : memref<100x128xf32, #tpu.memory_space<vmem>>, vector<4x16xf32>
    tpu.vector_store %arg9[%c96_246, %c32_247], %269 {strides = array<i32>} : memref<100x128xf32, #tpu.memory_space<vmem>>, vector<4x16xf32>,
    %c0_248 = arith.constant 0 : index
    %c0_249 = arith.constant 0 : index
    %c7 = arith.constant 7 : index
    %c0_250 = arith.constant 0 : index
    %271 = vector.load %arg2[%c0_248, %c0_249, %c7, %c0_250] : memref<1x4x8x20xbf16, #tpu.memory_space<vmem>>, vector<1x4x1x20xbf16>
    %272 = vector.shape_cast %271 : vector<1x4x1x20xbf16> to vector<4x20xbf16>
    %273 = arith.extf %272 : vector<4x20xbf16> to vector<4x20xf32>
    %274 = vector.extract_strided_slice %273 {offsets = [0, 0], sizes = [4, 16], strides = [1, 1]} : vector<4x20xf32> to vector<4x16xf32>
    %c0_251 = arith.constant 0 : index
    %c112 = arith.constant 112 : index
    %275 = vector.load %arg9[%c0_251, %c112] : memref<100x128xf32, #tpu.memory_space<vmem>>, vector<4x16xf32>
    tpu.vector_store %arg9[%c0_251, %c112], %274 {strides = array<i32>} : memref<100x128xf32, #tpu.memory_space<vmem>>, vector<4x16xf32>,
    %276 = vector.extract_strided_slice %273 {offsets = [0, 1], sizes = [4, 16], strides = [1, 1]} : vector<4x20xf32> to vector<4x16xf32>
    %c4_252 = arith.constant 4 : index
    %c112_253 = arith.constant 112 : index
    %277 = vector.load %arg9[%c4_252, %c112_253] : memref<100x128xf32, #tpu.memory_space<vmem>>, vector<4x16xf32>
    tpu.vector_store %arg9[%c4_252, %c112_253], %276 {strides = array<i32>} : memref<100x128xf32, #tpu.memory_space<vmem>>, vector<4x16xf32>,
    %278 = vector.extract_strided_slice %273 {offsets = [0, 2], sizes = [4, 16], strides = [1, 1]} : vector<4x20xf32> to vector<4x16xf32>
    %c8_254 = arith.constant 8 : index
    %c112_255 = arith.constant 112 : index
    %279 = vector.load %arg9[%c8_254, %c112_255] : memref<100x128xf32, #tpu.memory_space<vmem>>, vector<4x16xf32>
    tpu.vector_store %arg9[%c8_254, %c112_255], %278 {strides = array<i32>} : memref<100x128xf32, #tpu.memory_space<vmem>>, vector<4x16xf32>,
    %280 = vector.extract_strided_slice %273 {offsets = [0, 3], sizes = [4, 16], strides = [1, 1]} : vector<4x20xf32> to vector<4x16xf32>
    %c12_256 = arith.constant 12 : index
    %c112_257 = arith.constant 112 : index
    %281 = vector.load %arg9[%c12_256, %c112_257] : memref<100x128xf32, #tpu.memory_space<vmem>>, vector<4x16xf32>
    tpu.vector_store %arg9[%c12_256, %c112_257], %280 {strides = array<i32>} : memref<100x128xf32, #tpu.memory_space<vmem>>, vector<4x16xf32>,
    %282 = vector.extract_strided_slice %273 {offsets = [0, 4], sizes = [4, 16], strides = [1, 1]} : vector<4x20xf32> to vector<4x16xf32>
    %c16_258 = arith.constant 16 : index
    %c112_259 = arith.constant 112 : index
    %283 = vector.load %arg9[%c16_258, %c112_259] : memref<100x128xf32, #tpu.memory_space<vmem>>, vector<4x16xf32>
    tpu.vector_store %arg9[%c16_258, %c112_259], %282 {strides = array<i32>} : memref<100x128xf32, #tpu.memory_space<vmem>>, vector<4x16xf32>,
    %284 = vector.extract_strided_slice %273 {offsets = [0, 0], sizes = [4, 16], strides = [1, 1]} : vector<4x20xf32> to vector<4x16xf32>
    %c20_260 = arith.constant 20 : index
    %c96_261 = arith.constant 96 : index
    %285 = vector.load %arg9[%c20_260, %c96_261] : memref<100x128xf32, #tpu.memory_space<vmem>>, vector<4x16xf32>
    tpu.vector_store %arg9[%c20_260, %c96_261], %284 {strides = array<i32>} : memref<100x128xf32, #tpu.memory_space<vmem>>, vector<4x16xf32>,
    %286 = vector.extract_strided_slice %273 {offsets = [0, 1], sizes = [4, 16], strides = [1, 1]} : vector<4x20xf32> to vector<4x16xf32>
    %c24_262 = arith.constant 24 : index
    %c96_263 = arith.constant 96 : index
    %287 = vector.load %arg9[%c24_262, %c96_263] : memref<100x128xf32, #tpu.memory_space<vmem>>, vector<4x16xf32>
    tpu.vector_store %arg9[%c24_262, %c96_263], %286 {strides = array<i32>} : memref<100x128xf32, #tpu.memory_space<vmem>>, vector<4x16xf32>,
    %288 = vector.extract_strided_slice %273 {offsets = [0, 2], sizes = [4, 16], strides = [1, 1]} : vector<4x20xf32> to vector<4x16xf32>
    %c28_264 = arith.constant 28 : index
    %c96_265 = arith.constant 96 : index
    %289 = vector.load %arg9[%c28_264, %c96_265] : memref<100x128xf32, #tpu.memory_space<vmem>>, vector<4x16xf32>
    tpu.vector_store %arg9[%c28_264, %c96_265], %288 {strides = array<i32>} : memref<100x128xf32, #tpu.memory_space<vmem>>, vector<4x16xf32>,
    %290 = vector.extract_strided_slice %273 {offsets = [0, 3], sizes = [4, 16], strides = [1, 1]} : vector<4x20xf32> to vector<4x16xf32>
    %c32_266 = arith.constant 32 : index
    %c96_267 = arith.constant 96 : index
    %291 = vector.load %arg9[%c32_266, %c96_267] : memref<100x128xf32, #tpu.memory_space<vmem>>, vector<4x16xf32>
    tpu.vector_store %arg9[%c32_266, %c96_267], %290 {strides = array<i32>} : memref<100x128xf32, #tpu.memory_space<vmem>>, vector<4x16xf32>,
    %292 = vector.extract_strided_slice %273 {offsets = [0, 4], sizes = [4, 16], strides = [1, 1]} : vector<4x20xf32> to vector<4x16xf32>
    %c36_268 = arith.constant 36 : index
    %c96_269 = arith.constant 96 : index
    %293 = vector.load %arg9[%c36_268, %c96_269] : memref<100x128xf32, #tpu.memory_space<vmem>>, vector<4x16xf32>
    tpu.vector_store %arg9[%c36_268, %c96_269], %292 {strides = array<i32>} : memref<100x128xf32, #tpu.memory_space<vmem>>, vector<4x16xf32>,
    %294 = vector.extract_strided_slice %273 {offsets = [0, 0], sizes = [4, 16], strides = [1, 1]} : vector<4x20xf32> to vector<4x16xf32>
    %c40_270 = arith.constant 40 : index
    %c80_271 = arith.constant 80 : index
    %295 = vector.load %arg9[%c40_270, %c80_271] : memref<100x128xf32, #tpu.memory_space<vmem>>, vector<4x16xf32>
    tpu.vector_store %arg9[%c40_270, %c80_271], %294 {strides = array<i32>} : memref<100x128xf32, #tpu.memory_space<vmem>>, vector<4x16xf32>,
    %296 = vector.extract_strided_slice %273 {offsets = [0, 1], sizes = [4, 16], strides = [1, 1]} : vector<4x20xf32> to vector<4x16xf32>
    %c44_272 = arith.constant 44 : index
    %c80_273 = arith.constant 80 : index
    %297 = vector.load %arg9[%c44_272, %c80_273] : memref<100x128xf32, #tpu.memory_space<vmem>>, vector<4x16xf32>
    tpu.vector_store %arg9[%c44_272, %c80_273], %296 {strides = array<i32>} : memref<100x128xf32, #tpu.memory_space<vmem>>, vector<4x16xf32>,
    %298 = vector.extract_strided_slice %273 {offsets = [0, 2], sizes = [4, 16], strides = [1, 1]} : vector<4x20xf32> to vector<4x16xf32>
    %c48_274 = arith.constant 48 : index
    %c80_275 = arith.constant 80 : index
    %299 = vector.load %arg9[%c48_274, %c80_275] : memref<100x128xf32, #tpu.memory_space<vmem>>, vector<4x16xf32>
    tpu.vector_store %arg9[%c48_274, %c80_275], %298 {strides = array<i32>} : memref<100x128xf32, #tpu.memory_space<vmem>>, vector<4x16xf32>,
    %300 = vector.extract_strided_slice %273 {offsets = [0, 3], sizes = [4, 16], strides = [1, 1]} : vector<4x20xf32> to vector<4x16xf32>
    %c52_276 = arith.constant 52 : index
    %c80_277 = arith.constant 80 : index
    %301 = vector.load %arg9[%c52_276, %c80_277] : memref<100x128xf32, #tpu.memory_space<vmem>>, vector<4x16xf32>
    tpu.vector_store %arg9[%c52_276, %c80_277], %300 {strides = array<i32>} : memref<100x128xf32, #tpu.memory_space<vmem>>, vector<4x16xf32>,
    %302 = vector.extract_strided_slice %273 {offsets = [0, 4], sizes = [4, 16], strides = [1, 1]} : vector<4x20xf32> to vector<4x16xf32>
    %c56_278 = arith.constant 56 : index
    %c80_279 = arith.constant 80 : index
    %303 = vector.load %arg9[%c56_278, %c80_279] : memref<100x128xf32, #tpu.memory_space<vmem>>, vector<4x16xf32>
    tpu.vector_store %arg9[%c56_278, %c80_279], %302 {strides = array<i32>} : memref<100x128xf32, #tpu.memory_space<vmem>>, vector<4x16xf32>,
    %304 = vector.extract_strided_slice %273 {offsets = [0, 0], sizes = [4, 16], strides = [1, 1]} : vector<4x20xf32> to vector<4x16xf32>
    %c60_280 = arith.constant 60 : index
    %c64_281 = arith.constant 64 : index
    %305 = vector.load %arg9[%c60_280, %c64_281] : memref<100x128xf32, #tpu.memory_space<vmem>>, vector<4x16xf32>
    tpu.vector_store %arg9[%c60_280, %c64_281], %304 {strides = array<i32>} : memref<100x128xf32, #tpu.memory_space<vmem>>, vector<4x16xf32>,
    %306 = vector.extract_strided_slice %273 {offsets = [0, 1], sizes = [4, 16], strides = [1, 1]} : vector<4x20xf32> to vector<4x16xf32>
    %c64_282 = arith.constant 64 : index
    %c64_283 = arith.constant 64 : index
    %307 = vector.load %arg9[%c64_282, %c64_283] : memref<100x128xf32, #tpu.memory_space<vmem>>, vector<4x16xf32>
    tpu.vector_store %arg9[%c64_282, %c64_283], %306 {strides = array<i32>} : memref<100x128xf32, #tpu.memory_space<vmem>>, vector<4x16xf32>,
    %308 = vector.extract_strided_slice %273 {offsets = [0, 2], sizes = [4, 16], strides = [1, 1]} : vector<4x20xf32> to vector<4x16xf32>
    %c68_284 = arith.constant 68 : index
    %c64_285 = arith.constant 64 : index
    %309 = vector.load %arg9[%c68_284, %c64_285] : memref<100x128xf32, #tpu.memory_space<vmem>>, vector<4x16xf32>
    tpu.vector_store %arg9[%c68_284, %c64_285], %308 {strides = array<i32>} : memref<100x128xf32, #tpu.memory_space<vmem>>, vector<4x16xf32>,
    %310 = vector.extract_strided_slice %273 {offsets = [0, 3], sizes = [4, 16], strides = [1, 1]} : vector<4x20xf32> to vector<4x16xf32>
    %c72_286 = arith.constant 72 : index
    %c64_287 = arith.constant 64 : index
    %311 = vector.load %arg9[%c72_286, %c64_287] : memref<100x128xf32, #tpu.memory_space<vmem>>, vector<4x16xf32>
    tpu.vector_store %arg9[%c72_286, %c64_287], %310 {strides = array<i32>} : memref<100x128xf32, #tpu.memory_space<vmem>>, vector<4x16xf32>,
    %312 = vector.extract_strided_slice %273 {offsets = [0, 4], sizes = [4, 16], strides = [1, 1]} : vector<4x20xf32> to vector<4x16xf32>
    %c76_288 = arith.constant 76 : index
    %c64_289 = arith.constant 64 : index
    %313 = vector.load %arg9[%c76_288, %c64_289] : memref<100x128xf32, #tpu.memory_space<vmem>>, vector<4x16xf32>
    tpu.vector_store %arg9[%c76_288, %c64_289], %312 {strides = array<i32>} : memref<100x128xf32, #tpu.memory_space<vmem>>, vector<4x16xf32>,
    %314 = vector.extract_strided_slice %273 {offsets = [0, 0], sizes = [4, 16], strides = [1, 1]} : vector<4x20xf32> to vector<4x16xf32>
    %c80_290 = arith.constant 80 : index
    %c48_291 = arith.constant 48 : index
    %315 = vector.load %arg9[%c80_290, %c48_291] : memref<100x128xf32, #tpu.memory_space<vmem>>, vector<4x16xf32>
    tpu.vector_store %arg9[%c80_290, %c48_291], %314 {strides = array<i32>} : memref<100x128xf32, #tpu.memory_space<vmem>>, vector<4x16xf32>,
    %316 = vector.extract_strided_slice %273 {offsets = [0, 1], sizes = [4, 16], strides = [1, 1]} : vector<4x20xf32> to vector<4x16xf32>
    %c84_292 = arith.constant 84 : index
    %c48_293 = arith.constant 48 : index
    %317 = vector.load %arg9[%c84_292, %c48_293] : memref<100x128xf32, #tpu.memory_space<vmem>>, vector<4x16xf32>
    tpu.vector_store %arg9[%c84_292, %c48_293], %316 {strides = array<i32>} : memref<100x128xf32, #tpu.memory_space<vmem>>, vector<4x16xf32>,
    %318 = vector.extract_strided_slice %273 {offsets = [0, 2], sizes = [4, 16], strides = [1, 1]} : vector<4x20xf32> to vector<4x16xf32>
    %c88_294 = arith.constant 88 : index
    %c48_295 = arith.constant 48 : index
    %319 = vector.load %arg9[%c88_294, %c48_295] : memref<100x128xf32, #tpu.memory_space<vmem>>, vector<4x16xf32>
    tpu.vector_store %arg9[%c88_294, %c48_295], %318 {strides = array<i32>} : memref<100x128xf32, #tpu.memory_space<vmem>>, vector<4x16xf32>,
    %320 = vector.extract_strided_slice %273 {offsets = [0, 3], sizes = [4, 16], strides = [1, 1]} : vector<4x20xf32> to vector<4x16xf32>
    %c92_296 = arith.constant 92 : index
    %c48_297 = arith.constant 48 : index
    %321 = vector.load %arg9[%c92_296, %c48_297] : memref<100x128xf32, #tpu.memory_space<vmem>>, vector<4x16xf32>
    tpu.vector_store %arg9[%c92_296, %c48_297], %320 {strides = array<i32>} : memref<100x128xf32, #tpu.memory_space<vmem>>, vector<4x16xf32>,
    %322 = vector.extract_strided_slice %273 {offsets = [0, 4], sizes = [4, 16], strides = [1, 1]} : vector<4x20xf32> to vector<4x16xf32>
    %c96_298 = arith.constant 96 : index
    %c48_299 = arith.constant 48 : index
    %323 = vector.load %arg9[%c96_298, %c48_299] : memref<100x128xf32, #tpu.memory_space<vmem>>, vector<4x16xf32>
    tpu.vector_store %arg9[%c96_298, %c48_299], %322 {strides = array<i32>} : memref<100x128xf32, #tpu.memory_space<vmem>>, vector<4x16xf32>,
    %c0_300 = arith.constant 0 : index
    %c0_301 = arith.constant 0 : index
    %c0_302 = arith.constant 0 : index
    %c0_303 = arith.constant 0 : index
    %324 = vector.load %arg3[%c0_300, %c0_301, %c0_302, %c0_303] : memref<1x4x8x20xbf16, #tpu.memory_space<vmem>>, vector<1x4x1x20xbf16>
    %325 = vector.shape_cast %324 : vector<1x4x1x20xbf16> to vector<4x20xbf16>
    %326 = arith.extf %325 : vector<4x20xbf16> to vector<4x20xf32>
    %327 = vector.extract_strided_slice %326 {offsets = [0, 0], sizes = [4, 16], strides = [1, 1]} : vector<4x20xf32> to vector<4x16xf32>
    %c20_304 = arith.constant 20 : index
    %c112_305 = arith.constant 112 : index
    %328 = vector.load %arg9[%c20_304, %c112_305] : memref<100x128xf32, #tpu.memory_space<vmem>>, vector<4x16xf32>
    tpu.vector_store %arg9[%c20_304, %c112_305], %327 {strides = array<i32>} : memref<100x128xf32, #tpu.memory_space<vmem>>, vector<4x16xf32>,
    %329 = vector.extract_strided_slice %326 {offsets = [0, 1], sizes = [4, 16], strides = [1, 1]} : vector<4x20xf32> to vector<4x16xf32>
    %c24_306 = arith.constant 24 : index
    %c112_307 = arith.constant 112 : index
    %330 = vector.load %arg9[%c24_306, %c112_307] : memref<100x128xf32, #tpu.memory_space<vmem>>, vector<4x16xf32>
    tpu.vector_store %arg9[%c24_306, %c112_307], %329 {strides = array<i32>} : memref<100x128xf32, #tpu.memory_space<vmem>>, vector<4x16xf32>,
    %331 = vector.extract_strided_slice %326 {offsets = [0, 2], sizes = [4, 16], strides = [1, 1]} : vector<4x20xf32> to vector<4x16xf32>
    %c28_308 = arith.constant 28 : index
    %c112_309 = arith.constant 112 : index
    %332 = vector.load %arg9[%c28_308, %c112_309] : memref<100x128xf32, #tpu.memory_space<vmem>>, vector<4x16xf32>
    tpu.vector_store %arg9[%c28_308, %c112_309], %331 {strides = array<i32>} : memref<100x128xf32, #tpu.memory_space<vmem>>, vector<4x16xf32>,
    %333 = vector.extract_strided_slice %326 {offsets = [0, 3], sizes = [4, 16], strides = [1, 1]} : vector<4x20xf32> to vector<4x16xf32>
    %c32_310 = arith.constant 32 : index
    %c112_311 = arith.constant 112 : index
    %334 = vector.load %arg9[%c32_310, %c112_311] : memref<100x128xf32, #tpu.memory_space<vmem>>, vector<4x16xf32>
    tpu.vector_store %arg9[%c32_310, %c112_311], %333 {strides = array<i32>} : memref<100x128xf32, #tpu.memory_space<vmem>>, vector<4x16xf32>,
    %335 = vector.extract_strided_slice %326 {offsets = [0, 4], sizes = [4, 16], strides = [1, 1]} : vector<4x20xf32> to vector<4x16xf32>
    %c36_312 = arith.constant 36 : index
    %c112_313 = arith.constant 112 : index
    %336 = vector.load %arg9[%c36_312, %c112_313] : memref<100x128xf32, #tpu.memory_space<vmem>>, vector<4x16xf32>
    tpu.vector_store %arg9[%c36_312, %c112_313], %335 {strides = array<i32>} : memref<100x128xf32, #tpu.memory_space<vmem>>, vector<4x16xf32>,
    %337 = vector.extract_strided_slice %326 {offsets = [0, 0], sizes = [4, 16], strides = [1, 1]} : vector<4x20xf32> to vector<4x16xf32>
    %c40_314 = arith.constant 40 : index
    %c96_315 = arith.constant 96 : index
    %338 = vector.load %arg9[%c40_314, %c96_315] : memref<100x128xf32, #tpu.memory_space<vmem>>, vector<4x16xf32>
    tpu.vector_store %arg9[%c40_314, %c96_315], %337 {strides = array<i32>} : memref<100x128xf32, #tpu.memory_space<vmem>>, vector<4x16xf32>,
    %339 = vector.extract_strided_slice %326 {offsets = [0, 1], sizes = [4, 16], strides = [1, 1]} : vector<4x20xf32> to vector<4x16xf32>
    %c44_316 = arith.constant 44 : index
    %c96_317 = arith.constant 96 : index
    %340 = vector.load %arg9[%c44_316, %c96_317] : memref<100x128xf32, #tpu.memory_space<vmem>>, vector<4x16xf32>
    tpu.vector_store %arg9[%c44_316, %c96_317], %339 {strides = array<i32>} : memref<100x128xf32, #tpu.memory_space<vmem>>, vector<4x16xf32>,
    %341 = vector.extract_strided_slice %326 {offsets = [0, 2], sizes = [4, 16], strides = [1, 1]} : vector<4x20xf32> to vector<4x16xf32>
    %c48_318 = arith.constant 48 : index
    %c96_319 = arith.constant 96 : index
    %342 = vector.load %arg9[%c48_318, %c96_319] : memref<100x128xf32, #tpu.memory_space<vmem>>, vector<4x16xf32>
    tpu.vector_store %arg9[%c48_318, %c96_319], %341 {strides = array<i32>} : memref<100x128xf32, #tpu.memory_space<vmem>>, vector<4x16xf32>,
    %343 = vector.extract_strided_slice %326 {offsets = [0, 3], sizes = [4, 16], strides = [1, 1]} : vector<4x20xf32> to vector<4x16xf32>
    %c52_320 = arith.constant 52 : index
    %c96_321 = arith.constant 96 : index
    %344 = vector.load %arg9[%c52_320, %c96_321] : memref<100x128xf32, #tpu.memory_space<vmem>>, vector<4x16xf32>
    tpu.vector_store %arg9[%c52_320, %c96_321], %343 {strides = array<i32>} : memref<100x128xf32, #tpu.memory_space<vmem>>, vector<4x16xf32>,
    %345 = vector.extract_strided_slice %326 {offsets = [0, 4], sizes = [4, 16], strides = [1, 1]} : vector<4x20xf32> to vector<4x16xf32>
    %c56_322 = arith.constant 56 : index
    %c96_323 = arith.constant 96 : index
    %346 = vector.load %arg9[%c56_322, %c96_323] : memref<100x128xf32, #tpu.memory_space<vmem>>, vector<4x16xf32>
    tpu.vector_store %arg9[%c56_322, %c96_323], %345 {strides = array<i32>} : memref<100x128xf32, #tpu.memory_space<vmem>>, vector<4x16xf32>,
    %347 = vector.extract_strided_slice %326 {offsets = [0, 0], sizes = [4, 16], strides = [1, 1]} : vector<4x20xf32> to vector<4x16xf32>
    %c60_324 = arith.constant 60 : index
    %c80_325 = arith.constant 80 : index
    %348 = vector.load %arg9[%c60_324, %c80_325] : memref<100x128xf32, #tpu.memory_space<vmem>>, vector<4x16xf32>
    tpu.vector_store %arg9[%c60_324, %c80_325], %347 {strides = array<i32>} : memref<100x128xf32, #tpu.memory_space<vmem>>, vector<4x16xf32>,
    %349 = vector.extract_strided_slice %326 {offsets = [0, 1], sizes = [4, 16], strides = [1, 1]} : vector<4x20xf32> to vector<4x16xf32>
    %c64_326 = arith.constant 64 : index
    %c80_327 = arith.constant 80 : index
    %350 = vector.load %arg9[%c64_326, %c80_327] : memref<100x128xf32, #tpu.memory_space<vmem>>, vector<4x16xf32>
    tpu.vector_store %arg9[%c64_326, %c80_327], %349 {strides = array<i32>} : memref<100x128xf32, #tpu.memory_space<vmem>>, vector<4x16xf32>,
    %351 = vector.extract_strided_slice %326 {offsets = [0, 2], sizes = [4, 16], strides = [1, 1]} : vector<4x20xf32> to vector<4x16xf32>
    %c68_328 = arith.constant 68 : index
    %c80_329 = arith.constant 80 : index
    %352 = vector.load %arg9[%c68_328, %c80_329] : memref<100x128xf32, #tpu.memory_space<vmem>>, vector<4x16xf32>
    tpu.vector_store %arg9[%c68_328, %c80_329], %351 {strides = array<i32>} : memref<100x128xf32, #tpu.memory_space<vmem>>, vector<4x16xf32>,
    %353 = vector.extract_strided_slice %326 {offsets = [0, 3], sizes = [4, 16], strides = [1, 1]} : vector<4x20xf32> to vector<4x16xf32>
    %c72_330 = arith.constant 72 : index
    %c80_331 = arith.constant 80 : index
    %354 = vector.load %arg9[%c72_330, %c80_331] : memref<100x128xf32, #tpu.memory_space<vmem>>, vector<4x16xf32>
    tpu.vector_store %arg9[%c72_330, %c80_331], %353 {strides = array<i32>} : memref<100x128xf32, #tpu.memory_space<vmem>>, vector<4x16xf32>,
    %355 = vector.extract_strided_slice %326 {offsets = [0, 4], sizes = [4, 16], strides = [1, 1]} : vector<4x20xf32> to vector<4x16xf32>
    %c76_332 = arith.constant 76 : index
    %c80_333 = arith.constant 80 : index
    %356 = vector.load %arg9[%c76_332, %c80_333] : memref<100x128xf32, #tpu.memory_space<vmem>>, vector<4x16xf32>
    tpu.vector_store %arg9[%c76_332, %c80_333], %355 {strides = array<i32>} : memref<100x128xf32, #tpu.memory_space<vmem>>, vector<4x16xf32>,
    %357 = vector.extract_strided_slice %326 {offsets = [0, 0], sizes = [4, 16], strides = [1, 1]} : vector<4x20xf32> to vector<4x16xf32>
    %c80_334 = arith.constant 80 : index
    %c64_335 = arith.constant 64 : index
    %358 = vector.load %arg9[%c80_334, %c64_335] : memref<100x128xf32, #tpu.memory_space<vmem>>, vector<4x16xf32>
    tpu.vector_store %arg9[%c80_334, %c64_335], %357 {strides = array<i32>} : memref<100x128xf32, #tpu.memory_space<vmem>>, vector<4x16xf32>,
    %359 = vector.extract_strided_slice %326 {offsets = [0, 1], sizes = [4, 16], strides = [1, 1]} : vector<4x20xf32> to vector<4x16xf32>
    %c84_336 = arith.constant 84 : index
    %c64_337 = arith.constant 64 : index
    %360 = vector.load %arg9[%c84_336, %c64_337] : memref<100x128xf32, #tpu.memory_space<vmem>>, vector<4x16xf32>
    tpu.vector_store %arg9[%c84_336, %c64_337], %359 {strides = array<i32>} : memref<100x128xf32, #tpu.memory_space<vmem>>, vector<4x16xf32>,
    %361 = vector.extract_strided_slice %326 {offsets = [0, 2], sizes = [4, 16], strides = [1, 1]} : vector<4x20xf32> to vector<4x16xf32>
    %c88_338 = arith.constant 88 : index
    %c64_339 = arith.constant 64 : index
    %362 = vector.load %arg9[%c88_338, %c64_339] : memref<100x128xf32, #tpu.memory_space<vmem>>, vector<4x16xf32>
    tpu.vector_store %arg9[%c88_338, %c64_339], %361 {strides = array<i32>} : memref<100x128xf32, #tpu.memory_space<vmem>>, vector<4x16xf32>,
    %363 = vector.extract_strided_slice %326 {offsets = [0, 3], sizes = [4, 16], strides = [1, 1]} : vector<4x20xf32> to vector<4x16xf32>
    %c92_340 = arith.constant 92 : index
    %c64_341 = arith.constant 64 : index
    %364 = vector.load %arg9[%c92_340, %c64_341] : memref<100x128xf32, #tpu.memory_space<vmem>>, vector<4x16xf32>
    tpu.vector_store %arg9[%c92_340, %c64_341], %363 {strides = array<i32>} : memref<100x128xf32, #tpu.memory_space<vmem>>, vector<4x16xf32>,
    %365 = vector.extract_strided_slice %326 {offsets = [0, 4], sizes = [4, 16], strides = [1, 1]} : vector<4x20xf32> to vector<4x16xf32>
    %c96_342 = arith.constant 96 : index
    %c64_343 = arith.constant 64 : index
    %366 = vector.load %arg9[%c96_342, %c64_343] : memref<100x128xf32, #tpu.memory_space<vmem>>, vector<4x16xf32>
    tpu.vector_store %arg9[%c96_342, %c64_343], %365 {strides = array<i32>} : memref<100x128xf32, #tpu.memory_space<vmem>>, vector<4x16xf32>,
    %c0_344 = arith.constant 0 : index
    %c0_345 = arith.constant 0 : index
    %c1_346 = arith.constant 1 : index
    %c0_347 = arith.constant 0 : index
    %367 = vector.load %arg3[%c0_344, %c0_345, %c1_346, %c0_347] : memref<1x4x8x20xbf16, #tpu.memory_space<vmem>>, vector<1x4x1x20xbf16>
    %368 = vector.shape_cast %367 : vector<1x4x1x20xbf16> to vector<4x20xbf16>
    %369 = arith.extf %368 : vector<4x20xbf16> to vector<4x20xf32>
    %370 = vector.extract_strided_slice %369 {offsets = [0, 0], sizes = [4, 16], strides = [1, 1]} : vector<4x20xf32> to vector<4x16xf32>
    %c40_348 = arith.constant 40 : index
    %c112_349 = arith.constant 112 : index
    %371 = vector.load %arg9[%c40_348, %c112_349] : memref<100x128xf32, #tpu.memory_space<vmem>>, vector<4x16xf32>
    tpu.vector_store %arg9[%c40_348, %c112_349], %370 {strides = array<i32>} : memref<100x128xf32, #tpu.memory_space<vmem>>, vector<4x16xf32>,
    %372 = vector.extract_strided_slice %369 {offsets = [0, 1], sizes = [4, 16], strides = [1, 1]} : vector<4x20xf32> to vector<4x16xf32>
    %c44_350 = arith.constant 44 : index
    %c112_351 = arith.constant 112 : index
    %373 = vector.load %arg9[%c44_350, %c112_351] : memref<100x128xf32, #tpu.memory_space<vmem>>, vector<4x16xf32>
    tpu.vector_store %arg9[%c44_350, %c112_351], %372 {strides = array<i32>} : memref<100x128xf32, #tpu.memory_space<vmem>>, vector<4x16xf32>,
    %374 = vector.extract_strided_slice %369 {offsets = [0, 2], sizes = [4, 16], strides = [1, 1]} : vector<4x20xf32> to vector<4x16xf32>
    %c48_352 = arith.constant 48 : index
    %c112_353 = arith.constant 112 : index
    %375 = vector.load %arg9[%c48_352, %c112_353] : memref<100x128xf32, #tpu.memory_space<vmem>>, vector<4x16xf32>
    tpu.vector_store %arg9[%c48_352, %c112_353], %374 {strides = array<i32>} : memref<100x128xf32, #tpu.memory_space<vmem>>, vector<4x16xf32>,
    %376 = vector.extract_strided_slice %369 {offsets = [0, 3], sizes = [4, 16], strides = [1, 1]} : vector<4x20xf32> to vector<4x16xf32>
    %c52_354 = arith.constant 52 : index
    %c112_355 = arith.constant 112 : index
    %377 = vector.load %arg9[%c52_354, %c112_355] : memref<100x128xf32, #tpu.memory_space<vmem>>, vector<4x16xf32>
    tpu.vector_store %arg9[%c52_354, %c112_355], %376 {strides = array<i32>} : memref<100x128xf32, #tpu.memory_space<vmem>>, vector<4x16xf32>,
    %378 = vector.extract_strided_slice %369 {offsets = [0, 4], sizes = [4, 16], strides = [1, 1]} : vector<4x20xf32> to vector<4x16xf32>
    %c56_356 = arith.constant 56 : index
    %c112_357 = arith.constant 112 : index
    %379 = vector.load %arg9[%c56_356, %c112_357] : memref<100x128xf32, #tpu.memory_space<vmem>>, vector<4x16xf32>
    tpu.vector_store %arg9[%c56_356, %c112_357], %378 {strides = array<i32>} : memref<100x128xf32, #tpu.memory_space<vmem>>, vector<4x16xf32>,
    %380 = vector.extract_strided_slice %369 {offsets = [0, 0], sizes = [4, 16], strides = [1, 1]} : vector<4x20xf32> to vector<4x16xf32>
    %c60_358 = arith.constant 60 : index
    %c96_359 = arith.constant 96 : index
    %381 = vector.load %arg9[%c60_358, %c96_359] : memref<100x128xf32, #tpu.memory_space<vmem>>, vector<4x16xf32>
    tpu.vector_store %arg9[%c60_358, %c96_359], %380 {strides = array<i32>} : memref<100x128xf32, #tpu.memory_space<vmem>>, vector<4x16xf32>,
    %382 = vector.extract_strided_slice %369 {offsets = [0, 1], sizes = [4, 16], strides = [1, 1]} : vector<4x20xf32> to vector<4x16xf32>
    %c64_360 = arith.constant 64 : index
    %c96_361 = arith.constant 96 : index
    %383 = vector.load %arg9[%c64_360, %c96_361] : memref<100x128xf32, #tpu.memory_space<vmem>>, vector<4x16xf32>
    tpu.vector_store %arg9[%c64_360, %c96_361], %382 {strides = array<i32>} : memref<100x128xf32, #tpu.memory_space<vmem>>, vector<4x16xf32>,
    %384 = vector.extract_strided_slice %369 {offsets = [0, 2], sizes = [4, 16], strides = [1, 1]} : vector<4x20xf32> to vector<4x16xf32>
    %c68_362 = arith.constant 68 : index
    %c96_363 = arith.constant 96 : index
    %385 = vector.load %arg9[%c68_362, %c96_363] : memref<100x128xf32, #tpu.memory_space<vmem>>, vector<4x16xf32>
    tpu.vector_store %arg9[%c68_362, %c96_363], %384 {strides = array<i32>} : memref<100x128xf32, #tpu.memory_space<vmem>>, vector<4x16xf32>,
    %386 = vector.extract_strided_slice %369 {offsets = [0, 3], sizes = [4, 16], strides = [1, 1]} : vector<4x20xf32> to vector<4x16xf32>
    %c72_364 = arith.constant 72 : index
    %c96_365 = arith.constant 96 : index
    %387 = vector.load %arg9[%c72_364, %c96_365] : memref<100x128xf32, #tpu.memory_space<vmem>>, vector<4x16xf32>
    tpu.vector_store %arg9[%c72_364, %c96_365], %386 {strides = array<i32>} : memref<100x128xf32, #tpu.memory_space<vmem>>, vector<4x16xf32>,
    %388 = vector.extract_strided_slice %369 {offsets = [0, 4], sizes = [4, 16], strides = [1, 1]} : vector<4x20xf32> to vector<4x16xf32>
    %c76_366 = arith.constant 76 : index
    %c96_367 = arith.constant 96 : index
    %389 = vector.load %arg9[%c76_366, %c96_367] : memref<100x128xf32, #tpu.memory_space<vmem>>, vector<4x16xf32>
    tpu.vector_store %arg9[%c76_366, %c96_367], %388 {strides = array<i32>} : memref<100x128xf32, #tpu.memory_space<vmem>>, vector<4x16xf32>,
    %390 = vector.extract_strided_slice %369 {offsets = [0, 0], sizes = [4, 16], strides = [1, 1]} : vector<4x20xf32> to vector<4x16xf32>
    %c80_368 = arith.constant 80 : index
    %c80_369 = arith.constant 80 : index
    %391 = vector.load %arg9[%c80_368, %c80_369] : memref<100x128xf32, #tpu.memory_space<vmem>>, vector<4x16xf32>
    tpu.vector_store %arg9[%c80_368, %c80_369], %390 {strides = array<i32>} : memref<100x128xf32, #tpu.memory_space<vmem>>, vector<4x16xf32>,
    %392 = vector.extract_strided_slice %369 {offsets = [0, 1], sizes = [4, 16], strides = [1, 1]} : vector<4x20xf32> to vector<4x16xf32>
    %c84_370 = arith.constant 84 : index
    %c80_371 = arith.constant 80 : index
    %393 = vector.load %arg9[%c84_370, %c80_371] : memref<100x128xf32, #tpu.memory_space<vmem>>, vector<4x16xf32>
    tpu.vector_store %arg9[%c84_370, %c80_371], %392 {strides = array<i32>} : memref<100x128xf32, #tpu.memory_space<vmem>>, vector<4x16xf32>,
    %394 = vector.extract_strided_slice %369 {offsets = [0, 2], sizes = [4, 16], strides = [1, 1]} : vector<4x20xf32> to vector<4x16xf32>
    %c88_372 = arith.constant 88 : index
    %c80_373 = arith.constant 80 : index
    %395 = vector.load %arg9[%c88_372, %c80_373] : memref<100x128xf32, #tpu.memory_space<vmem>>, vector<4x16xf32>
    tpu.vector_store %arg9[%c88_372, %c80_373], %394 {strides = array<i32>} : memref<100x128xf32, #tpu.memory_space<vmem>>, vector<4x16xf32>,
    %396 = vector.extract_strided_slice %369 {offsets = [0, 3], sizes = [4, 16], strides = [1, 1]} : vector<4x20xf32> to vector<4x16xf32>
    %c92_374 = arith.constant 92 : index
    %c80_375 = arith.constant 80 : index
    %397 = vector.load %arg9[%c92_374, %c80_375] : memref<100x128xf32, #tpu.memory_space<vmem>>, vector<4x16xf32>
    tpu.vector_store %arg9[%c92_374, %c80_375], %396 {strides = array<i32>} : memref<100x128xf32, #tpu.memory_space<vmem>>, vector<4x16xf32>,
    %398 = vector.extract_strided_slice %369 {offsets = [0, 4], sizes = [4, 16], strides = [1, 1]} : vector<4x20xf32> to vector<4x16xf32>
    %c96_376 = arith.constant 96 : index
    %c80_377 = arith.constant 80 : index
    %399 = vector.load %arg9[%c96_376, %c80_377] : memref<100x128xf32, #tpu.memory_space<vmem>>, vector<4x16xf32>
    tpu.vector_store %arg9[%c96_376, %c80_377], %398 {strides = array<i32>} : memref<100x128xf32, #tpu.memory_space<vmem>>, vector<4x16xf32>,
    %c0_378 = arith.constant 0 : index
    %c0_379 = arith.constant 0 : index
    %c2_380 = arith.constant 2 : index
    %c0_381 = arith.constant 0 : index
    %400 = vector.load %arg3[%c0_378, %c0_379, %c2_380, %c0_381] : memref<1x4x8x20xbf16, #tpu.memory_space<vmem>>, vector<1x4x1x20xbf16>
    %401 = vector.shape_cast %400 : vector<1x4x1x20xbf16> to vector<4x20xbf16>
    %402 = arith.extf %401 : vector<4x20xbf16> to vector<4x20xf32>
    %403 = vector.extract_strided_slice %402 {offsets = [0, 0], sizes = [4, 16], strides = [1, 1]} : vector<4x20xf32> to vector<4x16xf32>
    %c60_382 = arith.constant 60 : index
    %c112_383 = arith.constant 112 : index
    %404 = vector.load %arg9[%c60_382, %c112_383] : memref<100x128xf32, #tpu.memory_space<vmem>>, vector<4x16xf32>
    tpu.vector_store %arg9[%c60_382, %c112_383], %403 {strides = array<i32>} : memref<100x128xf32, #tpu.memory_space<vmem>>, vector<4x16xf32>,
    %405 = vector.extract_strided_slice %402 {offsets = [0, 1], sizes = [4, 16], strides = [1, 1]} : vector<4x20xf32> to vector<4x16xf32>
    %c64_384 = arith.constant 64 : index
    %c112_385 = arith.constant 112 : index
    %406 = vector.load %arg9[%c64_384, %c112_385] : memref<100x128xf32, #tpu.memory_space<vmem>>, vector<4x16xf32>
    tpu.vector_store %arg9[%c64_384, %c112_385], %405 {strides = array<i32>} : memref<100x128xf32, #tpu.memory_space<vmem>>, vector<4x16xf32>,
    %407 = vector.extract_strided_slice %402 {offsets = [0, 2], sizes = [4, 16], strides = [1, 1]} : vector<4x20xf32> to vector<4x16xf32>
    %c68_386 = arith.constant 68 : index
    %c112_387 = arith.constant 112 : index
    %408 = vector.load %arg9[%c68_386, %c112_387] : memref<100x128xf32, #tpu.memory_space<vmem>>, vector<4x16xf32>
    tpu.vector_store %arg9[%c68_386, %c112_387], %407 {strides = array<i32>} : memref<100x128xf32, #tpu.memory_space<vmem>>, vector<4x16xf32>,
    %409 = vector.extract_strided_slice %402 {offsets = [0, 3], sizes = [4, 16], strides = [1, 1]} : vector<4x20xf32> to vector<4x16xf32>
    %c72_388 = arith.constant 72 : index
    %c112_389 = arith.constant 112 : index
    %410 = vector.load %arg9[%c72_388, %c112_389] : memref<100x128xf32, #tpu.memory_space<vmem>>, vector<4x16xf32>
    tpu.vector_store %arg9[%c72_388, %c112_389], %409 {strides = array<i32>} : memref<100x128xf32, #tpu.memory_space<vmem>>, vector<4x16xf32>,
    %411 = vector.extract_strided_slice %402 {offsets = [0, 4], sizes = [4, 16], strides = [1, 1]} : vector<4x20xf32> to vector<4x16xf32>
    %c76_390 = arith.constant 76 : index
    %c112_391 = arith.constant 112 : index
    %412 = vector.load %arg9[%c76_390, %c112_391] : memref<100x128xf32, #tpu.memory_space<vmem>>, vector<4x16xf32>
    tpu.vector_store %arg9[%c76_390, %c112_391], %411 {strides = array<i32>} : memref<100x128xf32, #tpu.memory_space<vmem>>, vector<4x16xf32>,
    %413 = vector.extract_strided_slice %402 {offsets = [0, 0], sizes = [4, 16], strides = [1, 1]} : vector<4x20xf32> to vector<4x16xf32>
    %c80_392 = arith.constant 80 : index
    %c96_393 = arith.constant 96 : index
    %414 = vector.load %arg9[%c80_392, %c96_393] : memref<100x128xf32, #tpu.memory_space<vmem>>, vector<4x16xf32>
    tpu.vector_store %arg9[%c80_392, %c96_393], %413 {strides = array<i32>} : memref<100x128xf32, #tpu.memory_space<vmem>>, vector<4x16xf32>,
    %415 = vector.extract_strided_slice %402 {offsets = [0, 1], sizes = [4, 16], strides = [1, 1]} : vector<4x20xf32> to vector<4x16xf32>
    %c84_394 = arith.constant 84 : index
    %c96_395 = arith.constant 96 : index
    %416 = vector.load %arg9[%c84_394, %c96_395] : memref<100x128xf32, #tpu.memory_space<vmem>>, vector<4x16xf32>
    tpu.vector_store %arg9[%c84_394, %c96_395], %415 {strides = array<i32>} : memref<100x128xf32, #tpu.memory_space<vmem>>, vector<4x16xf32>,
    %417 = vector.extract_strided_slice %402 {offsets = [0, 2], sizes = [4, 16], strides = [1, 1]} : vector<4x20xf32> to vector<4x16xf32>
    %c88_396 = arith.constant 88 : index
    %c96_397 = arith.constant 96 : index
    %418 = vector.load %arg9[%c88_396, %c96_397] : memref<100x128xf32, #tpu.memory_space<vmem>>, vector<4x16xf32>
    tpu.vector_store %arg9[%c88_396, %c96_397], %417 {strides = array<i32>} : memref<100x128xf32, #tpu.memory_space<vmem>>, vector<4x16xf32>,
    %419 = vector.extract_strided_slice %402 {offsets = [0, 3], sizes = [4, 16], strides = [1, 1]} : vector<4x20xf32> to vector<4x16xf32>
    %c92_398 = arith.constant 92 : index
    %c96_399 = arith.constant 96 : index
    %420 = vector.load %arg9[%c92_398, %c96_399] : memref<100x128xf32, #tpu.memory_space<vmem>>, vector<4x16xf32>
    tpu.vector_store %arg9[%c92_398, %c96_399], %419 {strides = array<i32>} : memref<100x128xf32, #tpu.memory_space<vmem>>, vector<4x16xf32>,
    %421 = vector.extract_strided_slice %402 {offsets = [0, 4], sizes = [4, 16], strides = [1, 1]} : vector<4x20xf32> to vector<4x16xf32>
    %c96_400 = arith.constant 96 : index
    %c96_401 = arith.constant 96 : index
    %422 = vector.load %arg9[%c96_400, %c96_401] : memref<100x128xf32, #tpu.memory_space<vmem>>, vector<4x16xf32>
    tpu.vector_store %arg9[%c96_400, %c96_401], %421 {strides = array<i32>} : memref<100x128xf32, #tpu.memory_space<vmem>>, vector<4x16xf32>,
    %c0_402 = arith.constant 0 : index
    %c0_403 = arith.constant 0 : index
    %c3_404 = arith.constant 3 : index
    %c0_405 = arith.constant 0 : index
    %423 = vector.load %arg3[%c0_402, %c0_403, %c3_404, %c0_405] : memref<1x4x8x20xbf16, #tpu.memory_space<vmem>>, vector<1x4x1x20xbf16>
    %424 = vector.shape_cast %423 : vector<1x4x1x20xbf16> to vector<4x20xbf16>
    %425 = arith.extf %424 : vector<4x20xbf16> to vector<4x20xf32>
    %426 = vector.extract_strided_slice %425 {offsets = [0, 0], sizes = [4, 16], strides = [1, 1]} : vector<4x20xf32> to vector<4x16xf32>
    %c80_406 = arith.constant 80 : index
    %c112_407 = arith.constant 112 : index
    %427 = vector.load %arg9[%c80_406, %c112_407] : memref<100x128xf32, #tpu.memory_space<vmem>>, vector<4x16xf32>
    tpu.vector_store %arg9[%c80_406, %c112_407], %426 {strides = array<i32>} : memref<100x128xf32, #tpu.memory_space<vmem>>, vector<4x16xf32>,
    %428 = vector.extract_strided_slice %425 {offsets = [0, 1], sizes = [4, 16], strides = [1, 1]} : vector<4x20xf32> to vector<4x16xf32>
    %c84_408 = arith.constant 84 : index
    %c112_409 = arith.constant 112 : index
    %429 = vector.load %arg9[%c84_408, %c112_409] : memref<100x128xf32, #tpu.memory_space<vmem>>, vector<4x16xf32>
    tpu.vector_store %arg9[%c84_408, %c112_409], %428 {strides = array<i32>} : memref<100x128xf32, #tpu.memory_space<vmem>>, vector<4x16xf32>,
    %430 = vector.extract_strided_slice %425 {offsets = [0, 2], sizes = [4, 16], strides = [1, 1]} : vector<4x20xf32> to vector<4x16xf32>
    %c88_410 = arith.constant 88 : index
    %c112_411 = arith.constant 112 : index
    %431 = vector.load %arg9[%c88_410, %c112_411] : memref<100x128xf32, #tpu.memory_space<vmem>>, vector<4x16xf32>
    tpu.vector_store %arg9[%c88_410, %c112_411], %430 {strides = array<i32>} : memref<100x128xf32, #tpu.memory_space<vmem>>, vector<4x16xf32>,
    %432 = vector.extract_strided_slice %425 {offsets = [0, 3], sizes = [4, 16], strides = [1, 1]} : vector<4x20xf32> to vector<4x16xf32>
    %c92_412 = arith.constant 92 : index
    %c112_413 = arith.constant 112 : index
    %433 = vector.load %arg9[%c92_412, %c112_413] : memref<100x128xf32, #tpu.memory_space<vmem>>, vector<4x16xf32>
    tpu.vector_store %arg9[%c92_412, %c112_413], %432 {strides = array<i32>} : memref<100x128xf32, #tpu.memory_space<vmem>>, vector<4x16xf32>,
    %434 = vector.extract_strided_slice %425 {offsets = [0, 4], sizes = [4, 16], strides = [1, 1]} : vector<4x20xf32> to vector<4x16xf32>
    %c96_414 = arith.constant 96 : index
    %c112_415 = arith.constant 112 : index
    %435 = vector.load %arg9[%c96_414, %c112_415] : memref<100x128xf32, #tpu.memory_space<vmem>>, vector<4x16xf32>
    tpu.vector_store %arg9[%c96_414, %c112_415], %434 {strides = array<i32>} : memref<100x128xf32, #tpu.memory_space<vmem>>, vector<4x16xf32>,
    %c0_416 = arith.constant 0 : index
    %c0_417 = arith.constant 0 : index
    %436 = vector.load %arg4[%c0_416, %c0_417] : memref<16x100xbf16, #tpu.memory_space<vmem>>, vector<16x100xbf16>
    %c0_418 = arith.constant 0 : index
    %c0_419 = arith.constant 0 : index
    %437 = vector.load %arg9[%c0_418, %c0_419] : memref<100x128xf32, #tpu.memory_space<vmem>>, vector<100x128xf32>
    %438 = arith.truncf %437 : vector<100x128xf32> to vector<100x128xbf16>
    %cst = arith.constant dense<0.000000e+00> : vector<16x128xf32>
    %439 = tpu.matmul %436, %438, %cst {dimension_numbers = #tpu.dot_dimension_numbers<[1], [0], [0], [1], [0, 0, 1, 1], [], []>} : vector<16x100xbf16>, vector<100x128xbf16>, vector<16x128xf32> -> vector<16x128xf32>
    %440 = vector.extract_strided_slice %439 {offsets = [0, 0], sizes = [8, 128], strides = [1, 1]} : vector<16x128xf32> to vector<8x128xf32>
    %c0_420 = arith.constant 0 : index
    %c0_421 = arith.constant 0 : index
    %441 = vector.load %arg6[%c0_420, %c0_421] : memref<8x1xf32, #tpu.memory_space<vmem>>, vector<8x1xf32>
    %442 = vector.broadcast %441 : vector<8x1xf32> to vector<8x128xf32>
    %443 = arith.addf %440, %442 : vector<8x128xf32>
    %cst_422 = arith.constant 0.000000e+00 : f32
    %444 = vector.broadcast %cst_422 : f32 to vector<8x128xf32>
    %445 = arith.maximumf %443, %444 : vector<8x128xf32>
    %446 = vector.extract_strided_slice %439 {offsets = [8, 0], sizes = [8, 128], strides = [1, 1]} : vector<16x128xf32> to vector<8x128xf32>
    %c0_423 = arith.constant 0 : index
    %c0_424 = arith.constant 0 : index
    %447 = vector.load %arg5[%c0_423, %c0_424] : memref<8x8xf32, #tpu.memory_space<vmem>>, vector<8x8xf32>
    %cst_425 = arith.constant dense<0.000000e+00> : vector<8x128xf32>
    %448 = tpu.matmul %447, %445, %cst_425 {dimension_numbers = #tpu.dot_dimension_numbers<[1], [0], [0], [1], [0, 0, 1, 1], [], []>} : vector<8x8xf32>, vector<8x128xf32>, vector<8x128xf32> -> vector<8x128xf32>
    %449 = arith.addf %448, %446 : vector<8x128xf32>
    %c0_426 = arith.constant 0 : index
    %c0_427 = arith.constant 0 : index
    %450 = vector.load %arg7[%c0_426, %c0_427] : memref<8x1xf32, #tpu.memory_space<vmem>>, vector<8x1xf32>
    %451 = vector.broadcast %450 : vector<8x1xf32> to vector<8x128xf32>
    %452 = arith.addf %449, %451 : vector<8x128xf32>
    %cst_428 = arith.constant 0.000000e+00 : f32
    %453 = vector.broadcast %cst_428 : f32 to vector<8x128xf32>
    %454 = arith.maximumf %452, %453 : vector<8x128xf32>
    %c0_429 = arith.constant 0 : index
    %c0_430 = arith.constant 0 : index
    %c0_431 = arith.constant 0 : index
    %455 = vector.load %arg8[%c0_429, %c0_430, %c0_431] : memref<1x8x128xf32, #tpu.memory_space<vmem>>, vector<1x8x128xf32>
    %456 = vector.shape_cast %455 : vector<1x8x128xf32> to vector<8x128xf32>
    %457 = vector.shape_cast %454 : vector<8x128xf32> to vector<1x8x128xf32>
    tpu.vector_store %arg8[%c0_429, %c0_430, %c0_431], %457 {strides = array<i32>} : memref<1x8x128xf32, #tpu.memory_space<vmem>>, vector<1x8x128xf32>,
    return
  }
  func.func @transform_0(%arg0: i32, %arg1: i32) -> (i32, i32, i32, i32) {
    %c0_i32 = arith.constant 0 : i32
    %c0_i32_0 = arith.constant 0 : i32
    %c0_i32_1 = arith.constant 0 : i32
    return %arg0, %c0_i32, %arg1, %c0_i32_0 : i32, i32, i32, i32
  }
  func.func @transform_1(%arg0: i32, %arg1: i32) -> (i32, i32, i32, i32) {
    %c1_i32 = arith.constant 1 : i32
    %0 = arith.addi %arg1, %c1_i32 : i32
    %c1_i32_0 = arith.constant 1 : i32
    %1 = arith.muli %0, %c1_i32_0 : i32
    %c0_i32 = arith.constant 0 : i32
    %c0_i32_1 = arith.constant 0 : i32
    %c0_i32_2 = arith.constant 0 : i32
    return %arg0, %c0_i32, %1, %c0_i32_1 : i32, i32, i32, i32
  }
  func.func @transform_2(%arg0: i32, %arg1: i32) -> (i32, i32) {
    %c0_i32 = arith.constant 0 : i32
    %c0_i32_0 = arith.constant 0 : i32
    %c0_i32_1 = arith.constant 0 : i32
    return %c0_i32, %c0_i32_0 : i32, i32
  }
  func.func @transform_3(%arg0: i32, %arg1: i32) -> (i32, i32) {
    %c0_i32 = arith.constant 0 : i32
    %c0_i32_0 = arith.constant 0 : i32
    %c0_i32_1 = arith.constant 0 : i32
    return %c0_i32, %c0_i32_0 : i32, i32
  }
  func.func @transform_4(%arg0: i32, %arg1: i32) -> (i32, i32) {
    %c0_i32 = arith.constant 0 : i32
    %c0_i32_0 = arith.constant 0 : i32
    %c0_i32_1 = arith.constant 0 : i32
    return %c0_i32, %c0_i32_0 : i32, i32
  }
  func.func @transform_5(%arg0: i32, %arg1: i32) -> (i32, i32) {
    %c0_i32 = arith.constant 0 : i32
    %c0_i32_0 = arith.constant 0 : i32
    %c0_i32_1 = arith.constant 0 : i32
    return %c0_i32, %c0_i32_0 : i32, i32
  }
  func.func @transform_6(%arg0: i32, %arg1: i32) -> (i32, i32, i32) {
    %c0_i32 = arith.constant 0 : i32
    %c0_i32_0 = arith.constant 0 : i32
    return %arg0, %c0_i32, %arg1 : i32, i32, i32
  }
}

</mosaic_0001>

<llo_original>
// kernel: msrb_block.1
$region0: #{msrb_block.1}
  #allocation0 [shape = 'u32[]', space=smem, size = 0x4, offset = 0x4, fixed_abs, tag = 'smem constant byte address 0x4 - core index']
  #allocation1 [shape = 'u32[144,128]{1,0:T(1,128)}', space=vmem, size = 0x12000, scoped, tag = 'internal scratch']
  #allocation2 [shape = 'f32[100,128]{1,0:T(8,128)}', space=vmem, size = 0xd000, scoped, tag = 'scratch operand']
  %s0 = inlined_call_operand.vmem [shape: bf16[2,4,24,20], index: 0, kind: input, shape index: {}, may-alias: {0,1}]
  %s1 = inlined_call_operand.vmem [shape: bf16[2,4,24,20], index: 1, kind: input, shape index: {}, may-alias: {0,1}]
  %s2 = inlined_call_operand.vmem [shape: bf16[16,100], index: 2, kind: input, shape index: {}]
  %s3 = inlined_call_operand.vmem [shape: f32[8,8], index: 3, kind: input, shape index: {}]
  %s4 = inlined_call_operand.vmem [shape: f32[8,1], index: 4, kind: input, shape index: {}]
  %s5 = inlined_call_operand.vmem [shape: f32[8,1], index: 5, kind: input, shape index: {}]
  %s6 = inlined_call_operand.vmem [shape: f32[2,8,256], index: 6, kind: output, shape index: {}]
  %s7 = sld [smem:[#allocation0]]
  $region139: #{msrb_block.1} parent=0
    _
  %s9 = ssub.s32 1, %s7
  %s10 = scalar_select 0, %s9, %s7
  $region1: #{msrb_block.1} parent=0
    #allocation3 [shape = 'u8[16384]{0}', space=vmem, size = 0x4000, scoped, tag = 'input window, operand 0']
    #allocation4 [shape = 'u8[16384]{0}', space=vmem, size = 0x4000, scoped, tag = 'input window, operand 1']
    loop: start=0, step=1, limit=6
    $region2: #{msrb_block.1} parent=1 // loop_pre_header
      _
    $region3: #{msrb_block.1} parent=1 // loop_header
      %s12 = sphi 0, %s16
      %p13 = scmp.ge.s32.totalorder %s12, 6
      %s19 = sphi 0, %s31
      %s20 = sphi 0, %s27
      %s21 = sphi 0, %s19
      %s22 = sphi 0, %s20
      %s23 = sphi 0, %s21
      %s24 = sphi 0, %s22
      %s36 = sphi 0, %s38
      %s39 = sphi 0, %s36
      %s40 = sphi 0, %s39
      %s56 = sphi 0, %s40
      %s66 = sphi 0, %s68
      %s69 = sphi 0, %s66
      %s70 = sphi 0, %s69
      %s86 = sphi 0, %s70
      %s90 = sphi 0, %s90
      %s92 = sphi 0, %s90
      %s93 = sphi 0, %s92
      %s107 = sphi 0, %s93
      %s111 = sphi 0, %s111
      %s113 = sphi 0, %s111
      %s114 = sphi 0, %s113
      %s128 = sphi 0, %s114
      %s132 = sphi 0, %s132
      %s134 = sphi 0, %s132
      %s135 = sphi 0, %s134
      %s149 = sphi 0, %s135
      %s153 = sphi 0, %s153
      %s155 = sphi 0, %s153
      %s156 = sphi 0, %s155
      %s170 = sphi 0, %s156
      %s178 = sphi 0, %s180
      %s181 = sphi 0, %s178
      %s182 = sphi 0, %s181
      %s198 = sphi 0, %s182
    $region4: #{msrb_block.1} parent=1 // loop_header_branch
      %15 = sbr.rel (%p13) target = $region8
    $region5: #{msrb_block.1} parent=1 // loop_body
      %s17 = ssub.s32 %s12, 1
      %s18 = ssub.s32 %s12, 2
      %s25 = sadd.s32 1, %s20
      %p26 = scmp.ge.s32.totalorder %s25, 2
      %s27 = scalar_select %p26, 0, %s25
      %s28 = sadd.s32 1, %s19
      %s29 = scalar_select %p26, %s28, %s19
      %p30 = scmp.ge.s32.totalorder %s29, 2
      %s31 = scalar_select %p30, 0, %s29
      %s32 = ssub.s32 %s19, %s31
      %s33 = ssub.s32 %s20, %s27
      %s34 = sor.u32 %s32, %s33
      %p35 = scmp.eq.s32.totalorder %s34, 0
      %s37 = sadd.s32 %s36, 1
      %s38 = scalar_select %p35, %s36, %s37
      %p41 = pneg %p35
      %p42 = scmp.eq.s32.totalorder %s12, 3
      %p43 = por %p41, %p42
      %p44 = scmp.ne.s32.totalorder %s36, %s39
      %p45 = scmp.eq.s32.totalorder %s12, 0
      %p46 = por %p44, %p45
      %p47 = scmp.ne.s32.totalorder %s36, %s39
      %p48 = scmp.eq.s32.totalorder %s17, 3
      %p49 = por %p47, %p48
      %p50 = scmp.ne.s32.totalorder %s39, %s40
      %p51 = scmp.eq.s32.totalorder %s17, 0
      %p52 = por %p50, %p51
      %p53 = scmp.ne.s32.totalorder %s39, %s40
      %p54 = scmp.eq.s32.totalorder %s18, 3
      %p55 = por %p53, %p54
      %p57 = scmp.ne.s32.totalorder %s40, %s56
      %p58 = scmp.eq.s32.totalorder %s18, 0
      %p59 = por %p57, %p58
      %s60 = sadd.s32 %s20, 1
      %s61 = sadd.s32 %s27, 1
      %s62 = ssub.s32 %s19, %s31
      %s63 = ssub.s32 %s60, %s61
      %s64 = sor.u32 %s62, %s63
      %p65 = scmp.eq.s32.totalorder %s64, 0
      %s67 = sadd.s32 %s66, 1
      %s68 = scalar_select %p65, %s66, %s67
      %p71 = pneg %p65
      %p72 = scmp.eq.s32.totalorder %s12, 3
      %p73 = por %p71, %p72
      %p74 = scmp.ne.s32.totalorder %s66, %s69
      %p75 = scmp.eq.s32.totalorder %s12, 0
      %p76 = por %p74, %p75
      %p77 = scmp.ne.s32.totalorder %s66, %s69
      %p78 = scmp.eq.s32.totalorder %s17, 3
      %p79 = por %p77, %p78
      %p80 = scmp.ne.s32.totalorder %s69, %s70
      %p81 = scmp.eq.s32.totalorder %s17, 0
      %p82 = por %p80, %p81
      %p83 = scmp.ne.s32.totalorder %s69, %s70
      %p84 = scmp.eq.s32.totalorder %s18, 3
      %p85 = por %p83, %p84
      %p87 = scmp.ne.s32.totalorder %s70, %s86
      %p88 = scmp.eq.s32.totalorder %s18, 0
      %p89 = por %p87, %p88
      %s91 = sadd.s32 %s90, 1
      %p94 = scmp.eq.s32.totalorder %s12, 3
      %p95 = scmp.ne.s32.totalorder %s90, %s92
      %p96 = scmp.eq.s32.totalorder %s12, 0
      %p97 = por %p95, %p96
      %p98 = scmp.ne.s32.totalorder %s90, %s92
      %p99 = scmp.eq.s32.totalorder %s17, 3
      %p100 = por %p98, %p99
      %p101 = scmp.ne.s32.totalorder %s92, %s93
      %p102 = scmp.eq.s32.totalorder %s17, 0
      %p103 = por %p101, %p102
      %p104 = scmp.ne.s32.totalorder %s92, %s93
      %p105 = scmp.eq.s32.totalorder %s18, 3
      %p106 = por %p104, %p105
      %p108 = scmp.ne.s32.totalorder %s93, %s107
      %p109 = scmp.eq.s32.totalorder %s18, 0
      %p110 = por %p108, %p109
      %s112 = sadd.s32 %s111, 1
      %p115 = scmp.eq.s32.totalorder %s12, 3
      %p116 = scmp.ne.s32.totalorder %s111, %s113
      %p117 = scmp.eq.s32.totalorder %s12, 0
      %p118 = por %p116, %p117
      %p119 = scmp.ne.s32.totalorder %s111, %s113
      %p120 = scmp.eq.s32.totalorder %s17, 3
      %p121 = por %p119, %p120
      %p122 = scmp.ne.s32.totalorder %s113, %s114
      %p123 = scmp.eq.s32.totalorder %s17, 0
      %p124 = por %p122, %p123
      %p125 = scmp.ne.s32.totalorder %s113, %s114
      %p126 = scmp.eq.s32.totalorder %s18, 3
      %p127 = por %p125, %p126
      %p129 = scmp.ne.s32.totalorder %s114, %s128
      %p130 = scmp.eq.s32.totalorder %s18, 0
      %p131 = por %p129, %p130
      %s133 = sadd.s32 %s132, 1
      %p136 = scmp.eq.s32.totalorder %s12, 3
      %p137 = scmp.ne.s32.totalorder %s132, %s134
      %p138 = scmp.eq.s32.totalorder %s12, 0
      %p139 = por %p137, %p138
      %p140 = scmp.ne.s32.totalorder %s132, %s134
      %p141 = scmp.eq.s32.totalorder %s17, 3
      %p142 = por %p140, %p141
      %p143 = scmp.ne.s32.totalorder %s134, %s135
      %p144 = scmp.eq.s32.totalorder %s17, 0
      %p145 = por %p143, %p144
      %p146 = scmp.ne.s32.totalorder %s134, %s135
      %p147 = scmp.eq.s32.totalorder %s18, 3
      %p148 = por %p146, %p147
      %p150 = scmp.ne.s32.totalorder %s135, %s149
      %p151 = scmp.eq.s32.totalorder %s18, 0
      %p152 = por %p150, %p151
      %s154 = sadd.s32 %s153, 1
      %p157 = scmp.eq.s32.totalorder %s12, 3
      %p158 = scmp.ne.s32.totalorder %s153, %s155
      %p159 = scmp.eq.s32.totalorder %s12, 0
      %p160 = por %p158, %p159
      %p161 = scmp.ne.s32.totalorder %s153, %s155
      %p162 = scmp.eq.s32.totalorder %s17, 3
      %p163 = por %p161, %p162
      %p164 = scmp.ne.s32.totalorder %s155, %s156
      %p165 = scmp.eq.s32.totalorder %s17, 0
      %p166 = por %p164, %p165
      %p167 = scmp.ne.s32.totalorder %s155, %s156
      %p168 = scmp.eq.s32.totalorder %s18, 3
      %p169 = por %p167, %p168
      %p171 = scmp.ne.s32.totalorder %s156, %s170
      %p172 = scmp.eq.s32.totalorder %s18, 0
      %p173 = por %p171, %p172
      %s174 = ssub.s32 %s19, %s31
      %s175 = ssub.s32 %s20, %s27
      %s176 = sor.u32 %s174, %s175
      %p177 = scmp.eq.s32.totalorder %s176, 0
      %s179 = sadd.s32 %s178, 1
      %s180 = scalar_select %p177, %s178, %s179
      %p183 = pneg %p177
      %p184 = scmp.eq.s32.totalorder %s12, 3
      %p185 = por %p183, %p184
      %p186 = scmp.ne.s32.totalorder %s178, %s181
      %p187 = scmp.eq.s32.totalorder %s12, 0
      %p188 = por %p186, %p187
      %p189 = scmp.ne.s32.totalorder %s178, %s181
      %p190 = scmp.eq.s32.totalorder %s17, 3
      %p191 = por %p189, %p190
      %p192 = scmp.ne.s32.totalorder %s181, %s182
      %p193 = scmp.eq.s32.totalorder %s17, 0
      %p194 = por %p192, %p193
      %p195 = scmp.ne.s32.totalorder %s181, %s182
      %p196 = scmp.eq.s32.totalorder %s18, 3
      %p197 = por %p195, %p196
      %p199 = scmp.ne.s32.totalorder %s182, %s198
      %p200 = scmp.eq.s32.totalorder %s18, 0
      %p201 = por %p199, %p200
      %p202 = scmp.le.s32.totalorder 1, %s12
      %p203 = scmp.lt.s32.totalorder %s12, 5
      %p204 = pnand %p202, %p203
      %p205 = pneg %p204
      // Predicated region
      $region9: #{msrb_block.1} parent=5 // pred_check
        _
      $region10: #{msrb_block.1} parent=5 // pred_check_branch
        %207 = sbr.rel (%p204) target = $region12
      $region11: #{msrb_block.1} parent=5 // pred_region
        %s208 = ssub.s32 %s12, 1
        // Predicated region
        $region13: #{msrb_block.1} parent=11 // pred_check
          %p209 = pneg %p103
        $region14: #{msrb_block.1} parent=11 // pred_check_branch
          %211 = sbr.rel (%p209) target = $region16
        $region15: #{msrb_block.1} parent=11 // pred_region
          _
        $region16: #{msrb_block.1} parent=11 // pred_fallthru
          _
        // Predicated region
        $region17: #{msrb_block.1} parent=11 // pred_check
          %p212 = pneg %p124
        $region18: #{msrb_block.1} parent=11 // pred_check_branch
          %214 = sbr.rel (%p212) target = $region20
        $region19: #{msrb_block.1} parent=11 // pred_region
          _
        $region20: #{msrb_block.1} parent=11 // pred_fallthru
          _
        // Predicated region
        $region21: #{msrb_block.1} parent=11 // pred_check
          %p215 = pneg %p145
        $region22: #{msrb_block.1} parent=11 // pred_check_branch
          %217 = sbr.rel (%p215) target = $region24
        $region23: #{msrb_block.1} parent=11 // pred_region
          _
        $region24: #{msrb_block.1} parent=11 // pred_fallthru
          _
        // Predicated region
        $region25: #{msrb_block.1} parent=11 // pred_check
          %p218 = pneg %p166
        $region26: #{msrb_block.1} parent=11 // pred_check_branch
          %220 = sbr.rel (%p218) target = $region28
        $region27: #{msrb_block.1} parent=11 // pred_region
          _
        $region28: #{msrb_block.1} parent=11 // pred_fallthru
          _
      $region12: #{msrb_block.1} parent=5 // pred_fallthru
        _
      %p221 = scmp.lt.s32.totalorder %s12, 4
      // Predicated region
      $region29: #{msrb_block.1} parent=5 // pred_check
        %p222 = pneg %p221
      $region30: #{msrb_block.1} parent=5 // pred_check_branch
        %224 = sbr.rel (%p222) target = $region32
      $region31: #{msrb_block.1} parent=5 // pred_region
        // Predicated region
        $region33: #{msrb_block.1} parent=31 // pred_check
          %p225 = pneg %p46
        $region34: #{msrb_block.1} parent=31 // pred_check_branch
          %227 = sbr.rel (%p225) target = $region36
        $region35: #{msrb_block.1} parent=31 // pred_region
          %s228 = sand.u32 %s36, 1
          %s229 = sand.u32 %s36, 1
          %s230 = smul.addr %s229, 16
          %s231 = scalar_lea.vmem [#allocation3], %s230
          %s232 = smul.addr %s19, 12
          %s233 = sadd.s32 %s20, %s232
          %s234 = smul.addr %s233, 4
          %s235 = scalar_lea.vmem %s0, %s234
          // Predicated region
          $region37: #{msrb_block.1} parent=35 // pred_check
            _
          $region38: #{msrb_block.1} parent=35 // pred_check_branch
            %237 = sbr.rel (0) target = $region40
          $region39: #{msrb_block.1} parent=35 // pred_region
            // Predicated region
            $region41: #{msrb_block.1} parent=39 // pred_check
              _
            $region42: #{msrb_block.1} parent=39 // pred_check_branch
              %239 = sbr.rel target = $region44
            $region43: #{msrb_block.1} parent=39 // pred_region
              // Predicated region
              $region56: #{msrb_block.1} parent=43 // pred_check
                _
              $region57: #{msrb_block.1} parent=43 // pred_check_branch
                %260 = sbr.rel (0) target = $region59
              $region58: #{msrb_block.1} parent=43 // pred_region
                loop: start=0, step=1, limit=1
                $region60: #{msrb_block.1} parent=58 // loop_pre_header
                  _
                $region61: #{msrb_block.1} parent=58 // loop_header
                  %s262 = sphi 0, %s266
                  %p263 = scmp.ge.s32.totalorder %s262, 1
                  %s267 = sphi %s235, %s235
                  %s268 = sphi %s231, %s231
                $region62: #{msrb_block.1} parent=58 // loop_header_branch
                  %265 = sbr.rel (%p263) target = $region66
                $region63: #{msrb_block.1} parent=58 // loop_body
                  _
                $region64: #{msrb_block.1} parent=58 // loop_footer
                  %s266 = sadd.s32 1, %s262
                $region65: #{msrb_block.1} parent=58 // loop_footer_branch
                  %261 = sbr.rel target = $region61
                $region66: #{msrb_block.1} parent=58 // loop_exit
                  _
                loop: start=0, step=1, limit=1
                $region67: #{msrb_block.1} parent=58 // loop_pre_header
                  _
                $region68: #{msrb_block.1} parent=58 // loop_header
                  %s271 = sphi 0, %s275
                  %p272 = scmp.ge.s32.totalorder %s271, 1
                  %s276 = sphi %s235, %s235
                  %s277 = sphi %s231, %s231
                $region69: #{msrb_block.1} parent=58 // loop_header_branch
                  %274 = sbr.rel (%p272) target = $region73
                $region70: #{msrb_block.1} parent=58 // loop_body
                  %v278 = vld [vmem:[%s276] sm:$0xf]
                  %279 = vst [vmem:[%s277] sm:$0xf] %v278
                  %v280 = vld [vmem:[%s276 + $0xc] sm:$0xf]
                  %281 = vst [vmem:[%s277 + $0x4] sm:$0xf] %v280
                  %v282 = vld [vmem:[%s276 + $0x18] sm:$0xf]
                  %283 = vst [vmem:[%s277 + $0x8] sm:$0xf] %v282
                  %v284 = vld [vmem:[%s276 + $0x24] sm:$0xf]
                  %285 = vst [vmem:[%s277 + $0xc] sm:$0xf] %v284
                $region71: #{msrb_block.1} parent=58 // loop_footer
                  %s275 = sadd.s32 1, %s271
                $region72: #{msrb_block.1} parent=58 // loop_footer_branch
                  %270 = sbr.rel target = $region68
                $region73: #{msrb_block.1} parent=58 // loop_exit
                  _
              $region59: #{msrb_block.1} parent=43 // pred_fallthru
                _
            $region44: #{msrb_block.1} parent=39 // pred_fallthru
              _
            // Predicated region
            $region45: #{msrb_block.1} parent=39 // pred_check
              _
            $region46: #{msrb_block.1} parent=39 // pred_check_branch
              %241 = sbr.rel (0) target = $region48
            $region47: #{msrb_block.1} parent=39 // pred_region
              loop: start=0, step=1, limit=1
              $region49: #{msrb_block.1} parent=47 // loop_pre_header
                _
              $region50: #{msrb_block.1} parent=47 // loop_header
                %s244 = sphi 0, %s248
                %p245 = scmp.ge.s32.totalorder %s244, 1
                %s249 = sphi %s235, %s235
                %s250 = sphi %s231, %s231
              $region51: #{msrb_block.1} parent=47 // loop_header_branch
                %247 = sbr.rel (%p245) target = $region55
              $region52: #{msrb_block.1} parent=47 // loop_body
                %v251 = vld [vmem:[%s249] sm:$0xf]
                %252 = vst [vmem:[%s250] sm:$0xf] %v251
                %v253 = vld [vmem:[%s249 + $0xc] sm:$0xf]
                %254 = vst [vmem:[%s250 + $0x4] sm:$0xf] %v253
                %v255 = vld [vmem:[%s249 + $0x18] sm:$0xf]
                %256 = vst [vmem:[%s250 + $0x8] sm:$0xf] %v255
                %v257 = vld [vmem:[%s249 + $0x24] sm:$0xf]
                %258 = vst [vmem:[%s250 + $0xc] sm:$0xf] %v257
              $region53: #{msrb_block.1} parent=47 // loop_footer
                %s248 = sadd.s32 1, %s244
              $region54: #{msrb_block.1} parent=47 // loop_footer_branch
                %243 = sbr.rel target = $region50
              $region55: #{msrb_block.1} parent=47 // loop_exit
                _
            $region48: #{msrb_block.1} parent=39 // pred_fallthru
              _
          $region40: #{msrb_block.1} parent=35 // pred_fallthru
            _
          %286 = vnop
        $region36: #{msrb_block.1} parent=31 // pred_fallthru
          _
        // Predicated region
        $region74: #{msrb_block.1} parent=31 // pred_check
          %p287 = pneg %p76
        $region75: #{msrb_block.1} parent=31 // pred_check_branch
          %289 = sbr.rel (%p287) target = $region77
        $region76: #{msrb_block.1} parent=31 // pred_region
          %s290 = sand.u32 %s66, 1
          %s291 = sand.u32 %s66, 1
          %s292 = smul.addr %s291, 16
          %s293 = scalar_lea.vmem [#allocation4], %s292
          %s294 = sadd.s32 %s20, 1
          %s295 = smul.addr %s19, 12
          %s296 = sadd.s32 %s294, %s295
          %s297 = smul.addr %s296, 4
          %s298 = scalar_lea.vmem %s1, %s297
          // Predicated region
          $region78: #{msrb_block.1} parent=76 // pred_check
            _
          $region79: #{msrb_block.1} parent=76 // pred_check_branch
            %300 = sbr.rel (0) target = $region81
          $region80: #{msrb_block.1} parent=76 // pred_region
            // Predicated region
            $region82: #{msrb_block.1} parent=80 // pred_check
              _
            $region83: #{msrb_block.1} parent=80 // pred_check_branch
              %302 = sbr.rel target = $region85
            $region84: #{msrb_block.1} parent=80 // pred_region
              // Predicated region
              $region97: #{msrb_block.1} parent=84 // pred_check
                _
              $region98: #{msrb_block.1} parent=84 // pred_check_branch
                %323 = sbr.rel (0) target = $region100
              $region99: #{msrb_block.1} parent=84 // pred_region
                loop: start=0, step=1, limit=1
                $region101: #{msrb_block.1} parent=99 // loop_pre_header
                  _
                $region102: #{msrb_block.1} parent=99 // loop_header
                  %s325 = sphi 0, %s329
                  %p326 = scmp.ge.s32.totalorder %s325, 1
                  %s330 = sphi %s298, %s298
                  %s331 = sphi %s293, %s293
                $region103: #{msrb_block.1} parent=99 // loop_header_branch
                  %328 = sbr.rel (%p326) target = $region107
                $region104: #{msrb_block.1} parent=99 // loop_body
                  _
                $region105: #{msrb_block.1} parent=99 // loop_footer
                  %s329 = sadd.s32 1, %s325
                $region106: #{msrb_block.1} parent=99 // loop_footer_branch
                  %324 = sbr.rel target = $region102
                $region107: #{msrb_block.1} parent=99 // loop_exit
                  _
                loop: start=0, step=1, limit=1
                $region108: #{msrb_block.1} parent=99 // loop_pre_header
                  _
                $region109: #{msrb_block.1} parent=99 // loop_header
                  %s334 = sphi 0, %s338
                  %p335 = scmp.ge.s32.totalorder %s334, 1
                  %s339 = sphi %s298, %s298
                  %s340 = sphi %s293, %s293
                $region110: #{msrb_block.1} parent=99 // loop_header_branch
                  %337 = sbr.rel (%p335) target = $region114
                $region111: #{msrb_block.1} parent=99 // loop_body
                  %v341 = vld [vmem:[%s339] sm:$0xf]
                  %342 = vst [vmem:[%s340] sm:$0xf] %v341
                  %v343 = vld [vmem:[%s339 + $0xc] sm:$0xf]
                  %344 = vst [vmem:[%s340 + $0x4] sm:$0xf] %v343
                  %v345 = vld [vmem:[%s339 + $0x18] sm:$0xf]
                  %346 = vst [vmem:[%s340 + $0x8] sm:$0xf] %v345
                  %v347 = vld [vmem:[%s339 + $0x24] sm:$0xf]
                  %348 = vst [vmem:[%s340 + $0xc] sm:$0xf] %v347
                $region112: #{msrb_block.1} parent=99 // loop_footer
                  %s338 = sadd.s32 1, %s334
                $region113: #{msrb_block.1} parent=99 // loop_footer_branch
                  %333 = sbr.rel target = $region109
                $region114: #{msrb_block.1} parent=99 // loop_exit
                  _
              $region100: #{msrb_block.1} parent=84 // pred_fallthru
                _
            $region85: #{msrb_block.1} parent=80 // pred_fallthru
              _
            // Predicated region
            $region86: #{msrb_block.1} parent=80 // pred_check
              _
            $region87: #{msrb_block.1} parent=80 // pred_check_branch
              %304 = sbr.rel (0) target = $region89
            $region88: #{msrb_block.1} parent=80 // pred_region
              loop: start=0, step=1, limit=1
              $region90: #{msrb_block.1} parent=88 // loop_pre_header
                _
              $region91: #{msrb_block.1} parent=88 // loop_header
                %s307 = sphi 0, %s311
                %p308 = scmp.ge.s32.totalorder %s307, 1
                %s312 = sphi %s298, %s298
                %s313 = sphi %s293, %s293
              $region92: #{msrb_block.1} parent=88 // loop_header_branch
                %310 = sbr.rel (%p308) target = $region96
              $region93: #{msrb_block.1} parent=88 // loop_body
                %v314 = vld [vmem:[%s312] sm:$0xf]
                %315 = vst [vmem:[%s313] sm:$0xf] %v314
                %v316 = vld [vmem:[%s312 + $0xc] sm:$0xf]
                %317 = vst [vmem:[%s313 + $0x4] sm:$0xf] %v316
                %v318 = vld [vmem:[%s312 + $0x18] sm:$0xf]
                %319 = vst [vmem:[%s313 + $0x8] sm:$0xf] %v318
                %v320 = vld [vmem:[%s312 + $0x24] sm:$0xf]
                %321 = vst [vmem:[%s313 + $0xc] sm:$0xf] %v320
              $region94: #{msrb_block.1} parent=88 // loop_footer
                %s311 = sadd.s32 1, %s307
              $region95: #{msrb_block.1} parent=88 // loop_footer_branch
                %306 = sbr.rel target = $region91
              $region96: #{msrb_block.1} parent=88 // loop_exit
                _
            $region89: #{msrb_block.1} parent=80 // pred_fallthru
              _
          $region81: #{msrb_block.1} parent=76 // pred_fallthru
            _
          %349 = vnop
        $region77: #{msrb_block.1} parent=31 // pred_fallthru
          _
      $region32: #{msrb_block.1} parent=5 // pred_fallthru
        _
      %p350 = scmp.le.s32.totalorder 1, %s12
      %p351 = scmp.lt.s32.totalorder %s12, 5
      %p352 = pnand %p350, %p351
      %p353 = pneg %p352
      // Predicated region
      $region115: #{msrb_block.1} parent=5 // pred_check
        _
      $region116: #{msrb_block.1} parent=5 // pred_check_branch
        %355 = sbr.rel (%p352) target = $region118
      $region117: #{msrb_block.1} parent=5 // pred_region
        %s356 = ssub.s32 %s12, 1
        %s357 = sand.u32 %s39, 1
        %s358 = sand.u32 %s39, 1
        %s359 = smul.addr %s358, 16
        %s360 = scalar_lea.vmem [#allocation3], %s359
        // Predicated region
        $region119: #{msrb_block.1} parent=117 // pred_check
          %p361 = pneg %p52
        $region120: #{msrb_block.1} parent=117 // pred_check_branch
          %363 = sbr.rel (%p361) target = $region122
        $region121: #{msrb_block.1} parent=117 // pred_region
          _
        $region122: #{msrb_block.1} parent=117 // pred_fallthru
          _
        %s364 = sand.u32 %s69, 1
        %s365 = sand.u32 %s69, 1
        %s366 = smul.addr %s365, 16
        %s367 = scalar_lea.vmem [#allocation4], %s366
        // Predicated region
        $region123: #{msrb_block.1} parent=117 // pred_check
          %p368 = pneg %p82
        $region124: #{msrb_block.1} parent=117 // pred_check_branch
          %370 = sbr.rel (%p368) target = $region126
        $region125: #{msrb_block.1} parent=117 // pred_region
          _
        $region126: #{msrb_block.1} parent=117 // pred_fallthru
          _
        %s371 = sand.u32 %s39, 1
        %s372 = sand.u32 %s39, 1
        %s373 = smul.addr %s372, 16
        %s374 = scalar_lea.vmem [#allocation3], %s373
        %p375 = pneg %p52
        %p376 = pneg %p49
        %s377 = sand.u32 %s69, 1
        %s378 = sand.u32 %s69, 1
        %s379 = smul.addr %s378, 16
        %s380 = scalar_lea.vmem [#allocation4], %s379
        %p381 = pneg %p82
        %p382 = pneg %p79
        %p383 = pneg %p103
        %p384 = pneg %p100
        %p385 = pneg %p124
        %p386 = pneg %p121
        %p387 = pneg %p145
        %p388 = pneg %p142
        %p389 = pneg %p166
        %p390 = pneg %p163
        %p391 = pneg %p194
        %p392 = pneg %p191
        %p393 = scmp.lt.s32.totalorder %s21, 1
        %s394 = scalar_select %p393, %s21, 1
        %p395 = scmp.lt.s32.totalorder %s22, 1
        %s396 = scalar_select %p395, %s22, 1
        %s397 = smul.addr %s394, 2
        %s398 = sadd.s32 %s396, %s397
        %s399 = smul.addr %s398, 8
        %s400 = scalar_lea.vmem %s6, %s399
        %s401 = sadd.s32 %s22, 1
        %p402 = scmp.lt.s32.totalorder %s21, 1
        %s403 = scalar_select %p402, %s21, 1
        %p404 = scmp.lt.s32.totalorder %s22, 1
        %s405 = scalar_select %p404, %s22, 1
        %s406 = smul.addr %s403, 2
        %s407 = sadd.s32 %s405, %s406
        %s408 = smul.addr %s407, 8
        %s409 = scalar_lea.vmem %s6, %s408
        %v411 = vld [vmem:[%s360] sm:$0x1]
        %v412 = vld [vmem:[%s360 + $0x4] sm:$0x1]
        %v413 = vld [vmem:[%s360 + $0x8] sm:$0x1]
        %v414 = vld [vmem:[%s360 + $0xc] sm:$0x1]
        %v415 = vunpack.c.l.bf16 %v411
        %v416 = vunpack.c.l.bf16 %v412
        %v417 = vunpack.c.l.bf16 %v413
        %v418 = vunpack.c.l.bf16 %v414
        %v423 = vrot.slane %v416, 7
        %vm424 = vcmask 1041409
        %v425 = vsel %vm424, %v423, %v415
        %v426 = vrot.slane %v417, 6
        %vm427 = vcmask 1042434
        %v428 = vsel %vm427, %v426, %v425
        %v429 = vrot.slane %v418, 5
        %vm430 = vcmask 1043459
        %v431 = vsel %vm430, %v429, %v428
        %vm433 = vcmask 125952
        %434 = vst.msk [vmem:[#allocation2] sm:$0xf] %vm433, %v431
        %435 = vrot.lane.b32.xlu0 %v431, 127
        %v436 = vpop.permute.xlu0 %435
        %438 = vst.msk [vmem:[#allocation2 + $0x4] sm:$0xf] %vm433, %v436
        %439 = vrot.lane.b32.xlu0 %v431, 126
        %v440 = vpop.permute.xlu0 %439
        %442 = vst.msk [vmem:[#allocation2 + $0x8] sm:$0xf] %vm433, %v440
        %443 = vrot.lane.b32.xlu0 %v431, 125
        %v444 = vpop.permute.xlu0 %443
        %446 = vst.msk [vmem:[#allocation2 + $0xc] sm:$0xf] %vm433, %v444
        %447 = vrot.lane.b32.xlu0 %v431, 124
        %v448 = vpop.permute.xlu0 %447
        %450 = vst.msk [vmem:[#allocation2 + $0x10] sm:$0xf] %vm433, %v448
        %v451 = vld [vmem:[%s360] sm:$0x1]
        %v452 = vld [vmem:[%s360 + $0x4] sm:$0x1]
        %v453 = vld [vmem:[%s360 + $0x8] sm:$0x1]
        %v454 = vld [vmem:[%s360 + $0xc] sm:$0x1]
        %v455 = vunpack.c.l.bf16 %v451
        %v456 = vunpack.c.l.bf16 %v452
        %v457 = vunpack.c.l.bf16 %v453
        %v458 = vunpack.c.l.bf16 %v454
        %v463 = vrot.slane %v456, 7
        %v464 = vsel %vm427, %v463, %v455
        %v465 = vrot.slane %v457, 6
        %v466 = vsel %vm430, %v465, %v464
        %v467 = vrot.slane %v458, 5
        %vm468 = vcmask 1044484
        %v469 = vsel %vm468, %v467, %v466
        %470 = vrot.lane.b32.xlu0 %v469, 16
        %v471 = vpop.permute.xlu0 %470
        %vm473 = vcmask 258177
        %474 = vst.msk [vmem:[#allocation2 - $0x1] sm:$0x1e] %vm473, %v471
        %475 = vrot.lane.b32.xlu0 %v469, 15
        %v476 = vpop.permute.xlu0 %475
        %478 = vst.msk [vmem:[#allocation2 + $0x3] sm:$0x1e] %vm473, %v476
        %479 = vrot.lane.b32.xlu0 %v469, 14
        %v480 = vpop.permute.xlu0 %479
        %482 = vst.msk [vmem:[#allocation2 + $0x7] sm:$0x1e] %vm473, %v480
        %483 = vrot.lane.b32.xlu0 %v469, 13
        %v484 = vpop.permute.xlu0 %483
        %486 = vst.msk [vmem:[#allocation2 + $0xb] sm:$0x1e] %vm473, %v484
        %487 = vrot.lane.b32.xlu0 %v469, 12
        %v488 = vpop.permute.xlu0 %487
        %490 = vst.msk [vmem:[#allocation2 + $0xf] sm:$0x1e] %vm473, %v488
        %vm492 = vcmask 126977
        %493 = vst.msk [vmem:[#allocation2 + $0x13] sm:$0x1e] %vm492, %v469
        %494 = vrot.lane.b32.xlu0 %v469, 127
        %v495 = vpop.permute.xlu0 %494
        %497 = vst.msk [vmem:[#allocation2 + $0x17] sm:$0x1e] %vm492, %v495
        %498 = vrot.lane.b32.xlu0 %v469, 126
        %v499 = vpop.permute.xlu0 %498
        %501 = vst.msk [vmem:[#allocation2 + $0x1b] sm:$0x1e] %vm492, %v499
        %502 = vrot.lane.b32.xlu0 %v469, 125
        %v503 = vpop.permute.xlu0 %502
        %505 = vst.msk [vmem:[#allocation2 + $0x1f] sm:$0x1e] %vm492, %v503
        %506 = vrot.lane.b32.xlu0 %v469, 124
        %v507 = vpop.permute.xlu0 %506
        %509 = vst.msk [vmem:[#allocation2 + $0x23] sm:$0x1e] %vm492, %v507
        %v510 = vld [vmem:[%s360] sm:$0x2]
        %v511 = vld [vmem:[%s360 + $0x4] sm:$0x2]
        %v512 = vld [vmem:[%s360 + $0x8] sm:$0x2]
        %v513 = vld [vmem:[%s360 + $0xc] sm:$0x2]
        %v514 = vunpack.c.l.bf16 %v510
        %v515 = vunpack.c.l.bf16 %v511
        %v516 = vunpack.c.l.bf16 %v512
        %v517 = vunpack.c.l.bf16 %v513
        %v522 = vrot.slane %v515, 7
        %v523 = vsel %vm430, %v522, %v514
        %v524 = vrot.slane %v516, 6
        %v525 = vsel %vm468, %v524, %v523
        %v526 = vrot.slane %v517, 5
        %vm527 = vcmask 1045509
        %v528 = vsel %vm527, %v526, %v525
        %529 = vrot.lane.b32.xlu0 %v528, 32
        %v530 = vpop.permute.xlu0 %529
        %vm532 = vcmask 390402
        %533 = vst.msk [vmem:[#allocation2 - $0x2] sm:$0x3c] %vm532, %v530
        %534 = vrot.lane.b32.xlu0 %v528, 31
        %v535 = vpop.permute.xlu0 %534
        %537 = vst.msk [vmem:[#allocation2 + $0x2] sm:$0x3c] %vm532, %v535
        %538 = vrot.lane.b32.xlu0 %v528, 30
        %v539 = vpop.permute.xlu0 %538
        %541 = vst.msk [vmem:[#allocation2 + $0x6] sm:$0x3c] %vm532, %v539
        %542 = vrot.lane.b32.xlu0 %v528, 29
        %v543 = vpop.permute.xlu0 %542
        %545 = vst.msk [vmem:[#allocation2 + $0xa] sm:$0x3c] %vm532, %v543
        %546 = vrot.lane.b32.xlu0 %v528, 28
        %v547 = vpop.permute.xlu0 %546
        %549 = vst.msk [vmem:[#allocation2 + $0xe] sm:$0x3c] %vm532, %v547
        %550 = vrot.lane.b32.xlu0 %v528, 16
        %v551 = vpop.permute.xlu0 %550
        %vm553 = vcmask 259202
        %554 = vst.msk [vmem:[#allocation2 + $0x12] sm:$0x3c] %vm553, %v551
        %555 = vrot.lane.b32.xlu0 %v528, 15
        %v556 = vpop.permute.xlu0 %555
        %558 = vst.msk [vmem:[#allocation2 + $0x16] sm:$0x3c] %vm553, %v556
        %559 = vrot.lane.b32.xlu0 %v528, 14
        %v560 = vpop.permute.xlu0 %559
        %562 = vst.msk [vmem:[#allocation2 + $0x1a] sm:$0x3c] %vm553, %v560
        %563 = vrot.lane.b32.xlu0 %v528, 13
        %v564 = vpop.permute.xlu0 %563
        %566 = vst.msk [vmem:[#allocation2 + $0x1e] sm:$0x3c] %vm553, %v564
        %567 = vrot.lane.b32.xlu0 %v528, 12
        %v568 = vpop.permute.xlu0 %567
        %570 = vst.msk [vmem:[#allocation2 + $0x22] sm:$0x3c] %vm553, %v568
        %vm572 = vcmask 128002
        %573 = vst.msk [vmem:[#allocation2 + $0x26] sm:$0x3c] %vm572, %v528
        %574 = vrot.lane.b32.xlu0 %v528, 127
        %v575 = vpop.permute.xlu0 %574
        %577 = vst.msk [vmem:[#allocation2 + $0x2a] sm:$0x3c] %vm572, %v575
        %578 = vrot.lane.b32.xlu0 %v528, 126
        %v579 = vpop.permute.xlu0 %578
        %581 = vst.msk [vmem:[#allocation2 + $0x2e] sm:$0x3c] %vm572, %v579
        %582 = vrot.lane.b32.xlu0 %v528, 125
        %v583 = vpop.permute.xlu0 %582
        %585 = vst.msk [vmem:[#allocation2 + $0x32] sm:$0x3c] %vm572, %v583
        %586 = vrot.lane.b32.xlu0 %v528, 124
        %v587 = vpop.permute.xlu0 %586
        %589 = vst.msk [vmem:[#allocation2 + $0x36] sm:$0x3c] %vm572, %v587
        %v590 = vld [vmem:[%s360] sm:$0x2]
        %v591 = vld [vmem:[%s360 + $0x4] sm:$0x2]
        %v592 = vld [vmem:[%s360 + $0x8] sm:$0x2]
        %v593 = vld [vmem:[%s360 + $0xc] sm:$0x2]
        %v594 = vunpack.c.l.bf16 %v590
        %v595 = vunpack.c.l.bf16 %v591
        %v596 = vunpack.c.l.bf16 %v592
        %v597 = vunpack.c.l.bf16 %v593
        %v602 = vrot.slane %v595, 7
        %v603 = vsel %vm468, %v602, %v594
        %v604 = vrot.slane %v596, 6
        %v605 = vsel %vm527, %v604, %v603
        %v606 = vrot.slane %v597, 5
        %vm607 = vcmask 1046534
        %v608 = vsel %vm607, %v606, %v605
        %609 = vrot.lane.b32.xlu0 %v608, 48
        %v610 = vpop.permute.xlu0 %609
        %vm612 = vcmask 522627
        %613 = vst.msk [vmem:[#allocation2 - $0x3] sm:$0x78] %vm612, %v610
        %614 = vrot.lane.b32.xlu0 %v608, 47
        %v615 = vpop.permute.xlu0 %614
        %617 = vst.msk [vmem:[#allocation2 + $0x1] sm:$0x78] %vm612, %v615
        %618 = vrot.lane.b32.xlu0 %v608, 46
        %v619 = vpop.permute.xlu0 %618
        %621 = vst.msk [vmem:[#allocation2 + $0x5] sm:$0x78] %vm612, %v619
        %622 = vrot.lane.b32.xlu0 %v608, 45
        %v623 = vpop.permute.xlu0 %622
        %625 = vst.msk [vmem:[#allocation2 + $0x9] sm:$0x78] %vm612, %v623
        %626 = vrot.lane.b32.xlu0 %v608, 44
        %v627 = vpop.permute.xlu0 %626
        %629 = vst.msk [vmem:[#allocation2 + $0xd] sm:$0x78] %vm612, %v627
        %630 = vrot.lane.b32.xlu0 %v608, 32
        %v631 = vpop.permute.xlu0 %630
        %vm633 = vcmask 391427
        %634 = vst.msk [vmem:[#allocation2 + $0x11] sm:$0x78] %vm633, %v631
        %635 = vrot.lane.b32.xlu0 %v608, 31
        %v636 = vpop.permute.xlu0 %635
        %638 = vst.msk [vmem:[#allocation2 + $0x15] sm:$0x78] %vm633, %v636
        %639 = vrot.lane.b32.xlu0 %v608, 30
        %v640 = vpop.permute.xlu0 %639
        %642 = vst.msk [vmem:[#allocation2 + $0x19] sm:$0x78] %vm633, %v640
        %643 = vrot.lane.b32.xlu0 %v608, 29
        %v644 = vpop.permute.xlu0 %643
        %646 = vst.msk [vmem:[#allocation2 + $0x1d] sm:$0x78] %vm633, %v644
        %647 = vrot.lane.b32.xlu0 %v608, 28
        %v648 = vpop.permute.xlu0 %647
        %650 = vst.msk [vmem:[#allocation2 + $0x21] sm:$0x78] %vm633, %v648
        %651 = vrot.lane.b32.xlu0 %v608, 16
        %v652 = vpop.permute.xlu0 %651
        %vm654 = vcmask 260227
        %655 = vst.msk [vmem:[#allocation2 + $0x25] sm:$0x78] %vm654, %v652
        %656 = vrot.lane.b32.xlu0 %v608, 15
        %v657 = vpop.permute.xlu0 %656
        %659 = vst.msk [vmem:[#allocation2 + $0x29] sm:$0x78] %vm654, %v657
        %660 = vrot.lane.b32.xlu0 %v608, 14
        %v661 = vpop.permute.xlu0 %660
        %663 = vst.msk [vmem:[#allocation2 + $0x2d] sm:$0x78] %vm654, %v661
        %664 = vrot.lane.b32.xlu0 %v608, 13
        %v665 = vpop.permute.xlu0 %664
        %667 = vst.msk [vmem:[#allocation2 + $0x31] sm:$0x78] %vm654, %v665
        %668 = vrot.lane.b32.xlu0 %v608, 12
        %v669 = vpop.permute.xlu0 %668
        %671 = vst.msk [vmem:[#allocation2 + $0x35] sm:$0x78] %vm654, %v669
        %vm673 = vcmask 129027
        %674 = vst.msk [vmem:[#allocation2 + $0x39] sm:$0x78] %vm673, %v608
        %675 = vrot.lane.b32.xlu0 %v608, 127
        %v676 = vpop.permute.xlu0 %675
        %678 = vst.msk [vmem:[#allocation2 + $0x3d] sm:$0x78] %vm673, %v676
        %679 = vrot.lane.b32.xlu0 %v608, 126
        %v680 = vpop.permute.xlu0 %679
        %682 = vst.msk [vmem:[#allocation2 + $0x41] sm:$0x78] %vm673, %v680
        %683 = vrot.lane.b32.xlu0 %v608, 125
        %v684 = vpop.permute.xlu0 %683
        %686 = vst.msk [vmem:[#allocation2 + $0x45] sm:$0x78] %vm673, %v684
        %687 = vrot.lane.b32.xlu0 %v608, 124
        %v688 = vpop.permute.xlu0 %687
        %690 = vst.msk [vmem:[#allocation2 + $0x49] sm:$0x78] %vm673, %v688
        %v691 = vld [vmem:[%s360] sm:$0x4]
        %v692 = vld [vmem:[%s360 + $0x4] sm:$0x4]
        %v693 = vld [vmem:[%s360 + $0x8] sm:$0x4]
        %v694 = vld [vmem:[%s360 + $0xc] sm:$0x4]
        %v695 = vunpack.c.l.bf16 %v691
        %v696 = vunpack.c.l.bf16 %v692
        %v697 = vunpack.c.l.bf16 %v693
        %v698 = vunpack.c.l.bf16 %v694
        %v703 = vrot.slane %v696, 7
        %v704 = vsel %vm527, %v703, %v695
        %v705 = vrot.slane %v697, 6
        %v706 = vsel %vm607, %v705, %v704
        %v707 = vrot.slane %v698, 5
        %vm708 = vcmask 1047559
        %v709 = vsel %vm708, %v707, %v706
        %710 = vrot.lane.b32.xlu0 %v709, 64
        %v711 = vpop.permute.xlu0 %710
        %vm713 = vcmask 654852
        %714 = vst.msk [vmem:[#allocation2 - $0x4] sm:$0xf0] %vm713, %v711
        %715 = vrot.lane.b32.xlu0 %v709, 63
        %v716 = vpop.permute.xlu0 %715
        %718 = vst.msk [vmem:[#allocation2] sm:$0xf0] %vm713, %v716
        %719 = vrot.lane.b32.xlu0 %v709, 62
        %v720 = vpop.permute.xlu0 %719
        %722 = vst.msk [vmem:[#allocation2 + $0x4] sm:$0xf0] %vm713, %v720
        %723 = vrot.lane.b32.xlu0 %v709, 61
        %v724 = vpop.permute.xlu0 %723
        %726 = vst.msk [vmem:[#allocation2 + $0x8] sm:$0xf0] %vm713, %v724
        %727 = vrot.lane.b32.xlu0 %v709, 60
        %v728 = vpop.permute.xlu0 %727
        %730 = vst.msk [vmem:[#allocation2 + $0xc] sm:$0xf0] %vm713, %v728
        %731 = vrot.lane.b32.xlu0 %v709, 48
        %v732 = vpop.permute.xlu0 %731
        %vm734 = vcmask 523652
        %735 = vst.msk [vmem:[#allocation2 + $0x10] sm:$0xf0] %vm734, %v732
        %736 = vrot.lane.b32.xlu0 %v709, 47
        %v737 = vpop.permute.xlu0 %736
        %739 = vst.msk [vmem:[#allocation2 + $0x14] sm:$0xf0] %vm734, %v737
        %740 = vrot.lane.b32.xlu0 %v709, 46
        %v741 = vpop.permute.xlu0 %740
        %743 = vst.msk [vmem:[#allocation2 + $0x18] sm:$0xf0] %vm734, %v741
        %744 = vrot.lane.b32.xlu0 %v709, 45
        %v745 = vpop.permute.xlu0 %744
        %747 = vst.msk [vmem:[#allocation2 + $0x1c] sm:$0xf0] %vm734, %v745
        %748 = vrot.lane.b32.xlu0 %v709, 44
        %v749 = vpop.permute.xlu0 %748
        %751 = vst.msk [vmem:[#allocation2 + $0x20] sm:$0xf0] %vm734, %v749
        %752 = vrot.lane.b32.xlu0 %v709, 32
        %v753 = vpop.permute.xlu0 %752
        %vm755 = vcmask 392452
        %756 = vst.msk [vmem:[#allocation2 + $0x24] sm:$0xf0] %vm755, %v753
        %757 = vrot.lane.b32.xlu0 %v709, 31
        %v758 = vpop.permute.xlu0 %757
        %760 = vst.msk [vmem:[#allocation2 + $0x28] sm:$0xf0] %vm755, %v758
        %761 = vrot.lane.b32.xlu0 %v709, 30
        %v762 = vpop.permute.xlu0 %761
        %764 = vst.msk [vmem:[#allocation2 + $0x2c] sm:$0xf0] %vm755, %v762
        %765 = vrot.lane.b32.xlu0 %v709, 29
        %v766 = vpop.permute.xlu0 %765
        %768 = vst.msk [vmem:[#allocation2 + $0x30] sm:$0xf0] %vm755, %v766
        %769 = vrot.lane.b32.xlu0 %v709, 28
        %v770 = vpop.permute.xlu0 %769
        %772 = vst.msk [vmem:[#allocation2 + $0x34] sm:$0xf0] %vm755, %v770
        %773 = vrot.lane.b32.xlu0 %v709, 16
        %v774 = vpop.permute.xlu0 %773
        %vm776 = vcmask 261252
        %777 = vst.msk [vmem:[#allocation2 + $0x38] sm:$0xf0] %vm776, %v774
        %778 = vrot.lane.b32.xlu0 %v709, 15
        %v779 = vpop.permute.xlu0 %778
        %781 = vst.msk [vmem:[#allocation2 + $0x3c] sm:$0xf0] %vm776, %v779
        %782 = vrot.lane.b32.xlu0 %v709, 14
        %v783 = vpop.permute.xlu0 %782
        %785 = vst.msk [vmem:[#allocation2 + $0x40] sm:$0xf0] %vm776, %v783
        %786 = vrot.lane.b32.xlu0 %v709, 13
        %v787 = vpop.permute.xlu0 %786
        %789 = vst.msk [vmem:[#allocation2 + $0x44] sm:$0xf0] %vm776, %v787
        %790 = vrot.lane.b32.xlu0 %v709, 12
        %v791 = vpop.permute.xlu0 %790
        %793 = vst.msk [vmem:[#allocation2 + $0x48] sm:$0xf0] %vm776, %v791
        %vm795 = vcmask 130052
        %796 = vst.msk [vmem:[#allocation2 + $0x4c] sm:$0xf0] %vm795, %v709
        %797 = vrot.lane.b32.xlu0 %v709, 127
        %v798 = vpop.permute.xlu0 %797
        %800 = vst.msk [vmem:[#allocation2 + $0x50] sm:$0xf0] %vm795, %v798
        %801 = vrot.lane.b32.xlu0 %v709, 126
        %v802 = vpop.permute.xlu0 %801
        %804 = vst.msk [vmem:[#allocation2 + $0x54] sm:$0xf0] %vm795, %v802
        %805 = vrot.lane.b32.xlu0 %v709, 125
        %v806 = vpop.permute.xlu0 %805
        %808 = vst.msk [vmem:[#allocation2 + $0x58] sm:$0xf0] %vm795, %v806
        %809 = vrot.lane.b32.xlu0 %v709, 124
        %v810 = vpop.permute.xlu0 %809
        %812 = vst.msk [vmem:[#allocation2 + $0x5c] sm:$0xf0] %vm795, %v810
        %v813 = vld [vmem:[%s360] sm:$0x4]
        %v814 = vld [vmem:[%s360 + $0x4] sm:$0x4]
        %v815 = vld [vmem:[%s360 + $0x8] sm:$0x4]
        %v816 = vld [vmem:[%s360 + $0xc] sm:$0x4]
        %v817 = vunpack.c.l.bf16 %v813
        %v818 = vunpack.c.l.bf16 %v814
        %v819 = vunpack.c.l.bf16 %v815
        %v820 = vunpack.c.l.bf16 %v816
        %v825 = vrot.slane %v818, 7
        %v826 = vsel %vm607, %v825, %v817
        %v827 = vrot.slane %v819, 6
        %v828 = vsel %vm708, %v827, %v826
        %v829 = vrot.slane %v820, 5
        %830 = vrot.lane.b32.xlu0 %v828, 80
        %v831 = vpop.permute.xlu0 %830
        %832 = vrot.lane.b32.xlu0 %v829, 80
        %v833 = vpop.permute.xlu0 %832
        %vm836 = vcmask 786053
        %837 = vst.msk [vmem:[#allocation2 - $0x5] sm:$0xe0] %vm836, %v831
        %vm838 = vcmask 778880
        %839 = vst.msk [vmem:[#allocation2 + $0x3] sm:$0x1] %vm838, %v833
        %840 = vrot.lane.b32.xlu0 %v828, 79
        %v841 = vpop.permute.xlu0 %840
        %842 = vrot.lane.b32.xlu0 %v829, 79
        %v843 = vpop.permute.xlu0 %842
        %846 = vst.msk [vmem:[#allocation2 - $0x1] sm:$0xe0] %vm836, %v841
        %847 = vst.msk [vmem:[#allocation2 + $0x7] sm:$0x1] %vm838, %v843
        %848 = vrot.lane.b32.xlu0 %v828, 78
        %v849 = vpop.permute.xlu0 %848
        %850 = vrot.lane.b32.xlu0 %v829, 78
        %v851 = vpop.permute.xlu0 %850
        %854 = vst.msk [vmem:[#allocation2 + $0x3] sm:$0xe0] %vm836, %v849
        %855 = vst.msk [vmem:[#allocation2 + $0xb] sm:$0x1] %vm838, %v851
        %856 = vrot.lane.b32.xlu0 %v828, 77
        %v857 = vpop.permute.xlu0 %856
        %858 = vrot.lane.b32.xlu0 %v829, 77
        %v859 = vpop.permute.xlu0 %858
        %862 = vst.msk [vmem:[#allocation2 + $0x7] sm:$0xe0] %vm836, %v857
        %863 = vst.msk [vmem:[#allocation2 + $0xf] sm:$0x1] %vm838, %v859
        %864 = vrot.lane.b32.xlu0 %v828, 76
        %v865 = vpop.permute.xlu0 %864
        %866 = vrot.lane.b32.xlu0 %v829, 76
        %v867 = vpop.permute.xlu0 %866
        %870 = vst.msk [vmem:[#allocation2 + $0xb] sm:$0xe0] %vm836, %v865
        %871 = vst.msk [vmem:[#allocation2 + $0x13] sm:$0x1] %vm838, %v867
        %872 = vrot.lane.b32.xlu0 %v828, 64
        %v873 = vpop.permute.xlu0 %872
        %874 = vrot.lane.b32.xlu0 %v829, 64
        %v875 = vpop.permute.xlu0 %874
        %vm878 = vcmask 654853
        %879 = vst.msk [vmem:[#allocation2 + $0xf] sm:$0xe0] %vm878, %v873
        %vm880 = vcmask 647680
        %881 = vst.msk [vmem:[#allocation2 + $0x17] sm:$0x1] %vm880, %v875
        %882 = vrot.lane.b32.xlu0 %v828, 63
        %v883 = vpop.permute.xlu0 %882
        %884 = vrot.lane.b32.xlu0 %v829, 63
        %v885 = vpop.permute.xlu0 %884
        %888 = vst.msk [vmem:[#allocation2 + $0x13] sm:$0xe0] %vm878, %v883
        %889 = vst.msk [vmem:[#allocation2 + $0x1b] sm:$0x1] %vm880, %v885
        %890 = vrot.lane.b32.xlu0 %v828, 62
        %v891 = vpop.permute.xlu0 %890
        %892 = vrot.lane.b32.xlu0 %v829, 62
        %v893 = vpop.permute.xlu0 %892
        %896 = vst.msk [vmem:[#allocation2 + $0x17] sm:$0xe0] %vm878, %v891
        %897 = vst.msk [vmem:[#allocation2 + $0x1f] sm:$0x1] %vm880, %v893
        %898 = vrot.lane.b32.xlu0 %v828, 61
        %v899 = vpop.permute.xlu0 %898
        %900 = vrot.lane.b32.xlu0 %v829, 61
        %v901 = vpop.permute.xlu0 %900
        %904 = vst.msk [vmem:[#allocation2 + $0x1b] sm:$0xe0] %vm878, %v899
        %905 = vst.msk [vmem:[#allocation2 + $0x23] sm:$0x1] %vm880, %v901
        %906 = vrot.lane.b32.xlu0 %v828, 60
        %v907 = vpop.permute.xlu0 %906
        %908 = vrot.lane.b32.xlu0 %v829, 60
        %v909 = vpop.permute.xlu0 %908
        %912 = vst.msk [vmem:[#allocation2 + $0x1f] sm:$0xe0] %vm878, %v907
        %913 = vst.msk [vmem:[#allocation2 + $0x27] sm:$0x1] %vm880, %v909
        %914 = vrot.lane.b32.xlu0 %v828, 48
        %v915 = vpop.permute.xlu0 %914
        %916 = vrot.lane.b32.xlu0 %v829, 48
        %v917 = vpop.permute.xlu0 %916
        %vm920 = vcmask 523653
        %921 = vst.msk [vmem:[#allocation2 + $0x23] sm:$0xe0] %vm920, %v915
        %vm922 = vcmask 516480
        %923 = vst.msk [vmem:[#allocation2 + $0x2b] sm:$0x1] %vm922, %v917
        %924 = vrot.lane.b32.xlu0 %v828, 47
        %v925 = vpop.permute.xlu0 %924
        %926 = vrot.lane.b32.xlu0 %v829, 47
        %v927 = vpop.permute.xlu0 %926
        %930 = vst.msk [vmem:[#allocation2 + $0x27] sm:$0xe0] %vm920, %v925
        %931 = vst.msk [vmem:[#allocation2 + $0x2f] sm:$0x1] %vm922, %v927
        %932 = vrot.lane.b32.xlu0 %v828, 46
        %v933 = vpop.permute.xlu0 %932
        %934 = vrot.lane.b32.xlu0 %v829, 46
        %v935 = vpop.permute.xlu0 %934
        %938 = vst.msk [vmem:[#allocation2 + $0x2b] sm:$0xe0] %vm920, %v933
        %939 = vst.msk [vmem:[#allocation2 + $0x33] sm:$0x1] %vm922, %v935
        %940 = vrot.lane.b32.xlu0 %v828, 45
        %v941 = vpop.permute.xlu0 %940
        %942 = vrot.lane.b32.xlu0 %v829, 45
        %v943 = vpop.permute.xlu0 %942
        %946 = vst.msk [vmem:[#allocation2 + $0x2f] sm:$0xe0] %vm920, %v941
        %947 = vst.msk [vmem:[#allocation2 + $0x37] sm:$0x1] %vm922, %v943
        %948 = vrot.lane.b32.xlu0 %v828, 44
        %v949 = vpop.permute.xlu0 %948
        %950 = vrot.lane.b32.xlu0 %v829, 44
        %v951 = vpop.permute.xlu0 %950
        %954 = vst.msk [vmem:[#allocation2 + $0x33] sm:$0xe0] %vm920, %v949
        %955 = vst.msk [vmem:[#allocation2 + $0x3b] sm:$0x1] %vm922, %v951
        %956 = vrot.lane.b32.xlu0 %v828, 32
        %v957 = vpop.permute.xlu0 %956
        %958 = vrot.lane.b32.xlu0 %v829, 32
        %v959 = vpop.permute.xlu0 %958
        %vm962 = vcmask 392453
        %963 = vst.msk [vmem:[#allocation2 + $0x37] sm:$0xe0] %vm962, %v957
        %vm964 = vcmask 385280
        %965 = vst.msk [vmem:[#allocation2 + $0x3f] sm:$0x1] %vm964, %v959
        %966 = vrot.lane.b32.xlu0 %v828, 31
        %v967 = vpop.permute.xlu0 %966
        %968 = vrot.lane.b32.xlu0 %v829, 31
        %v969 = vpop.permute.xlu0 %968
        %972 = vst.msk [vmem:[#allocation2 + $0x3b] sm:$0xe0] %vm962, %v967
        %973 = vst.msk [vmem:[#allocation2 + $0x43] sm:$0x1] %vm964, %v969
        %974 = vrot.lane.b32.xlu0 %v828, 30
        %v975 = vpop.permute.xlu0 %974
        %976 = vrot.lane.b32.xlu0 %v829, 30
        %v977 = vpop.permute.xlu0 %976
        %980 = vst.msk [vmem:[#allocation2 + $0x3f] sm:$0xe0] %vm962, %v975
        %981 = vst.msk [vmem:[#allocation2 + $0x47] sm:$0x1] %vm964, %v977
        %982 = vrot.lane.b32.xlu0 %v828, 29
        %v983 = vpop.permute.xlu0 %982
        %984 = vrot.lane.b32.xlu0 %v829, 29
        %v985 = vpop.permute.xlu0 %984
        %988 = vst.msk [vmem:[#allocation2 + $0x43] sm:$0xe0] %vm962, %v983
        %989 = vst.msk [vmem:[#allocation2 + $0x4b] sm:$0x1] %vm964, %v985
        %990 = vrot.lane.b32.xlu0 %v828, 28
        %v991 = vpop.permute.xlu0 %990
        %992 = vrot.lane.b32.xlu0 %v829, 28
        %v993 = vpop.permute.xlu0 %992
        %996 = vst.msk [vmem:[#allocation2 + $0x47] sm:$0xe0] %vm962, %v991
        %997 = vst.msk [vmem:[#allocation2 + $0x4f] sm:$0x1] %vm964, %v993
        %998 = vrot.lane.b32.xlu0 %v828, 16
        %v999 = vpop.permute.xlu0 %998
        %1000 = vrot.lane.b32.xlu0 %v829, 16
        %v1001 = vpop.permute.xlu0 %1000
        %vm1004 = vcmask 261253
        %1005 = vst.msk [vmem:[#allocation2 + $0x4b] sm:$0xe0] %vm1004, %v999
        %vm1006 = vcmask 254080
        %1007 = vst.msk [vmem:[#allocation2 + $0x53] sm:$0x1] %vm1006, %v1001
        %1008 = vrot.lane.b32.xlu0 %v828, 15
        %v1009 = vpop.permute.xlu0 %1008
        %1010 = vrot.lane.b32.xlu0 %v829, 15
        %v1011 = vpop.permute.xlu0 %1010
        %1014 = vst.msk [vmem:[#allocation2 + $0x4f] sm:$0xe0] %vm1004, %v1009
        %1015 = vst.msk [vmem:[#allocation2 + $0x57] sm:$0x1] %vm1006, %v1011
        %1016 = vrot.lane.b32.xlu0 %v828, 14
        %v1017 = vpop.permute.xlu0 %1016
        %1018 = vrot.lane.b32.xlu0 %v829, 14
        %v1019 = vpop.permute.xlu0 %1018
        %1022 = vst.msk [vmem:[#allocation2 + $0x53] sm:$0xe0] %vm1004, %v1017
        %1023 = vst.msk [vmem:[#allocation2 + $0x5b] sm:$0x1] %vm1006, %v1019
        %1024 = vrot.lane.b32.xlu0 %v828, 13
        %v1025 = vpop.permute.xlu0 %1024
        %1026 = vrot.lane.b32.xlu0 %v829, 13
        %v1027 = vpop.permute.xlu0 %1026
        %1030 = vst.msk [vmem:[#allocation2 + $0x57] sm:$0xe0] %vm1004, %v1025
        %1031 = vst.msk [vmem:[#allocation2 + $0x5f] sm:$0x1] %vm1006, %v1027
        %1032 = vrot.lane.b32.xlu0 %v828, 12
        %v1033 = vpop.permute.xlu0 %1032
        %1034 = vrot.lane.b32.xlu0 %v829, 12
        %v1035 = vpop.permute.xlu0 %1034
        %1038 = vst.msk [vmem:[#allocation2 + $0x5b] sm:$0xe0] %vm1004, %v1033
        %1039 = vst.msk [vmem:[#allocation2 + $0x63] sm:$0x1] %vm1006, %v1035
        %v1040 = vld [vmem:[%s360] sm:$0x8]
        %v1041 = vld [vmem:[%s360 + $0x4] sm:$0x8]
        %v1042 = vld [vmem:[%s360 + $0x8] sm:$0x8]
        %v1043 = vld [vmem:[%s360 + $0xc] sm:$0x8]
        %v1044 = vunpack.c.l.bf16 %v1040
        %v1045 = vunpack.c.l.bf16 %v1041
        %v1046 = vunpack.c.l.bf16 %v1042
        %v1047 = vunpack.c.l.bf16 %v1043
        %v1052 = vrot.slane %v1045, 7
        %v1053 = vsel %vm708, %v1052, %v1044
        %v1054 = vrot.slane %v1046, 6
        %v1055 = vrot.slane %v1047, 5
        %v1056 = vsel %vm424, %v1055, %v1054
        %1057 = vrot.lane.b32.xlu0 %v1053, 96
        %v1058 = vpop.permute.xlu0 %1057
        %1059 = vrot.lane.b32.xlu0 %v1056, 96
        %v1060 = vpop.permute.xlu0 %1059
        %vm1063 = vcmask 917254
        %1064 = vst.msk [vmem:[#allocation2 - $0x6] sm:$0xc0] %vm1063, %v1058
        %vm1065 = vcmask 911104
        %1066 = vst.msk [vmem:[#allocation2 + $0x2] sm:$0x3] %vm1065, %v1060
        %1067 = vrot.lane.b32.xlu0 %v1053, 95
        %v1068 = vpop.permute.xlu0 %1067
        %1069 = vrot.lane.b32.xlu0 %v1056, 95
        %v1070 = vpop.permute.xlu0 %1069
        %1073 = vst.msk [vmem:[#allocation2 - $0x2] sm:$0xc0] %vm1063, %v1068
        %1074 = vst.msk [vmem:[#allocation2 + $0x6] sm:$0x3] %vm1065, %v1070
        %1075 = vrot.lane.b32.xlu0 %v1053, 94
        %v1076 = vpop.permute.xlu0 %1075
        %1077 = vrot.lane.b32.xlu0 %v1056, 94
        %v1078 = vpop.permute.xlu0 %1077
        %1081 = vst.msk [vmem:[#allocation2 + $0x2] sm:$0xc0] %vm1063, %v1076
        %1082 = vst.msk [vmem:[#allocation2 + $0xa] sm:$0x3] %vm1065, %v1078
        %1083 = vrot.lane.b32.xlu0 %v1053, 93
        %v1084 = vpop.permute.xlu0 %1083
        %1085 = vrot.lane.b32.xlu0 %v1056, 93
        %v1086 = vpop.permute.xlu0 %1085
        %1089 = vst.msk [vmem:[#allocation2 + $0x6] sm:$0xc0] %vm1063, %v1084
        %1090 = vst.msk [vmem:[#allocation2 + $0xe] sm:$0x3] %vm1065, %v1086
        %1091 = vrot.lane.b32.xlu0 %v1053, 92
        %v1092 = vpop.permute.xlu0 %1091
        %1093 = vrot.lane.b32.xlu0 %v1056, 92
        %v1094 = vpop.permute.xlu0 %1093
        %1097 = vst.msk [vmem:[#allocation2 + $0xa] sm:$0xc0] %vm1063, %v1092
        %1098 = vst.msk [vmem:[#allocation2 + $0x12] sm:$0x3] %vm1065, %v1094
        %1099 = vrot.lane.b32.xlu0 %v1053, 80
        %v1100 = vpop.permute.xlu0 %1099
        %1101 = vrot.lane.b32.xlu0 %v1056, 80
        %v1102 = vpop.permute.xlu0 %1101
        %vm1105 = vcmask 786054
        %1106 = vst.msk [vmem:[#allocation2 + $0xe] sm:$0xc0] %vm1105, %v1100
        %vm1107 = vcmask 779904
        %1108 = vst.msk [vmem:[#allocation2 + $0x16] sm:$0x3] %vm1107, %v1102
        %1109 = vrot.lane.b32.xlu0 %v1053, 79
        %v1110 = vpop.permute.xlu0 %1109
        %1111 = vrot.lane.b32.xlu0 %v1056, 79
        %v1112 = vpop.permute.xlu0 %1111
        %1115 = vst.msk [vmem:[#allocation2 + $0x12] sm:$0xc0] %vm1105, %v1110
        %1116 = vst.msk [vmem:[#allocation2 + $0x1a] sm:$0x3] %vm1107, %v1112
        %1117 = vrot.lane.b32.xlu0 %v1053, 78
        %v1118 = vpop.permute.xlu0 %1117
        %1119 = vrot.lane.b32.xlu0 %v1056, 78
        %v1120 = vpop.permute.xlu0 %1119
        %1123 = vst.msk [vmem:[#allocation2 + $0x16] sm:$0xc0] %vm1105, %v1118
        %1124 = vst.msk [vmem:[#allocation2 + $0x1e] sm:$0x3] %vm1107, %v1120
        %1125 = vrot.lane.b32.xlu0 %v1053, 77
        %v1126 = vpop.permute.xlu0 %1125
        %1127 = vrot.lane.b32.xlu0 %v1056, 77
        %v1128 = vpop.permute.xlu0 %1127
        %1131 = vst.msk [vmem:[#allocation2 + $0x1a] sm:$0xc0] %vm1105, %v1126
        %1132 = vst.msk [vmem:[#allocation2 + $0x22] sm:$0x3] %vm1107, %v1128
        %1133 = vrot.lane.b32.xlu0 %v1053, 76
        %v1134 = vpop.permute.xlu0 %1133
        %1135 = vrot.lane.b32.xlu0 %v1056, 76
        %v1136 = vpop.permute.xlu0 %1135
        %1139 = vst.msk [vmem:[#allocation2 + $0x1e] sm:$0xc0] %vm1105, %v1134
        %1140 = vst.msk [vmem:[#allocation2 + $0x26] sm:$0x3] %vm1107, %v1136
        %1141 = vrot.lane.b32.xlu0 %v1053, 64
        %v1142 = vpop.permute.xlu0 %1141
        %1143 = vrot.lane.b32.xlu0 %v1056, 64
        %v1144 = vpop.permute.xlu0 %1143
        %vm1147 = vcmask 654854
        %1148 = vst.msk [vmem:[#allocation2 + $0x22] sm:$0xc0] %vm1147, %v1142
        %vm1149 = vcmask 648704
        %1150 = vst.msk [vmem:[#allocation2 + $0x2a] sm:$0x3] %vm1149, %v1144
        %1151 = vrot.lane.b32.xlu0 %v1053, 63
        %v1152 = vpop.permute.xlu0 %1151
        %1153 = vrot.lane.b32.xlu0 %v1056, 63
        %v1154 = vpop.permute.xlu0 %1153
        %1157 = vst.msk [vmem:[#allocation2 + $0x26] sm:$0xc0] %vm1147, %v1152
        %1158 = vst.msk [vmem:[#allocation2 + $0x2e] sm:$0x3] %vm1149, %v1154
        %1159 = vrot.lane.b32.xlu0 %v1053, 62
        %v1160 = vpop.permute.xlu0 %1159
        %1161 = vrot.lane.b32.xlu0 %v1056, 62
        %v1162 = vpop.permute.xlu0 %1161
        %1165 = vst.msk [vmem:[#allocation2 + $0x2a] sm:$0xc0] %vm1147, %v1160
        %1166 = vst.msk [vmem:[#allocation2 + $0x32] sm:$0x3] %vm1149, %v1162
        %1167 = vrot.lane.b32.xlu0 %v1053, 61
        %v1168 = vpop.permute.xlu0 %1167
        %1169 = vrot.lane.b32.xlu0 %v1056, 61
        %v1170 = vpop.permute.xlu0 %1169
        %1173 = vst.msk [vmem:[#allocation2 + $0x2e] sm:$0xc0] %vm1147, %v1168
        %1174 = vst.msk [vmem:[#allocation2 + $0x36] sm:$0x3] %vm1149, %v1170
        %1175 = vrot.lane.b32.xlu0 %v1053, 60
        %v1176 = vpop.permute.xlu0 %1175
        %1177 = vrot.lane.b32.xlu0 %v1056, 60
        %v1178 = vpop.permute.xlu0 %1177
        %1181 = vst.msk [vmem:[#allocation2 + $0x32] sm:$0xc0] %vm1147, %v1176
        %1182 = vst.msk [vmem:[#allocation2 + $0x3a] sm:$0x3] %vm1149, %v1178
        %1183 = vrot.lane.b32.xlu0 %v1053, 48
        %v1184 = vpop.permute.xlu0 %1183
        %1185 = vrot.lane.b32.xlu0 %v1056, 48
        %v1186 = vpop.permute.xlu0 %1185
        %vm1189 = vcmask 523654
        %1190 = vst.msk [vmem:[#allocation2 + $0x36] sm:$0xc0] %vm1189, %v1184
        %vm1191 = vcmask 517504
        %1192 = vst.msk [vmem:[#allocation2 + $0x3e] sm:$0x3] %vm1191, %v1186
        %1193 = vrot.lane.b32.xlu0 %v1053, 47
        %v1194 = vpop.permute.xlu0 %1193
        %1195 = vrot.lane.b32.xlu0 %v1056, 47
        %v1196 = vpop.permute.xlu0 %1195
        %1199 = vst.msk [vmem:[#allocation2 + $0x3a] sm:$0xc0] %vm1189, %v1194
        %1200 = vst.msk [vmem:[#allocation2 + $0x42] sm:$0x3] %vm1191, %v1196
        %1201 = vrot.lane.b32.xlu0 %v1053, 46
        %v1202 = vpop.permute.xlu0 %1201
        %1203 = vrot.lane.b32.xlu0 %v1056, 46
        %v1204 = vpop.permute.xlu0 %1203
        %1207 = vst.msk [vmem:[#allocation2 + $0x3e] sm:$0xc0] %vm1189, %v1202
        %1208 = vst.msk [vmem:[#allocation2 + $0x46] sm:$0x3] %vm1191, %v1204
        %1209 = vrot.lane.b32.xlu0 %v1053, 45
        %v1210 = vpop.permute.xlu0 %1209
        %1211 = vrot.lane.b32.xlu0 %v1056, 45
        %v1212 = vpop.permute.xlu0 %1211
        %1215 = vst.msk [vmem:[#allocation2 + $0x42] sm:$0xc0] %vm1189, %v1210
        %1216 = vst.msk [vmem:[#allocation2 + $0x4a] sm:$0x3] %vm1191, %v1212
        %1217 = vrot.lane.b32.xlu0 %v1053, 44
        %v1218 = vpop.permute.xlu0 %1217
        %1219 = vrot.lane.b32.xlu0 %v1056, 44
        %v1220 = vpop.permute.xlu0 %1219
        %1223 = vst.msk [vmem:[#allocation2 + $0x46] sm:$0xc0] %vm1189, %v1218
        %1224 = vst.msk [vmem:[#allocation2 + $0x4e] sm:$0x3] %vm1191, %v1220
        %1225 = vrot.lane.b32.xlu0 %v1053, 32
        %v1226 = vpop.permute.xlu0 %1225
        %1227 = vrot.lane.b32.xlu0 %v1056, 32
        %v1228 = vpop.permute.xlu0 %1227
        %vm1231 = vcmask 392454
        %1232 = vst.msk [vmem:[#allocation2 + $0x4a] sm:$0xc0] %vm1231, %v1226
        %vm1233 = vcmask 386304
        %1234 = vst.msk [vmem:[#allocation2 + $0x52] sm:$0x3] %vm1233, %v1228
        %1235 = vrot.lane.b32.xlu0 %v1053, 31
        %v1236 = vpop.permute.xlu0 %1235
        %1237 = vrot.lane.b32.xlu0 %v1056, 31
        %v1238 = vpop.permute.xlu0 %1237
        %1241 = vst.msk [vmem:[#allocation2 + $0x4e] sm:$0xc0] %vm1231, %v1236
        %1242 = vst.msk [vmem:[#allocation2 + $0x56] sm:$0x3] %vm1233, %v1238
        %1243 = vrot.lane.b32.xlu0 %v1053, 30
        %v1244 = vpop.permute.xlu0 %1243
        %1245 = vrot.lane.b32.xlu0 %v1056, 30
        %v1246 = vpop.permute.xlu0 %1245
        %1249 = vst.msk [vmem:[#allocation2 + $0x52] sm:$0xc0] %vm1231, %v1244
        %1250 = vst.msk [vmem:[#allocation2 + $0x5a] sm:$0x3] %vm1233, %v1246
        %1251 = vrot.lane.b32.xlu0 %v1053, 29
        %v1252 = vpop.permute.xlu0 %1251
        %1253 = vrot.lane.b32.xlu0 %v1056, 29
        %v1254 = vpop.permute.xlu0 %1253
        %1257 = vst.msk [vmem:[#allocation2 + $0x56] sm:$0xc0] %vm1231, %v1252
        %1258 = vst.msk [vmem:[#allocation2 + $0x5e] sm:$0x3] %vm1233, %v1254
        %1259 = vrot.lane.b32.xlu0 %v1053, 28
        %v1260 = vpop.permute.xlu0 %1259
        %1261 = vrot.lane.b32.xlu0 %v1056, 28
        %v1262 = vpop.permute.xlu0 %1261
        %1265 = vst.msk [vmem:[#allocation2 + $0x5a] sm:$0xc0] %vm1231, %v1260
        %1266 = vst.msk [vmem:[#allocation2 + $0x62] sm:$0x3] %vm1233, %v1262
        %v1267 = vld [vmem:[%s360] sm:$0x8]
        %v1268 = vld [vmem:[%s360 + $0x4] sm:$0x8]
        %v1269 = vld [vmem:[%s360 + $0x8] sm:$0x8]
        %v1270 = vld [vmem:[%s360 + $0xc] sm:$0x8]
        %v1271 = vunpack.c.l.bf16 %v1267
        %v1272 = vunpack.c.l.bf16 %v1268
        %v1273 = vunpack.c.l.bf16 %v1269
        %v1274 = vunpack.c.l.bf16 %v1270
        %v1279 = vrot.slane %v1272, 7
        %v1280 = vrot.slane %v1273, 6
        %v1281 = vsel %vm424, %v1280, %v1279
        %v1282 = vrot.slane %v1274, 5
        %v1283 = vsel %vm427, %v1282, %v1281
        %1284 = vrot.lane.b32.xlu0 %v1271, 112
        %v1285 = vpop.permute.xlu0 %1284
        %1286 = vrot.lane.b32.xlu0 %v1283, 112
        %v1287 = vpop.permute.xlu0 %1286
        %vm1290 = vcmask 1048455
        %1291 = vst.msk [vmem:[#allocation2 - $0x7] sm:$0x80] %vm1290, %v1285
        %vm1292 = vcmask 1043328
        %1293 = vst.msk [vmem:[#allocation2 + $0x1] sm:$0x7] %vm1292, %v1287
        %1294 = vrot.lane.b32.xlu0 %v1271, 111
        %v1295 = vpop.permute.xlu0 %1294
        %1296 = vrot.lane.b32.xlu0 %v1283, 111
        %v1297 = vpop.permute.xlu0 %1296
        %1300 = vst.msk [vmem:[#allocation2 - $0x3] sm:$0x80] %vm1290, %v1295
        %1301 = vst.msk [vmem:[#allocation2 + $0x5] sm:$0x7] %vm1292, %v1297
        %1302 = vrot.lane.b32.xlu0 %v1271, 110
        %v1303 = vpop.permute.xlu0 %1302
        %1304 = vrot.lane.b32.xlu0 %v1283, 110
        %v1305 = vpop.permute.xlu0 %1304
        %1308 = vst.msk [vmem:[#allocation2 + $0x1] sm:$0x80] %vm1290, %v1303
        %1309 = vst.msk [vmem:[#allocation2 + $0x9] sm:$0x7] %vm1292, %v1305
        %1310 = vrot.lane.b32.xlu0 %v1271, 109
        %v1311 = vpop.permute.xlu0 %1310
        %1312 = vrot.lane.b32.xlu0 %v1283, 109
        %v1313 = vpop.permute.xlu0 %1312
        %1316 = vst.msk [vmem:[#allocation2 + $0x5] sm:$0x80] %vm1290, %v1311
        %1317 = vst.msk [vmem:[#allocation2 + $0xd] sm:$0x7] %vm1292, %v1313
        %1318 = vrot.lane.b32.xlu0 %v1271, 108
        %v1319 = vpop.permute.xlu0 %1318
        %1320 = vrot.lane.b32.xlu0 %v1283, 108
        %v1321 = vpop.permute.xlu0 %1320
        %1324 = vst.msk [vmem:[#allocation2 + $0x9] sm:$0x80] %vm1290, %v1319
        %1325 = vst.msk [vmem:[#allocation2 + $0x11] sm:$0x7] %vm1292, %v1321
        %1326 = vrot.lane.b32.xlu0 %v1271, 96
        %v1327 = vpop.permute.xlu0 %1326
        %1328 = vrot.lane.b32.xlu0 %v1283, 96
        %v1329 = vpop.permute.xlu0 %1328
        %vm1332 = vcmask 917255
        %1333 = vst.msk [vmem:[#allocation2 + $0xd] sm:$0x80] %vm1332, %v1327
        %vm1334 = vcmask 912128
        %1335 = vst.msk [vmem:[#allocation2 + $0x15] sm:$0x7] %vm1334, %v1329
        %1336 = vrot.lane.b32.xlu0 %v1271, 95
        %v1337 = vpop.permute.xlu0 %1336
        %1338 = vrot.lane.b32.xlu0 %v1283, 95
        %v1339 = vpop.permute.xlu0 %1338
        %1342 = vst.msk [vmem:[#allocation2 + $0x11] sm:$0x80] %vm1332, %v1337
        %1343 = vst.msk [vmem:[#allocation2 + $0x19] sm:$0x7] %vm1334, %v1339
        %1344 = vrot.lane.b32.xlu0 %v1271, 94
        %v1345 = vpop.permute.xlu0 %1344
        %1346 = vrot.lane.b32.xlu0 %v1283, 94
        %v1347 = vpop.permute.xlu0 %1346
        %1350 = vst.msk [vmem:[#allocation2 + $0x15] sm:$0x80] %vm1332, %v1345
        %1351 = vst.msk [vmem:[#allocation2 + $0x1d] sm:$0x7] %vm1334, %v1347
        %1352 = vrot.lane.b32.xlu0 %v1271, 93
        %v1353 = vpop.permute.xlu0 %1352
        %1354 = vrot.lane.b32.xlu0 %v1283, 93
        %v1355 = vpop.permute.xlu0 %1354
        %1358 = vst.msk [vmem:[#allocation2 + $0x19] sm:$0x80] %vm1332, %v1353
        %1359 = vst.msk [vmem:[#allocation2 + $0x21] sm:$0x7] %vm1334, %v1355
        %1360 = vrot.lane.b32.xlu0 %v1271, 92
        %v1361 = vpop.permute.xlu0 %1360
        %1362 = vrot.lane.b32.xlu0 %v1283, 92
        %v1363 = vpop.permute.xlu0 %1362
        %1366 = vst.msk [vmem:[#allocation2 + $0x1d] sm:$0x80] %vm1332, %v1361
        %1367 = vst.msk [vmem:[#allocation2 + $0x25] sm:$0x7] %vm1334, %v1363
        %1368 = vrot.lane.b32.xlu0 %v1271, 80
        %v1369 = vpop.permute.xlu0 %1368
        %1370 = vrot.lane.b32.xlu0 %v1283, 80
        %v1371 = vpop.permute.xlu0 %1370
        %vm1374 = vcmask 786055
        %1375 = vst.msk [vmem:[#allocation2 + $0x21] sm:$0x80] %vm1374, %v1369
        %vm1376 = vcmask 780928
        %1377 = vst.msk [vmem:[#allocation2 + $0x29] sm:$0x7] %vm1376, %v1371
        %1378 = vrot.lane.b32.xlu0 %v1271, 79
        %v1379 = vpop.permute.xlu0 %1378
        %1380 = vrot.lane.b32.xlu0 %v1283, 79
        %v1381 = vpop.permute.xlu0 %1380
        %1384 = vst.msk [vmem:[#allocation2 + $0x25] sm:$0x80] %vm1374, %v1379
        %1385 = vst.msk [vmem:[#allocation2 + $0x2d] sm:$0x7] %vm1376, %v1381
        %1386 = vrot.lane.b32.xlu0 %v1271, 78
        %v1387 = vpop.permute.xlu0 %1386
        %1388 = vrot.lane.b32.xlu0 %v1283, 78
        %v1389 = vpop.permute.xlu0 %1388
        %1392 = vst.msk [vmem:[#allocation2 + $0x29] sm:$0x80] %vm1374, %v1387
        %1393 = vst.msk [vmem:[#allocation2 + $0x31] sm:$0x7] %vm1376, %v1389
        %1394 = vrot.lane.b32.xlu0 %v1271, 77
        %v1395 = vpop.permute.xlu0 %1394
        %1396 = vrot.lane.b32.xlu0 %v1283, 77
        %v1397 = vpop.permute.xlu0 %1396
        %1400 = vst.msk [vmem:[#allocation2 + $0x2d] sm:$0x80] %vm1374, %v1395
        %1401 = vst.msk [vmem:[#allocation2 + $0x35] sm:$0x7] %vm1376, %v1397
        %1402 = vrot.lane.b32.xlu0 %v1271, 76
        %v1403 = vpop.permute.xlu0 %1402
        %1404 = vrot.lane.b32.xlu0 %v1283, 76
        %v1405 = vpop.permute.xlu0 %1404
        %1408 = vst.msk [vmem:[#allocation2 + $0x31] sm:$0x80] %vm1374, %v1403
        %1409 = vst.msk [vmem:[#allocation2 + $0x39] sm:$0x7] %vm1376, %v1405
        %1410 = vrot.lane.b32.xlu0 %v1271, 64
        %v1411 = vpop.permute.xlu0 %1410
        %1412 = vrot.lane.b32.xlu0 %v1283, 64
        %v1413 = vpop.permute.xlu0 %1412
        %vm1416 = vcmask 654855
        %1417 = vst.msk [vmem:[#allocation2 + $0x35] sm:$0x80] %vm1416, %v1411
        %vm1418 = vcmask 649728
        %1419 = vst.msk [vmem:[#allocation2 + $0x3d] sm:$0x7] %vm1418, %v1413
        %1420 = vrot.lane.b32.xlu0 %v1271, 63
        %v1421 = vpop.permute.xlu0 %1420
        %1422 = vrot.lane.b32.xlu0 %v1283, 63
        %v1423 = vpop.permute.xlu0 %1422
        %1426 = vst.msk [vmem:[#allocation2 + $0x39] sm:$0x80] %vm1416, %v1421
        %1427 = vst.msk [vmem:[#allocation2 + $0x41] sm:$0x7] %vm1418, %v1423
        %1428 = vrot.lane.b32.xlu0 %v1271, 62
        %v1429 = vpop.permute.xlu0 %1428
        %1430 = vrot.lane.b32.xlu0 %v1283, 62
        %v1431 = vpop.permute.xlu0 %1430
        %1434 = vst.msk [vmem:[#allocation2 + $0x3d] sm:$0x80] %vm1416, %v1429
        %1435 = vst.msk [vmem:[#allocation2 + $0x45] sm:$0x7] %vm1418, %v1431
        %1436 = vrot.lane.b32.xlu0 %v1271, 61
        %v1437 = vpop.permute.xlu0 %1436
        %1438 = vrot.lane.b32.xlu0 %v1283, 61
        %v1439 = vpop.permute.xlu0 %1438
        %1442 = vst.msk [vmem:[#allocation2 + $0x41] sm:$0x80] %vm1416, %v1437
        %1443 = vst.msk [vmem:[#allocation2 + $0x49] sm:$0x7] %vm1418, %v1439
        %1444 = vrot.lane.b32.xlu0 %v1271, 60
        %v1445 = vpop.permute.xlu0 %1444
        %1446 = vrot.lane.b32.xlu0 %v1283, 60
        %v1447 = vpop.permute.xlu0 %1446
        %1450 = vst.msk [vmem:[#allocation2 + $0x45] sm:$0x80] %vm1416, %v1445
        %1451 = vst.msk [vmem:[#allocation2 + $0x4d] sm:$0x7] %vm1418, %v1447
        %1452 = vrot.lane.b32.xlu0 %v1271, 48
        %v1453 = vpop.permute.xlu0 %1452
        %1454 = vrot.lane.b32.xlu0 %v1283, 48
        %v1455 = vpop.permute.xlu0 %1454
        %vm1458 = vcmask 523655
        %1459 = vst.msk [vmem:[#allocation2 + $0x49] sm:$0x80] %vm1458, %v1453
        %vm1460 = vcmask 518528
        %1461 = vst.msk [vmem:[#allocation2 + $0x51] sm:$0x7] %vm1460, %v1455
        %1462 = vrot.lane.b32.xlu0 %v1271, 47
        %v1463 = vpop.permute.xlu0 %1462
        %1464 = vrot.lane.b32.xlu0 %v1283, 47
        %v1465 = vpop.permute.xlu0 %1464
        %1468 = vst.msk [vmem:[#allocation2 + $0x4d] sm:$0x80] %vm1458, %v1463
        %1469 = vst.msk [vmem:[#allocation2 + $0x55] sm:$0x7] %vm1460, %v1465
        %1470 = vrot.lane.b32.xlu0 %v1271, 46
        %v1471 = vpop.permute.xlu0 %1470
        %1472 = vrot.lane.b32.xlu0 %v1283, 46
        %v1473 = vpop.permute.xlu0 %1472
        %1476 = vst.msk [vmem:[#allocation2 + $0x51] sm:$0x80] %vm1458, %v1471
        %1477 = vst.msk [vmem:[#allocation2 + $0x59] sm:$0x7] %vm1460, %v1473
        %1478 = vrot.lane.b32.xlu0 %v1271, 45
        %v1479 = vpop.permute.xlu0 %1478
        %1480 = vrot.lane.b32.xlu0 %v1283, 45
        %v1481 = vpop.permute.xlu0 %1480
        %1484 = vst.msk [vmem:[#allocation2 + $0x55] sm:$0x80] %vm1458, %v1479
        %1485 = vst.msk [vmem:[#allocation2 + $0x5d] sm:$0x7] %vm1460, %v1481
        %1486 = vrot.lane.b32.xlu0 %v1271, 44
        %v1487 = vpop.permute.xlu0 %1486
        %1488 = vrot.lane.b32.xlu0 %v1283, 44
        %v1489 = vpop.permute.xlu0 %1488
        %1492 = vst.msk [vmem:[#allocation2 + $0x59] sm:$0x80] %vm1458, %v1487
        %1493 = vst.msk [vmem:[#allocation2 + $0x61] sm:$0x7] %vm1460, %v1489
        %v1494 = vld [vmem:[%s367] sm:$0x1]
        %v1495 = vld [vmem:[%s367 + $0x4] sm:$0x1]
        %v1496 = vld [vmem:[%s367 + $0x8] sm:$0x1]
        %v1497 = vld [vmem:[%s367 + $0xc] sm:$0x1]
        %v1498 = vunpack.c.l.bf16 %v1494
        %v1499 = vunpack.c.l.bf16 %v1495
        %v1500 = vunpack.c.l.bf16 %v1496
        %v1501 = vunpack.c.l.bf16 %v1497
        %v1506 = vrot.slane %v1499, 7
        %v1507 = vsel %vm424, %v1506, %v1498
        %v1508 = vrot.slane %v1500, 6
        %v1509 = vsel %vm427, %v1508, %v1507
        %v1510 = vrot.slane %v1501, 5
        %v1511 = vsel %vm430, %v1510, %v1509
        %1512 = vrot.lane.b32.xlu0 %v1511, 112
        %v1513 = vpop.permute.xlu0 %1512
        %vm1515 = vcmask 1044352
        %1516 = vst.msk [vmem:[#allocation2 + $0x14] sm:$0xf] %vm1515, %v1513
        %1517 = vrot.lane.b32.xlu0 %v1511, 111
        %v1518 = vpop.permute.xlu0 %1517
        %1520 = vst.msk [vmem:[#allocation2 + $0x18] sm:$0xf] %vm1515, %v1518
        %1521 = vrot.lane.b32.xlu0 %v1511, 110
        %v1522 = vpop.permute.xlu0 %1521
        %1524 = vst.msk [vmem:[#allocation2 + $0x1c] sm:$0xf] %vm1515, %v1522
        %1525 = vrot.lane.b32.xlu0 %v1511, 109
        %v1526 = vpop.permute.xlu0 %1525
        %1528 = vst.msk [vmem:[#allocation2 + $0x20] sm:$0xf] %vm1515, %v1526
        %1529 = vrot.lane.b32.xlu0 %v1511, 108
        %v1530 = vpop.permute.xlu0 %1529
        %1532 = vst.msk [vmem:[#allocation2 + $0x24] sm:$0xf] %vm1515, %v1530
        %1533 = vrot.lane.b32.xlu0 %v1511, 96
        %v1534 = vpop.permute.xlu0 %1533
        %vm1536 = vcmask 913152
        %1537 = vst.msk [vmem:[#allocation2 + $0x28] sm:$0xf] %vm1536, %v1534
        %1538 = vrot.lane.b32.xlu0 %v1511, 95
        %v1539 = vpop.permute.xlu0 %1538
        %1541 = vst.msk [vmem:[#allocation2 + $0x2c] sm:$0xf] %vm1536, %v1539
        %1542 = vrot.lane.b32.xlu0 %v1511, 94
        %v1543 = vpop.permute.xlu0 %1542
        %1545 = vst.msk [vmem:[#allocation2 + $0x30] sm:$0xf] %vm1536, %v1543
        %1546 = vrot.lane.b32.xlu0 %v1511, 93
        %v1547 = vpop.permute.xlu0 %1546
        %1549 = vst.msk [vmem:[#allocation2 + $0x34] sm:$0xf] %vm1536, %v1547
        %1550 = vrot.lane.b32.xlu0 %v1511, 92
        %v1551 = vpop.permute.xlu0 %1550
        %1553 = vst.msk [vmem:[#allocation2 + $0x38] sm:$0xf] %vm1536, %v1551
        %1554 = vrot.lane.b32.xlu0 %v1511, 80
        %v1555 = vpop.permute.xlu0 %1554
        %vm1557 = vcmask 781952
        %1558 = vst.msk [vmem:[#allocation2 + $0x3c] sm:$0xf] %vm1557, %v1555
        %1559 = vrot.lane.b32.xlu0 %v1511, 79
        %v1560 = vpop.permute.xlu0 %1559
        %1562 = vst.msk [vmem:[#allocation2 + $0x40] sm:$0xf] %vm1557, %v1560
        %1563 = vrot.lane.b32.xlu0 %v1511, 78
        %v1564 = vpop.permute.xlu0 %1563
        %1566 = vst.msk [vmem:[#allocation2 + $0x44] sm:$0xf] %vm1557, %v1564
        %1567 = vrot.lane.b32.xlu0 %v1511, 77
        %v1568 = vpop.permute.xlu0 %1567
        %1570 = vst.msk [vmem:[#allocation2 + $0x48] sm:$0xf] %vm1557, %v1568
        %1571 = vrot.lane.b32.xlu0 %v1511, 76
        %v1572 = vpop.permute.xlu0 %1571
        %1574 = vst.msk [vmem:[#allocation2 + $0x4c] sm:$0xf] %vm1557, %v1572
        %1575 = vrot.lane.b32.xlu0 %v1511, 64
        %v1576 = vpop.permute.xlu0 %1575
        %vm1578 = vcmask 650752
        %1579 = vst.msk [vmem:[#allocation2 + $0x50] sm:$0xf] %vm1578, %v1576
        %1580 = vrot.lane.b32.xlu0 %v1511, 63
        %v1581 = vpop.permute.xlu0 %1580
        %1583 = vst.msk [vmem:[#allocation2 + $0x54] sm:$0xf] %vm1578, %v1581
        %1584 = vrot.lane.b32.xlu0 %v1511, 62
        %v1585 = vpop.permute.xlu0 %1584
        %1587 = vst.msk [vmem:[#allocation2 + $0x58] sm:$0xf] %vm1578, %v1585
        %1588 = vrot.lane.b32.xlu0 %v1511, 61
        %v1589 = vpop.permute.xlu0 %1588
        %1591 = vst.msk [vmem:[#allocation2 + $0x5c] sm:$0xf] %vm1578, %v1589
        %1592 = vrot.lane.b32.xlu0 %v1511, 60
        %v1593 = vpop.permute.xlu0 %1592
        %1595 = vst.msk [vmem:[#allocation2 + $0x60] sm:$0xf] %vm1578, %v1593
        %v1596 = vld [vmem:[%s367] sm:$0x1]
        %v1597 = vld [vmem:[%s367 + $0x4] sm:$0x1]
        %v1598 = vld [vmem:[%s367 + $0x8] sm:$0x1]
        %v1599 = vld [vmem:[%s367 + $0xc] sm:$0x1]
        %v1600 = vunpack.c.l.bf16 %v1596
        %v1601 = vunpack.c.l.bf16 %v1597
        %v1602 = vunpack.c.l.bf16 %v1598
        %v1603 = vunpack.c.l.bf16 %v1599
        %v1608 = vrot.slane %v1601, 7
        %v1609 = vsel %vm427, %v1608, %v1600
        %v1610 = vrot.slane %v1602, 6
        %v1611 = vsel %vm430, %v1610, %v1609
        %v1612 = vrot.slane %v1603, 5
        %v1613 = vsel %vm468, %v1612, %v1611
        %1614 = vrot.lane.b32.xlu0 %v1613, 112
        %v1615 = vpop.permute.xlu0 %1614
        %vm1617 = vcmask 1045377
        %1618 = vst.msk [vmem:[#allocation2 + $0x27] sm:$0x1e] %vm1617, %v1615
        %1619 = vrot.lane.b32.xlu0 %v1613, 111
        %v1620 = vpop.permute.xlu0 %1619
        %1622 = vst.msk [vmem:[#allocation2 + $0x2b] sm:$0x1e] %vm1617, %v1620
        %1623 = vrot.lane.b32.xlu0 %v1613, 110
        %v1624 = vpop.permute.xlu0 %1623
        %1626 = vst.msk [vmem:[#allocation2 + $0x2f] sm:$0x1e] %vm1617, %v1624
        %1627 = vrot.lane.b32.xlu0 %v1613, 109
        %v1628 = vpop.permute.xlu0 %1627
        %1630 = vst.msk [vmem:[#allocation2 + $0x33] sm:$0x1e] %vm1617, %v1628
        %1631 = vrot.lane.b32.xlu0 %v1613, 108
        %v1632 = vpop.permute.xlu0 %1631
        %1634 = vst.msk [vmem:[#allocation2 + $0x37] sm:$0x1e] %vm1617, %v1632
        %1635 = vrot.lane.b32.xlu0 %v1613, 96
        %v1636 = vpop.permute.xlu0 %1635
        %vm1638 = vcmask 914177
        %1639 = vst.msk [vmem:[#allocation2 + $0x3b] sm:$0x1e] %vm1638, %v1636
        %1640 = vrot.lane.b32.xlu0 %v1613, 95
        %v1641 = vpop.permute.xlu0 %1640
        %1643 = vst.msk [vmem:[#allocation2 + $0x3f] sm:$0x1e] %vm1638, %v1641
        %1644 = vrot.lane.b32.xlu0 %v1613, 94
        %v1645 = vpop.permute.xlu0 %1644
        %1647 = vst.msk [vmem:[#allocation2 + $0x43] sm:$0x1e] %vm1638, %v1645
        %1648 = vrot.lane.b32.xlu0 %v1613, 93
        %v1649 = vpop.permute.xlu0 %1648
        %1651 = vst.msk [vmem:[#allocation2 + $0x47] sm:$0x1e] %vm1638, %v1649
        %1652 = vrot.lane.b32.xlu0 %v1613, 92
        %v1653 = vpop.permute.xlu0 %1652
        %1655 = vst.msk [vmem:[#allocation2 + $0x4b] sm:$0x1e] %vm1638, %v1653
        %1656 = vrot.lane.b32.xlu0 %v1613, 80
        %v1657 = vpop.permute.xlu0 %1656
        %vm1659 = vcmask 782977
        %1660 = vst.msk [vmem:[#allocation2 + $0x4f] sm:$0x1e] %vm1659, %v1657
        %1661 = vrot.lane.b32.xlu0 %v1613, 79
        %v1662 = vpop.permute.xlu0 %1661
        %1664 = vst.msk [vmem:[#allocation2 + $0x53] sm:$0x1e] %vm1659, %v1662
        %1665 = vrot.lane.b32.xlu0 %v1613, 78
        %v1666 = vpop.permute.xlu0 %1665
        %1668 = vst.msk [vmem:[#allocation2 + $0x57] sm:$0x1e] %vm1659, %v1666
        %1669 = vrot.lane.b32.xlu0 %v1613, 77
        %v1670 = vpop.permute.xlu0 %1669
        %1672 = vst.msk [vmem:[#allocation2 + $0x5b] sm:$0x1e] %vm1659, %v1670
        %1673 = vrot.lane.b32.xlu0 %v1613, 76
        %v1674 = vpop.permute.xlu0 %1673
        %1676 = vst.msk [vmem:[#allocation2 + $0x5f] sm:$0x1e] %vm1659, %v1674
        %v1677 = vld [vmem:[%s367] sm:$0x2]
        %v1678 = vld [vmem:[%s367 + $0x4] sm:$0x2]
        %v1679 = vld [vmem:[%s367 + $0x8] sm:$0x2]
        %v1680 = vld [vmem:[%s367 + $0xc] sm:$0x2]
        %v1681 = vunpack.c.l.bf16 %v1677
        %v1682 = vunpack.c.l.bf16 %v1678
        %v1683 = vunpack.c.l.bf16 %v1679
        %v1684 = vunpack.c.l.bf16 %v1680
        %v1689 = vrot.slane %v1682, 7
        %v1690 = vsel %vm430, %v1689, %v1681
        %v1691 = vrot.slane %v1683, 6
        %v1692 = vsel %vm468, %v1691, %v1690
        %v1693 = vrot.slane %v1684, 5
        %v1694 = vsel %vm527, %v1693, %v1692
        %1695 = vrot.lane.b32.xlu0 %v1694, 112
        %v1696 = vpop.permute.xlu0 %1695
        %vm1698 = vcmask 1046402
        %1699 = vst.msk [vmem:[#allocation2 + $0x3a] sm:$0x3c] %vm1698, %v1696
        %1700 = vrot.lane.b32.xlu0 %v1694, 111
        %v1701 = vpop.permute.xlu0 %1700
        %1703 = vst.msk [vmem:[#allocation2 + $0x3e] sm:$0x3c] %vm1698, %v1701
        %1704 = vrot.lane.b32.xlu0 %v1694, 110
        %v1705 = vpop.permute.xlu0 %1704
        %1707 = vst.msk [vmem:[#allocation2 + $0x42] sm:$0x3c] %vm1698, %v1705
        %1708 = vrot.lane.b32.xlu0 %v1694, 109
        %v1709 = vpop.permute.xlu0 %1708
        %1711 = vst.msk [vmem:[#allocation2 + $0x46] sm:$0x3c] %vm1698, %v1709
        %1712 = vrot.lane.b32.xlu0 %v1694, 108
        %v1713 = vpop.permute.xlu0 %1712
        %1715 = vst.msk [vmem:[#allocation2 + $0x4a] sm:$0x3c] %vm1698, %v1713
        %1716 = vrot.lane.b32.xlu0 %v1694, 96
        %v1717 = vpop.permute.xlu0 %1716
        %vm1719 = vcmask 915202
        %1720 = vst.msk [vmem:[#allocation2 + $0x4e] sm:$0x3c] %vm1719, %v1717
        %1721 = vrot.lane.b32.xlu0 %v1694, 95
        %v1722 = vpop.permute.xlu0 %1721
        %1724 = vst.msk [vmem:[#allocation2 + $0x52] sm:$0x3c] %vm1719, %v1722
        %1725 = vrot.lane.b32.xlu0 %v1694, 94
        %v1726 = vpop.permute.xlu0 %1725
        %1728 = vst.msk [vmem:[#allocation2 + $0x56] sm:$0x3c] %vm1719, %v1726
        %1729 = vrot.lane.b32.xlu0 %v1694, 93
        %v1730 = vpop.permute.xlu0 %1729
        %1732 = vst.msk [vmem:[#allocation2 + $0x5a] sm:$0x3c] %vm1719, %v1730
        %1733 = vrot.lane.b32.xlu0 %v1694, 92
        %v1734 = vpop.permute.xlu0 %1733
        %1736 = vst.msk [vmem:[#allocation2 + $0x5e] sm:$0x3c] %vm1719, %v1734
        %v1737 = vld [vmem:[%s367] sm:$0x2]
        %v1738 = vld [vmem:[%s367 + $0x4] sm:$0x2]
        %v1739 = vld [vmem:[%s367 + $0x8] sm:$0x2]
        %v1740 = vld [vmem:[%s367 + $0xc] sm:$0x2]
        %v1741 = vunpack.c.l.bf16 %v1737
        %v1742 = vunpack.c.l.bf16 %v1738
        %v1743 = vunpack.c.l.bf16 %v1739
        %v1744 = vunpack.c.l.bf16 %v1740
        %v1749 = vrot.slane %v1742, 7
        %v1750 = vsel %vm468, %v1749, %v1741
        %v1751 = vrot.slane %v1743, 6
        %v1752 = vsel %vm527, %v1751, %v1750
        %v1753 = vrot.slane %v1744, 5
        %v1754 = vsel %vm607, %v1753, %v1752
        %1755 = vrot.lane.b32.xlu0 %v1754, 112
        %v1756 = vpop.permute.xlu0 %1755
        %vm1758 = vcmask 1047427
        %1759 = vst.msk [vmem:[#allocation2 + $0x4d] sm:$0x78] %vm1758, %v1756
        %1760 = vrot.lane.b32.xlu0 %v1754, 111
        %v1761 = vpop.permute.xlu0 %1760
        %1763 = vst.msk [vmem:[#allocation2 + $0x51] sm:$0x78] %vm1758, %v1761
        %1764 = vrot.lane.b32.xlu0 %v1754, 110
        %v1765 = vpop.permute.xlu0 %1764
        %1767 = vst.msk [vmem:[#allocation2 + $0x55] sm:$0x78] %vm1758, %v1765
        %1768 = vrot.lane.b32.xlu0 %v1754, 109
        %v1769 = vpop.permute.xlu0 %1768
        %1771 = vst.msk [vmem:[#allocation2 + $0x59] sm:$0x78] %vm1758, %v1769
        %1772 = vrot.lane.b32.xlu0 %v1754, 108
        %v1773 = vpop.permute.xlu0 %1772
        %1775 = vst.msk [vmem:[#allocation2 + $0x5d] sm:$0x78] %vm1758, %v1773
        %v1776 = vld [vmem:[%s2] sm:$0xf]
        %v1777 = vld [vmem:[%s2 + $0x4] sm:$0xf]
        %v1778 = vld [vmem:[#allocation2] sm:$0xff]
        %v1779 = vld [vmem:[#allocation2 + $0x8] sm:$0xff]
        %v1780 = vld [vmem:[#allocation2 + $0x10] sm:$0xff]
        %v1781 = vld [vmem:[#allocation2 + $0x18] sm:$0xff]
        %v1782 = vld [vmem:[#allocation2 + $0x20] sm:$0xff]
        %v1783 = vld [vmem:[#allocation2 + $0x28] sm:$0xff]
        %v1784 = vld [vmem:[#allocation2 + $0x30] sm:$0xff]
        %v1785 = vld [vmem:[#allocation2 + $0x38] sm:$0xff]
        %v1786 = vld [vmem:[#allocation2 + $0x40] sm:$0xff]
        %v1787 = vld [vmem:[#allocation2 + $0x48] sm:$0xff]
        %v1788 = vld [vmem:[#allocation2 + $0x50] sm:$0xff]
        %v1789 = vld [vmem:[#allocation2 + $0x58] sm:$0xff]
        %v1790 = vld [vmem:[#allocation2 + $0x60] sm:$0xf]
        %v1791 = vpack.c.bf16 %v1779, %v1778
        %v1792 = vpack.c.bf16 %v1781, %v1780
        %v1793 = vpack.c.bf16 %v1783, %v1782
        %v1794 = vpack.c.bf16 %v1785, %v1784
        %v1795 = vpack.c.bf16 %v1787, %v1786
        %v1796 = vpack.c.bf16 %v1789, %v1788
        %v1797 = vpack.c.bf16 %v1790, %v1790
        %v1800 = vunpack.c.l.b16 %v1776
        %v1801 = vunpack.c.l.b16 %v1777
        %v1802 = vpack.c.b16 %v1801, %v1800
        %vm1803 = vcmask 818176
        %v1805 = vsel %vm1803, %v1802, 0
        %vm1807 = vcmask 1041408
        %v1809 = vsel %vm1807, %v1797, 0
        %1811 = vmatprep.subr.bf16.mxu0 0
        %1812 = vmatpush1.bf16.msra.mxu0 %v1791
        %1813 = vmatprep.subr.bf16.mxu0 0
        %1814 = vmatpush1.bf16.msra.mxu0 %v1792
        %1815 = vmatprep.subr.bf16.mxu0 0
        %1816 = vmatpush1.bf16.msra.mxu0 %v1793
        %1817 = vmatprep.subr.bf16.mxu0 0
        %1818 = vmatpush1.bf16.msra.mxu0 %v1794
        %1819 = vmatprep.subr.bf16.mxu0 0
        %1820 = vmatpush1.bf16.msra.mxu0 %v1795
        %1821 = vmatprep.subr.bf16.mxu0 0
        %1822 = vmatpush1.bf16.msra.mxu0 %v1796
        %1823 = vmatprep.subr.bf16.mxu0 0
        %1824 = vmatpush1.bf16.msra.mxu0 %v1809
        %1825 = vmatprep.subr.bf16.mxu0 0
        %1826 = vmatpush1.bf16.msra.mxu0 0
        %1827 = vmatprep.subr.bf16.mxu0 0
        %1828 = vmatpush1.bf16.msra.mxu0 0
        %1829 = vmatprep.subr.bf16.mxu0 0
        %1830 = vmatpush1.bf16.msra.mxu0 0
        %1831 = vmatprep.subr.bf16.mxu0 0
        %1832 = vmatpush1.bf16.msra.mxu0 0
        %1833 = vmatprep.subr.bf16.mxu0 0
        %1834 = vmatpush1.bf16.msra.mxu0 0
        %1835 = vmatprep.subr.bf16.mxu0 0
        %1836 = vmatpush1.bf16.msra.mxu0 0
        %1837 = vmatprep.subr.bf16.mxu0 0
        %1838 = vmatpush1.bf16.msra.mxu0 0
        %1839 = vmatprep.subr.bf16.mxu0 0
        %1840 = vmatpush1.bf16.msra.mxu0 0
        %1841 = vmatprep.subr.bf16.mxu0 0
        %1842 = vmatpush1.bf16.msra.mxu0 0
        %1843 = vmatprep.mubr.bf16.mxu0 0
        %1844 = vmatmul.mubr.bf16.gmra.mrb[0].mxu0 %v1805
        %v1845 = vpop.f32.mrb[0].mxu0
        %v1846 = vadd.f32 0.0, %v1845
        %v1847 = vpop.f32.mrb[0].mxu0
        %v1848 = vpop.f32.mrb[0].mxu0
        %v1849 = vadd.f32 0.0, %v1848
        %v1850 = vpop.f32.mrb[0].mxu0
        %1851 = vdwg.mxu0
        %v1852 = vld [vmem:[%s4] sm:$0xff]
        %1854 = vset.pattern.permute.xlu0 0
        %1855 = vperm.xlu0 %1854, %v1852
        %v1856 = vpop.permute.xlu0 %1855
        %v1858 = vadd.f32 %v1846, %v1856
        %v1859 = vmax.f32 %v1858, 0.0
        %v1860 = vld [vmem:[%s3] sm:$0xff]
        %vm1861 = vcmask 64512
        %v1863 = vsel %vm1861, %v1860, 0
        %1865 = vmatprep.subr.mxu0 0.0
        %1866 = vmatpush1.msra.mxu0 %v1859
        %1867 = vmatprep.subr.mxu0 0.0
        %1868 = vmatpush1.msra.mxu0 0.0
        %1869 = vmatprep.subr.mxu0 0.0
        %1870 = vmatpush1.msra.mxu0 0.0
        %1871 = vmatprep.subr.mxu0 0.0
        %1872 = vmatpush1.msra.mxu0 0.0
        %1873 = vmatprep.subr.mxu0 0.0
        %1874 = vmatpush1.msra.mxu0 0.0
        %1875 = vmatprep.subr.mxu0 0.0
        %1876 = vmatpush1.msra.mxu0 0.0
        %1877 = vmatprep.subr.mxu0 0.0
        %1878 = vmatpush1.msra.mxu0 0.0
        %1879 = vmatprep.subr.mxu0 0.0
        %1880 = vmatpush1.msra.mxu0 0.0
        %1881 = vmatprep.subr.mxu0 0.0
        %1882 = vmatpush1.msra.mxu0 0.0
        %1883 = vmatprep.subr.mxu0 0.0
        %1884 = vmatpush1.msra.mxu0 0.0
        %1885 = vmatprep.subr.mxu0 0.0
        %1886 = vmatpush1.msra.mxu0 0.0
        %1887 = vmatprep.subr.mxu0 0.0
        %1888 = vmatpush1.msra.mxu0 0.0
        %1889 = vmatprep.subr.mxu0 0.0
        %1890 = vmatpush1.msra.mxu0 0.0
        %1891 = vmatprep.subr.mxu0 0.0
        %1892 = vmatpush1.msra.mxu0 0.0
        %1893 = vmatprep.subr.mxu0 0.0
        %1894 = vmatpush1.msra.mxu0 0.0
        %1895 = vmatprep.subr.mxu0 0.0
        %1896 = vmatpush1.msra.mxu0 0.0
        %1897 = vmatprep.subr.mxu0 0.0
        %1898 = vmatpush1.msra.mxu0 0.0
        %1899 = vmatprep.subr.mxu0 0.0
        %1900 = vmatpush1.msra.mxu0 0.0
        %1901 = vmatprep.subr.mxu0 0.0
        %1902 = vmatpush1.msra.mxu0 0.0
        %1903 = vmatprep.subr.mxu0 0.0
        %1904 = vmatpush1.msra.mxu0 0.0
        %1905 = vmatprep.subr.mxu0 0.0
        %1906 = vmatpush1.msra.mxu0 0.0
        %1907 = vmatprep.subr.mxu0 0.0
        %1908 = vmatpush1.msra.mxu0 0.0
        %1909 = vmatprep.subr.mxu0 0.0
        %1910 = vmatpush1.msra.mxu0 0.0
        %1911 = vmatprep.subr.mxu0 0.0
        %1912 = vmatpush1.msra.mxu0 0.0
        %1913 = vmatprep.subr.mxu0 0.0
        %1914 = vmatpush1.msra.mxu0 0.0
        %1915 = vmatprep.subr.mxu0 0.0
        %1916 = vmatpush1.msra.mxu0 0.0
        %1917 = vmatprep.subr.mxu0 0.0
        %1918 = vmatpush1.msra.mxu0 0.0
        %1919 = vmatprep.subr.mxu0 0.0
        %1920 = vmatpush1.msra.mxu0 0.0
        %1921 = vmatprep.subr.mxu0 0.0
        %1922 = vmatpush1.msra.mxu0 0.0
        %1923 = vmatprep.subr.mxu0 0.0
        %1924 = vmatpush1.msra.mxu0 0.0
        %1925 = vmatprep.subr.mxu0 0.0
        %1926 = vmatpush1.msra.mxu0 0.0
        %1927 = vmatprep.subr.mxu0 0.0
        %1928 = vmatpush1.msra.mxu0 0.0
        %1929 = vmatprep.mubr.f32.mxu0 0.0
        %1930 = vmatmul.mubr.f32.gmra.mrb[0].mxu0 %v1863
        %v1931 = vpop.f32.mrb[0].mxu0
        %v1932 = vadd.f32 %v1849, %v1931
        %v1933 = vpop.f32.mrb[0].mxu0
        %1934 = vdwg.mxu0
        %v1935 = vld [vmem:[%s5] sm:$0xff]
        %1937 = vset.pattern.permute.xlu0 0
        %1938 = vperm.xlu0 %1937, %v1935
        %v1939 = vpop.permute.xlu0 %1938
        %v1941 = vadd.f32 %v1932, %v1939
        %v1942 = vmax.f32 %v1941, 0.0
        %1943 = vst [vmem:[%s409] sm:$0xff] %v1942
        %p1944 = scmp.lt.s32.totalorder %s21, 1
        %s1945 = scalar_select %p1944, %s21, 1
        %p1946 = scmp.lt.s32.totalorder %s22, 1
        %s1947 = scalar_select %p1946, %s22, 1
        %s1948 = smul.addr %s1945, 2
        %s1949 = sadd.s32 %s1947, %s1948
        %s1950 = smul.addr %s1949, 8
        %s1951 = scalar_lea.vmem %s6, %s1950
        // Predicated region
        $region127: #{msrb_block.1} parent=117 // pred_check
          %p1952 = pneg %p191
        $region128: #{msrb_block.1} parent=117 // pred_check_branch
          %1954 = sbr.rel (%p1952) target = $region130
        $region129: #{msrb_block.1} parent=117 // pred_region
          _
        $region130: #{msrb_block.1} parent=117 // pred_fallthru
          _
      $region118: #{msrb_block.1} parent=5 // pred_fallthru
        _
      %p1955 = scmp.le.s32.totalorder 2, %s12
      // Predicated region
      $region131: #{msrb_block.1} parent=5 // pred_check
        %p1956 = pneg %p1955
      $region132: #{msrb_block.1} parent=5 // pred_check_branch
        %1958 = sbr.rel (%p1956) target = $region134
      $region133: #{msrb_block.1} parent=5 // pred_region
        %s1959 = ssub.s32 %s12, 2
        // Predicated region
        $region135: #{msrb_block.1} parent=133 // pred_check
          %p1960 = pneg %p197
        $region136: #{msrb_block.1} parent=133 // pred_check_branch
          %1962 = sbr.rel (%p1960) target = $region138
        $region137: #{msrb_block.1} parent=133 // pred_region
          %p1963 = scmp.lt.s32.totalorder %s23, 1
          %s1964 = scalar_select %p1963, %s23, 1
          %p1965 = scmp.lt.s32.totalorder %s24, 1
          %s1966 = scalar_select %p1965, %s24, 1
          %s1967 = smul.addr %s1964, 2
          %s1968 = sadd.s32 %s1966, %s1967
          %s1969 = smul.addr %s1968, 8
          %s1970 = scalar_lea.vmem %s6, %s1969
        $region138: #{msrb_block.1} parent=133 // pred_fallthru
          _
      $region134: #{msrb_block.1} parent=5 // pred_fallthru
        _
    $region6: #{msrb_block.1} parent=1 // loop_footer
      %s16 = sadd.s32 1, %s12
    $region7: #{msrb_block.1} parent=1 // loop_footer_branch
      %11 = sbr.rel target = $region3
    $region8: #{msrb_block.1} parent=1 // loop_exit
      _

</llo_original>
